<compile_context>
chip_gen: v7x
topology: tpu7x:2x2x1
jax: 0.10.0
libtpu: 0.0.40
codegen_flags: <defaults>
</compile_context>

<pallas_src>
import functools
import math

import jax
import jax.numpy as jnp
from jax.experimental import pallas as pl
from jax.experimental.pallas import tpu as pltpu

# ----------------------------- config ---------------------------------------
DIM = 32
N_HEADS = 4
N_KV_HEADS = 4              # dense SDPA path requires kv_heads == heads (n_rep == 1)
HEAD_DIM = DIM // N_HEADS
Y_DIM = 16
NUM_EXPERTS = 4
MULTIPLE_OF = 32
NORM_EPS = 1e-5
LN_EPS = 1e-5
B, S, SY = 2, 8, 4

# FeedForward hidden dim, exactly as in the torch module (ffn_dim_multiplier=None)
_hd = int(2 * (4 * DIM) / 3)
HIDDEN_DIM = MULTIPLE_OF * ((_hd + MULTIPLE_OF - 1) // MULTIPLE_OF)   # 96


# ----------------------------- in-kernel helpers -----------------------------
def _rms(v, w, eps):
    return v * jax.lax.rsqrt(jnp.mean(v * v, axis=-1, keepdims=True) + eps) * w


def _ln(v, w, b, eps):
    mu = jnp.mean(v, axis=-1, keepdims=True)
    vc = v - mu
    var = jnp.mean(vc * vc, axis=-1, keepdims=True)
    return vc * jax.lax.rsqrt(var + eps) * w + b


def _silu(v):
    return v * jax.nn.sigmoid(v)


def _softmax_rows(s):
    m = jnp.max(s, axis=-1, keepdims=True)
    p = jnp.exp(s - m)
    return p * pl.reciprocal(jnp.sum(p, axis=-1, keepdims=True), approx=True)


# ----------------------------- fused TransformerBlock kernel ----------------
def _fused_block_kernel(
    # scalar prefetch (consumed by the index_maps only)
    eid_ref,
    # per-batch activations
    x_ref, y_ref, bias_ref, ada_in_ref,
    # constants: rotary table, packed small-vector table, big weight matrices
    trig_ref, tab_ref, ada_w_ref, wqkv_ref, wkvy_ref, wo_ref,
    # MoE weights (time expert selected via index_map; freq experts block-diag)
    te_w13_ref, te_w2_ref, fe_w13_ref, fe_w2_ref,
    # output
    o_ref,
):
    del eid_ref
    S_ = x_ref.shape[1]
    D_ = x_ref.shape[2]
    Dy_ = y_ref.shape[2]
    H_ = N_HEADS
    Dh_ = D_ // H_
    HD_ = HIDDEN_DIM
    E_ = NUM_EXPERTS

    x = x_ref[0]                      # (S, D)
    y = y_ref[0]                      # (SY, Dy)
    bias = bias_ref[0]                # (1, S+SY) additive attention bias
    c = ada_in_ref[0]                 # (1, D)

    trig = trig_ref[...]              # (2S, D) : rows [0:S]=cos, [S:2S]=+-sin
    cos = trig[0:S_, :]
    rsin = trig[S_:2 * S_, :]

    tab = tab_ref[...]                # (16, 6D) packed small params
    ada_b = tab[0:1, :]
    attn_nw = tab[1:2, :D_]
    ffn_nw = tab[2:3, :D_]
    y_nw = tab[3:4, :Dy_]
    q_lnw, q_lnb = tab[4:5, :D_], tab[5:6, :D_]
    k_lnw, k_lnb = tab[6:7, :D_], tab[7:8, :D_]
    qp_lnw, qp_lnb = tab[8:9, :D_], tab[9:10, :D_]
    kp_lnw, kp_lnb = tab[10:11, :D_], tab[11:12, :D_]
    ky_lnw, ky_lnb = tab[12:13, :D_], tab[13:14, :D_]
    gt = tab[14:15, :H_]              # tanh(gate), (1, H)

    # ---- adaLN modulation: SiLU + Linear(D, 6D) + bias -----------------------
    mod = jnp.dot(_silu(c), ada_w_ref[...],
                  preferred_element_type=jnp.float32) + ada_b          # (1, 6D)
    shift_msa = mod[:, 0 * D_:1 * D_]
    scale_msa = mod[:, 1 * D_:2 * D_]
    gate_msa = mod[:, 2 * D_:3 * D_]
    shift_mlp = mod[:, 3 * D_:4 * D_]
    scale_mlp = mod[:, 4 * D_:5 * D_]
    gate_mlp = mod[:, 5 * D_:6 * D_]

    # ---- attention branch ----------------------------------------------------
    x_mod = _rms(x, attn_nw, NORM_EPS) * (1.0 + scale_msa) + shift_msa
    y_n = _rms(y, y_nw, NORM_EPS)

    # fused Q/K/V/Q-swapped/K-swapped projection: single (D, 5D) matmul.
    # The last two column blocks are wq@P / wk@P (P = rotary pair-swap), and
    # their LayerNorm params are permuted by P, so no in-kernel permutation.
    qkv = jnp.dot(x_mod, wqkv_ref[...], preferred_element_type=jnp.float32)   # (S, 5D)
    xq = _ln(qkv[:, 0 * D_:1 * D_], q_lnw, q_lnb, LN_EPS)
    xk = _ln(qkv[:, 1 * D_:2 * D_], k_lnw, k_lnb, LN_EPS)
    xv = qkv[:, 2 * D_:3 * D_]
    xq_sw = _ln(qkv[:, 3 * D_:4 * D_], qp_lnw, qp_lnb, LN_EPS)
    xk_sw = _ln(qkv[:, 4 * D_:5 * D_], kp_lnw, kp_lnb, LN_EPS)

    # rotary: pure VPU (cos / signed-sin tables already in flattened head layout)
    xq = xq * cos + xq_sw * rsin
    xk = xk * cos + xk_sw * rsin

    # cross-attention K/V from y (fused (Dy, 2D) matmul)
    kvy = jnp.dot(y_n, wkvy_ref[...], preferred_element_type=jnp.float32)     # (SY, 2D)
    yk = _ln(kvy[:, 0:D_], ky_lnw, ky_lnb, LN_EPS)
    yv = kvy[:, D_:2 * D_]

    xq = xq * (1.0 / math.sqrt(Dh_))          # fold softmax scale into q once
    keys = jnp.concatenate([xk, yk], axis=0)  # (S+SY, D) self+cross keys
    vals = jnp.concatenate([xv, yv], axis=0)  # (S+SY, D) self+cross values

    # merged self+cross attention: 2 MXU ops per head; tanh gate folded into P
    head_outs = []
    for h in range(H_):
        sl = slice(h * Dh_, (h + 1) * Dh_)
        s_all = jnp.dot(xq[:, sl], keys[:, sl].T,
                        preferred_element_type=jnp.float32) + bias            # (S, S+SY)
        p_self = _softmax_rows(s_all[:, :S_])
        p_y = _softmax_rows(s_all[:, S_:])
        pcat = jnp.concatenate([p_self, p_y * gt[:, h:h + 1]], axis=-1)
        head_outs.append(jnp.dot(pcat, vals[:, sl],
                                 preferred_element_type=jnp.float32))
    attn = jnp.concatenate(head_outs, axis=-1)                                # (S, D)
    attn = jnp.dot(attn, wo_ref[...], preferred_element_type=jnp.float32)

    hres = x + gate_msa * attn                                                # residual 1

    # ---- MoE branch ----------------------------------------------------------
    h_mod = _rms(hres, ffn_nw, NORM_EPS) * (1.0 + scale_mlp) + shift_mlp

    # time expert (selected via index_map): fused w1||w3 up-projection (padded
    # to 256 lanes so both halves stay lane-tile aligned), then down-projection.
    h13 = jnp.dot(h_mod, te_w13_ref[0], preferred_element_type=jnp.float32)   # (S, 256)
    h1 = h13[:, 0:HD_]
    h3 = h13[:, 128:128 + HD_]
    yt = jnp.dot(_silu(h1) * h3, te_w2_ref[0],
                 preferred_element_type=jnp.float32)                          # (S, D)

    # frequency experts: block-diagonal weights == reference channel masking,
    # all four experts in 2 matmuls.
    f13 = jnp.dot(yt, fe_w13_ref[...], preferred_element_type=jnp.float32)    # (S, 2*E*HD)
    f1 = f13[:, 0:E_ * HD_]
    f3 = f13[:, E_ * HD_:2 * E_ * HD_]
    ffn_out = jnp.dot(_silu(f1) * f3, fe_w2_ref[...],
                      preferred_element_type=jnp.float32)                     # (S, D)

    o_ref[0] = hres + gate_mlp * ffn_out                                      # residual 2


# ----------------------------- wrapper ---------------------------------------
def transformer_block(p, x, x_mask, y, y_mask, fcos, fsin, adaln_input, time):
    Bn, Sn, Dn = x.shape
    Sy = y.shape[1]
    Hh = N_HEADS
    E = NUM_EXPERTS
    R = Dn // E
    HD = HIDDEN_DIM

    # clamp expert id (the reference's jnp.take clips; the index_map must too)
    eid = jnp.clip((time // 250).astype(jnp.int32), 0, E - 1)

    # pair-swap permutation folded into the fused QKV weights
    perm = jnp.arange(Dn, dtype=jnp.int32) ^ 1
    wqkv = jnp.concatenate(
        [p["wq"], p["wk"], p["wv"], p["wq"][:, perm], p["wk"][:, perm]], axis=1)  # (D, 5D)
    wkvy = jnp.concatenate([p["wk_y"], p["wv_y"]], axis=1)                        # (Dy, 2D)

    # rotary tables in the flattened (S, D) head layout, stacked along sublanes
    cos_full = jnp.tile(jnp.repeat(fcos, 2, axis=-1), (1, Hh))                    # (S, D)
    sign = jnp.tile(jnp.array([-1.0, 1.0], jnp.float32), Dn // 2)
    rsin_full = jnp.tile(jnp.repeat(fsin, 2, axis=-1), (1, Hh)) * sign[None, :]
    trig = jnp.concatenate([cos_full, rsin_full], axis=0)                         # (2S, D)

    # all small per-channel params packed into ONE (16, 6D) table -> one DMA
    W6 = 6 * Dn

    def row(v):
        v = v.reshape(1, -1)
        return jnp.pad(v, ((0, 0), (0, W6 - v.shape[1])))

    tab = jnp.concatenate([
        row(p["ada_b"]), row(p["attn_norm_w"]), row(p["ffn_norm_w"]), row(p["y_norm_w"]),
        row(p["q_ln_w"]), row(p["q_ln_b"]), row(p["k_ln_w"]), row(p["k_ln_b"]),
        row(p["q_ln_w"][:, perm]), row(p["q_ln_b"][:, perm]),
        row(p["k_ln_w"][:, perm]), row(p["k_ln_b"][:, perm]),
        row(p["ky_ln_w"]), row(p["ky_ln_b"]),
        row(jnp.tanh(p["gate"])), row(jnp.zeros((1, 1), jnp.float32)),
    ], axis=0)                                                                     # (16, 6D)

    # time experts: w1 || w3 fused, padded to 256 lanes (tile-aligned halves)
    te_w13 = jnp.zeros((E, Dn, 256), jnp.float32)
    te_w13 = te_w13.at[:, :, 0:HD].set(p["te_w1"])
    te_w13 = te_w13.at[:, :, 128:128 + HD].set(p["te_w3"])

    # frequency experts: block-diagonal weights (exactly the channel-mask math)
    W1bd = jnp.zeros((Dn, E * HD), jnp.float32)
    W3bd = jnp.zeros((Dn, E * HD), jnp.float32)
    W2bd = jnp.zeros((E * HD, Dn), jnp.float32)
    for i in range(E):
        r0, r1 = i * R, (i + 1) * R
        c0, c1 = i * HD, (i + 1) * HD
        W1bd = W1bd.at[r0:r1, c0:c1].set(p["fe_w1"][i, r0:r1, :])
        W3bd = W3bd.at[r0:r1, c0:c1].set(p["fe_w3"][i, r0:r1, :])
        W2bd = W2bd.at[c0:c1, r0:r1].set(p["fe_w2"][i, :, r0:r1])
    fe_w13bd = jnp.concatenate([W1bd, W3bd], axis=1)                               # (D, 2*E*HD)

    # additive attention biases (self || cross), computed once in the wrapper
    neg = jnp.float32(-1e30)
    bias = jnp.concatenate(
        [jnp.where(x_mask > 0, 0.0, neg), jnp.where(y_mask > 0, 0.0, neg)],
        axis=-1).astype(jnp.float32).reshape(Bn, 1, Sn + Sy)

    adaln3 = adaln_input.reshape(Bn, 1, Dn)

    def batch_spec(a):
        nd = a.ndim
        return pl.BlockSpec((1,) + a.shape[1:], lambda b, e: (b,) + (0,) * (nd - 1))

    def full_spec(a):
        nd = a.ndim
        return pl.BlockSpec(a.shape, lambda b, e: (0,) * nd)

    def time_expert_spec(a):
        nd = a.ndim
        return pl.BlockSpec((1,) + a.shape[1:], lambda b, e: (e[b],) + (0,) * (nd - 1))

    operands = [
        (x, batch_spec), (y, batch_spec), (bias, batch_spec), (adaln3, batch_spec),
        (trig, full_spec), (tab, full_spec), (p["ada_w"], full_spec),
        (wqkv, full_spec), (wkvy, full_spec), (p["wo"], full_spec),
        (te_w13, time_expert_spec), (p["te_w2"], time_expert_spec),
        (fe_w13bd, full_spec), (W2bd, full_spec),
    ]
    args = [a for a, _ in operands]
    in_specs = [mk(a) for a, mk in operands]

    # grid=(B,): on v7x the "parallel" batch axis shards across the 2 TCs; on
    # single-TC chips the constant blocks are not re-fetched on the 2nd step.
    return pl.pallas_call(
        _fused_block_kernel,
        out_shape=jax.ShapeDtypeStruct((Bn, Sn, Dn), jnp.float32),
        grid_spec=pltpu.PrefetchScalarGridSpec(
            num_scalar_prefetch=1,
            grid=(Bn,),
            in_specs=in_specs,
            out_specs=pl.BlockSpec((1, Sn, Dn), lambda b, e: (b, 0, 0)),
        ),
        compiler_params=pltpu.CompilerParams(
            dimension_semantics=("parallel",)),
    )(eid, *args)


# ----------------------------- pure-JAX reference (validation) ---------------
def reference_forward(p, x, x_mask, y, y_mask, fcos, fsin, adaln_input, time):
    PREC = jax.lax.Precision.HIGHEST
    mm = functools.partial(jnp.matmul, precision=PREC)
    Bn, Sn, Dn = x.shape
    Hn, Dh = N_HEADS, HEAD_DIM
    Sy = y.shape[1]

    def rms(v, w):
        return v * jax.lax.rsqrt(jnp.mean(v * v, axis=-1, keepdims=True) + NORM_EPS) * w

    def ln(v, w, b):
        mu = jnp.mean(v, axis=-1, keepdims=True)
        var = jnp.mean((v - mu) ** 2, axis=-1, keepdims=True)
        return (v - mu) * jax.lax.rsqrt(var + LN_EPS) * w + b

    c = adaln_input
    mod = mm(c * jax.nn.sigmoid(c), p["ada_w"]) + p["ada_b"]
    sm, scm, gm, sp_, scp, gp = jnp.split(mod, 6, axis=-1)

    x_mod = rms(x, p["attn_norm_w"]) * (1 + scm[:, None, :]) + sm[:, None, :]
    y_n = rms(y, p["y_norm_w"])

    xq = ln(mm(x_mod, p["wq"]), p["q_ln_w"], p["q_ln_b"]).reshape(Bn, Sn, Hn, Dh)
    xk = ln(mm(x_mod, p["wk"]), p["k_ln_w"], p["k_ln_b"]).reshape(Bn, Sn, Hn, Dh)
    xv = mm(x_mod, p["wv"]).reshape(Bn, Sn, Hn, Dh)

    def rope(t):
        tr, ti = t[..., 0::2], t[..., 1::2]
        cc, ss = fcos[None, :, None, :], fsin[None, :, None, :]
        return jnp.stack([tr * cc - ti * ss, tr * ss + ti * cc], axis=-1).reshape(t.shape)

    xq, xk = rope(xq), rope(xk)
    scale = 1.0 / math.sqrt(Dh)

    def sdpa(q, k, v, mask):
        s = jnp.einsum("bhqd,bhkd->bhqk", q, k, precision=PREC) * scale
        s = jnp.where(mask > 0.5, s, -1e30)
        return jnp.einsum("bhqk,bhkd->bhqd", jax.nn.softmax(s, axis=-1), v, precision=PREC)

    q = xq.transpose(0, 2, 1, 3)
    out = sdpa(q, xk.transpose(0, 2, 1, 3), xv.transpose(0, 2, 1, 3),
               x_mask.astype(jnp.float32)[:, None, None, :])

    yk = ln(mm(y_n, p["wk_y"]), p["ky_ln_w"], p["ky_ln_b"]).reshape(Bn, Sy, Hn, Dh)
    yv = mm(y_n, p["wv_y"]).reshape(Bn, Sy, Hn, Dh)
    out_y = sdpa(q, yk.transpose(0, 2, 1, 3), yv.transpose(0, 2, 1, 3),
                 y_mask.astype(jnp.float32)[:, None, None, :])
    out_y = out_y * jnp.tanh(p["gate"]).reshape(1, Hn, 1, 1)
    att = mm((out + out_y).transpose(0, 2, 1, 3).reshape(Bn, Sn, Dn), p["wo"])

    h = x + gm[:, None, :] * att
    h_mod = rms(h, p["ffn_norm_w"]) * (1 + scp[:, None, :]) + sp_[:, None, :]

    eid = (time // 250).astype(jnp.int32)
    w1 = jnp.take(p["te_w1"], eid, axis=0)
    w3 = jnp.take(p["te_w3"], eid, axis=0)
    w2 = jnp.take(p["te_w2"], eid, axis=0)
    h1 = jnp.einsum("bsd,bdh->bsh", h_mod, w1, precision=PREC)
    h3 = jnp.einsum("bsd,bdh->bsh", h_mod, w3, precision=PREC)
    yt = jnp.einsum("bsh,bhd->bsd", h1 * jax.nn.sigmoid(h1) * h3, w2, precision=PREC)

    R = Dn // NUM_EXPERTS
    ch = jnp.arange(Dn)
    parts = []
    for i in range(NUM_EXPERTS):
        region = ((ch >= R * i) & (ch < R * (i + 1))).astype(jnp.float32)
        ym_ = yt * region[None, None, :]
        f1 = mm(ym_, p["fe_w1"][i])
        f3 = mm(ym_, p["fe_w3"][i])
        full = mm(f1 * jax.nn.sigmoid(f1) * f3, p["fe_w2"][i])
        parts.append(full[:, :, R * i:R * (i + 1)])
    ffn_out = jnp.concatenate(parts, axis=-1)
    return h + gp[:, None, :] * ffn_out


# ----------------------------- params / main --------------------------------
def init_params(key):
    def nrm(k, shape, s=0.05):
        return s * jax.random.normal(k, shape, dtype=jnp.float32)

    ks = jax.random.split(key, 24)
    D, Dy, Hd, E, H = DIM, Y_DIM, HIDDEN_DIM, NUM_EXPERTS, N_HEADS
    return {
        "wq": nrm(ks[0], (D, D)), "wk": nrm(ks[1], (D, D)),
        "wv": nrm(ks[2], (D, D)), "wo": nrm(ks[3], (D, D)),
        "q_ln_w": 1.0 + nrm(ks[4], (1, D)), "q_ln_b": nrm(ks[5], (1, D)),
        "k_ln_w": 1.0 + nrm(ks[6], (1, D)), "k_ln_b": nrm(ks[7], (1, D)),
        "wk_y": nrm(ks[8], (Dy, D)), "wv_y": nrm(ks[9], (Dy, D)),
        "ky_ln_w": 1.0 + nrm(ks[10], (1, D)), "ky_ln_b": nrm(ks[11], (1, D)),
        "gate": nrm(ks[12], (H,)),     # torch init is zeros; random to exercise path
        "ada_w": nrm(ks[13], (D, 6 * D)), "ada_b": nrm(ks[14], (1, 6 * D)),
        "attn_norm_w": 1.0 + nrm(ks[15], (1, D)),
        "ffn_norm_w": 1.0 + nrm(ks[16], (1, D)),
        "y_norm_w": 1.0 + nrm(ks[17], (1, Dy)),
        "te_w1": nrm(ks[18], (E, D, Hd)), "te_w3": nrm(ks[19], (E, D, Hd)),
        "te_w2": nrm(ks[20], (E, Hd, D)),
        "fe_w1": nrm(ks[21], (E, D, Hd)), "fe_w3": nrm(ks[22], (E, D, Hd)),
        "fe_w2": nrm(ks[23], (E, Hd, D)),
    }


if __name__ == "__main__":
    key = jax.random.PRNGKey(0)
    pkey, xkey, ykey, akey = jax.random.split(key, 4)
    params = init_params(pkey)

    x = jax.random.normal(xkey, (B, S, DIM), dtype=jnp.float32)
    y = jax.random.normal(ykey, (B, SY, Y_DIM), dtype=jnp.float32)
    adaln_input = jax.random.normal(akey, (B, DIM), dtype=jnp.float32)
    time = jnp.array([100, 600], dtype=jnp.int32)               # time experts 0 and 2

    x_mask = jnp.array([[1] * S, [1] * 6 + [0] * (S - 6)], dtype=jnp.int32)
    y_mask = jnp.array([[1] * SY, [1, 1, 1, 0]], dtype=jnp.int32)

    # rotary frequencies: (S, HEAD_DIM//2)
    theta = 10000.0
    freqs = 1.0 / (theta ** (jnp.arange(0, HEAD_DIM, 2, dtype=jnp.float32) / HEAD_DIM))
    ang = jnp.outer(jnp.arange(S, dtype=jnp.float32), freqs)
    fcos, fsin = jnp.cos(ang), jnp.sin(ang)

    # TODO(synk): the flash-attn varlen unpad path of the reference is replaced by its
    # dense masked SDPA branch (identical math for float32 inputs).
    fwd = jax.jit(transformer_block)
    out = jax.block_until_ready(
        fwd(params, x, x_mask, y, y_mask, fcos, fsin, adaln_input, time))

    ref = jax.block_until_ready(
        jax.jit(reference_forward)(params, x, x_mask, y, y_mask, fcos, fsin,
                                   adaln_input, time))

    assert out.shape == (B, S, DIM)
    assert bool(jnp.all(jnp.isfinite(out)))
    max_err = float(jnp.max(jnp.abs(out - ref)))
    assert max_err < 2e-2, f"kernel/reference mismatch: max abs err = {max_err}"
    print("KERNEL_OK")
</pallas_src>

<mosaic_0001>
module attributes {stable_mosaic.version = 11 : i64} {
  func.func @_fused_block_kernel(%arg0: i32, %arg1: memref<2xi32, #tpu.memory_space<smem>>, %arg2: memref<1x8x32xf32, #tpu.memory_space<vmem>>, %arg3: memref<1x4x16xf32, #tpu.memory_space<vmem>>, %arg4: memref<1x1x12xf32, #tpu.memory_space<vmem>>, %arg5: memref<1x1x32xf32, #tpu.memory_space<vmem>>, %arg6: memref<16x32xf32, #tpu.memory_space<vmem>>, %arg7: memref<16x192xf32, #tpu.memory_space<vmem>>, %arg8: memref<32x192xf32, #tpu.memory_space<vmem>>, %arg9: memref<32x160xf32, #tpu.memory_space<vmem>>, %arg10: memref<16x64xf32, #tpu.memory_space<vmem>>, %arg11: memref<32x32xf32, #tpu.memory_space<vmem>>, %arg12: memref<1x32x256xf32, #tpu.memory_space<vmem>>, %arg13: memref<1x96x32xf32, #tpu.memory_space<vmem>>, %arg14: memref<32x768xf32, #tpu.memory_space<vmem>>, %arg15: memref<384x32xf32, #tpu.memory_space<vmem>>, %arg16: memref<1x8x32xf32, #tpu.memory_space<vmem>>) attributes {dimension_semantics = [#tpu.dimension_semantics<parallel>], iteration_bounds = array<i64: 2>, scalar_prefetch = 1 : i64, scratch_operands = 0 : i64, tpu.core_type = #tpu.core_type<tc>, window_params = [{transform_indices = @transform_0, window_bounds = array<i64: 1, 8, 32>}, {transform_indices = @transform_1, window_bounds = array<i64: 1, 4, 16>}, {transform_indices = @transform_2, window_bounds = array<i64: 1, 1, 12>}, {transform_indices = @transform_3, window_bounds = array<i64: 1, 1, 32>}, {pipeline_mode = #tpu.pipeline_mode<synchronous>, transform_indices = @transform_4, window_bounds = array<i64: 16, 32>}, {pipeline_mode = #tpu.pipeline_mode<synchronous>, transform_indices = @transform_5, window_bounds = array<i64: 16, 192>}, {pipeline_mode = #tpu.pipeline_mode<synchronous>, transform_indices = @transform_6, window_bounds = array<i64: 32, 192>}, {pipeline_mode = #tpu.pipeline_mode<synchronous>, transform_indices = @transform_7, window_bounds = array<i64: 32, 160>}, {pipeline_mode = #tpu.pipeline_mode<synchronous>, transform_indices = @transform_8, window_bounds = array<i64: 16, 64>}, {pipeline_mode = #tpu.pipeline_mode<synchronous>, transform_indices = @transform_9, window_bounds = array<i64: 32, 32>}, {transform_indices = @transform_10, window_bounds = array<i64: 1, 32, 256>}, {transform_indices = @transform_11, window_bounds = array<i64: 1, 96, 32>}, {pipeline_mode = #tpu.pipeline_mode<synchronous>, transform_indices = @transform_12, window_bounds = array<i64: 32, 768>}, {pipeline_mode = #tpu.pipeline_mode<synchronous>, transform_indices = @transform_13, window_bounds = array<i64: 384, 32>}, {transform_indices = @transform_14, window_bounds = array<i64: 1, 8, 32>}]} {
    %c0 = arith.constant 0 : index
    %c0_0 = arith.constant 0 : index
    %c0_1 = arith.constant 0 : index
    %0 = vector.load %arg2[%c0, %c0_0, %c0_1] : memref<1x8x32xf32, #tpu.memory_space<vmem>>, vector<1x8x32xf32>
    %1 = vector.shape_cast %0 : vector<1x8x32xf32> to vector<8x32xf32>
    %c0_2 = arith.constant 0 : index
    %c0_3 = arith.constant 0 : index
    %c0_4 = arith.constant 0 : index
    %2 = vector.load %arg3[%c0_2, %c0_3, %c0_4] : memref<1x4x16xf32, #tpu.memory_space<vmem>>, vector<1x4x16xf32>
    %3 = vector.shape_cast %2 : vector<1x4x16xf32> to vector<4x16xf32>
    %c0_5 = arith.constant 0 : index
    %c0_6 = arith.constant 0 : index
    %c0_7 = arith.constant 0 : index
    %4 = vector.load %arg4[%c0_5, %c0_6, %c0_7] : memref<1x1x12xf32, #tpu.memory_space<vmem>>, vector<1x1x12xf32>
    %5 = vector.shape_cast %4 : vector<1x1x12xf32> to vector<1x12xf32>
    %c0_8 = arith.constant 0 : index
    %c0_9 = arith.constant 0 : index
    %c0_10 = arith.constant 0 : index
    %6 = vector.load %arg5[%c0_8, %c0_9, %c0_10] : memref<1x1x32xf32, #tpu.memory_space<vmem>>, vector<1x1x32xf32>
    %7 = vector.shape_cast %6 : vector<1x1x32xf32> to vector<1x32xf32>
    %c0_11 = arith.constant 0 : index
    %c0_12 = arith.constant 0 : index
    %8 = vector.load %arg6[%c0_11, %c0_12] : memref<16x32xf32, #tpu.memory_space<vmem>>, vector<16x32xf32>
    %9 = vector.extract_strided_slice %8 {offsets = [0, 0], sizes = [8, 32], strides = [1, 1]} : vector<16x32xf32> to vector<8x32xf32>
    %10 = vector.extract_strided_slice %8 {offsets = [8, 0], sizes = [8, 32], strides = [1, 1]} : vector<16x32xf32> to vector<8x32xf32>
    %c0_13 = arith.constant 0 : index
    %c0_14 = arith.constant 0 : index
    %11 = vector.load %arg7[%c0_13, %c0_14] : memref<16x192xf32, #tpu.memory_space<vmem>>, vector<16x192xf32>
    %12 = vector.extract_strided_slice %11 {offsets = [0, 0], sizes = [1, 192], strides = [1, 1]} : vector<16x192xf32> to vector<1x192xf32>
    %13 = vector.extract_strided_slice %11 {offsets = [1, 0], sizes = [1, 32], strides = [1, 1]} : vector<16x192xf32> to vector<1x32xf32>
    %14 = vector.extract_strided_slice %11 {offsets = [2, 0], sizes = [1, 32], strides = [1, 1]} : vector<16x192xf32> to vector<1x32xf32>
    %15 = vector.extract_strided_slice %11 {offsets = [3, 0], sizes = [1, 16], strides = [1, 1]} : vector<16x192xf32> to vector<1x16xf32>
    %16 = vector.extract_strided_slice %11 {offsets = [4, 0], sizes = [1, 32], strides = [1, 1]} : vector<16x192xf32> to vector<1x32xf32>
    %17 = vector.extract_strided_slice %11 {offsets = [5, 0], sizes = [1, 32], strides = [1, 1]} : vector<16x192xf32> to vector<1x32xf32>
    %18 = vector.extract_strided_slice %11 {offsets = [6, 0], sizes = [1, 32], strides = [1, 1]} : vector<16x192xf32> to vector<1x32xf32>
    %19 = vector.extract_strided_slice %11 {offsets = [7, 0], sizes = [1, 32], strides = [1, 1]} : vector<16x192xf32> to vector<1x32xf32>
    %20 = vector.extract_strided_slice %11 {offsets = [8, 0], sizes = [1, 32], strides = [1, 1]} : vector<16x192xf32> to vector<1x32xf32>
    %21 = vector.extract_strided_slice %11 {offsets = [9, 0], sizes = [1, 32], strides = [1, 1]} : vector<16x192xf32> to vector<1x32xf32>
    %22 = vector.extract_strided_slice %11 {offsets = [10, 0], sizes = [1, 32], strides = [1, 1]} : vector<16x192xf32> to vector<1x32xf32>
    %23 = vector.extract_strided_slice %11 {offsets = [11, 0], sizes = [1, 32], strides = [1, 1]} : vector<16x192xf32> to vector<1x32xf32>
    %24 = vector.extract_strided_slice %11 {offsets = [12, 0], sizes = [1, 32], strides = [1, 1]} : vector<16x192xf32> to vector<1x32xf32>
    %25 = vector.extract_strided_slice %11 {offsets = [13, 0], sizes = [1, 32], strides = [1, 1]} : vector<16x192xf32> to vector<1x32xf32>
    %26 = vector.extract_strided_slice %11 {offsets = [14, 0], sizes = [1, 4], strides = [1, 1]} : vector<16x192xf32> to vector<1x4xf32>
    %27 = arith.negf %7 : vector<1x32xf32>
    %28 = math.exp %27 : vector<1x32xf32>
    %cst = arith.constant 1.000000e+00 : f32
    %29 = vector.broadcast %cst : f32 to vector<1x32xf32>
    %30 = arith.addf %29, %28 : vector<1x32xf32>
    %31 = arith.divf %29, %30 : vector<1x32xf32>
    %32 = arith.mulf %7, %31 : vector<1x32xf32>
    %c0_15 = arith.constant 0 : index
    %c0_16 = arith.constant 0 : index
    %33 = vector.load %arg8[%c0_15, %c0_16] : memref<32x192xf32, #tpu.memory_space<vmem>>, vector<32x192xf32>
    %cst_17 = arith.constant dense<0.000000e+00> : vector<1x192xf32>
    %34 = tpu.matmul %32, %33, %cst_17 {dimension_numbers = #tpu.dot_dimension_numbers<[1], [0], [0], [1], [0, 0, 1, 1], [], []>} : vector<1x32xf32>, vector<32x192xf32>, vector<1x192xf32> -> vector<1x192xf32>
    %35 = arith.addf %34, %12 : vector<1x192xf32>
    %36 = vector.extract_strided_slice %35 {offsets = [0, 0], sizes = [1, 32], strides = [1, 1]} : vector<1x192xf32> to vector<1x32xf32>
    %37 = vector.extract_strided_slice %35 {offsets = [0, 32], sizes = [1, 32], strides = [1, 1]} : vector<1x192xf32> to vector<1x32xf32>
    %38 = vector.extract_strided_slice %35 {offsets = [0, 64], sizes = [1, 32], strides = [1, 1]} : vector<1x192xf32> to vector<1x32xf32>
    %39 = vector.extract_strided_slice %35 {offsets = [0, 96], sizes = [1, 32], strides = [1, 1]} : vector<1x192xf32> to vector<1x32xf32>
    %40 = vector.extract_strided_slice %35 {offsets = [0, 128], sizes = [1, 32], strides = [1, 1]} : vector<1x192xf32> to vector<1x32xf32>
    %41 = vector.extract_strided_slice %35 {offsets = [0, 160], sizes = [1, 32], strides = [1, 1]} : vector<1x192xf32> to vector<1x32xf32>
    %42 = arith.mulf %1, %1 : vector<8x32xf32>
    %cst_18 = arith.constant dense<0.000000e+00> : vector<8xf32>
    %43 = vector.multi_reduction <add>, %42, %cst_18 [1] : vector<8x32xf32> to vector<8xf32>
    %44 = vector.shape_cast %43 : vector<8xf32> to vector<8x1xf32>
    %cst_19 = arith.constant 3.200000e+01 : f32
    %45 = vector.broadcast %cst_19 : f32 to vector<8x1xf32>
    %46 = arith.divf %44, %45 : vector<8x1xf32>
    %cst_20 = arith.constant 9.99999974E-6 : f32
    %47 = vector.broadcast %cst_20 : f32 to vector<8x1xf32>
    %48 = arith.addf %46, %47 : vector<8x1xf32>
    %49 = math.rsqrt %48 : vector<8x1xf32>
    %50 = vector.broadcast %49 : vector<8x1xf32> to vector<8x32xf32>
    %51 = arith.mulf %1, %50 : vector<8x32xf32>
    %52 = vector.broadcast %13 : vector<1x32xf32> to vector<8x32xf32>
    %53 = arith.mulf %51, %52 : vector<8x32xf32>
    %cst_21 = arith.constant 1.000000e+00 : f32
    %54 = vector.broadcast %cst_21 : f32 to vector<1x32xf32>
    %55 = arith.addf %54, %37 : vector<1x32xf32>
    %56 = vector.broadcast %55 : vector<1x32xf32> to vector<8x32xf32>
    %57 = arith.mulf %53, %56 : vector<8x32xf32>
    %58 = vector.broadcast %36 : vector<1x32xf32> to vector<8x32xf32>
    %59 = arith.addf %57, %58 : vector<8x32xf32>
    %60 = arith.mulf %3, %3 : vector<4x16xf32>
    %cst_22 = arith.constant dense<0.000000e+00> : vector<4xf32>
    %61 = vector.multi_reduction <add>, %60, %cst_22 [1] : vector<4x16xf32> to vector<4xf32>
    %62 = vector.shape_cast %61 : vector<4xf32> to vector<4x1xf32>
    %cst_23 = arith.constant 1.600000e+01 : f32
    %63 = vector.broadcast %cst_23 : f32 to vector<4x1xf32>
    %64 = arith.divf %62, %63 : vector<4x1xf32>
    %cst_24 = arith.constant 9.99999974E-6 : f32
    %65 = vector.broadcast %cst_24 : f32 to vector<4x1xf32>
    %66 = arith.addf %64, %65 : vector<4x1xf32>
    %67 = math.rsqrt %66 : vector<4x1xf32>
    %68 = vector.broadcast %67 : vector<4x1xf32> to vector<4x16xf32>
    %69 = arith.mulf %3, %68 : vector<4x16xf32>
    %70 = vector.broadcast %15 : vector<1x16xf32> to vector<4x16xf32>
    %71 = arith.mulf %69, %70 : vector<4x16xf32>
    %c0_25 = arith.constant 0 : index
    %c0_26 = arith.constant 0 : index
    %72 = vector.load %arg9[%c0_25, %c0_26] : memref<32x160xf32, #tpu.memory_space<vmem>>, vector<32x160xf32>
    %cst_27 = arith.constant dense<0.000000e+00> : vector<8x160xf32>
    %73 = tpu.matmul %59, %72, %cst_27 {dimension_numbers = #tpu.dot_dimension_numbers<[1], [0], [0], [1], [0, 0, 1, 1], [], []>} : vector<8x32xf32>, vector<32x160xf32>, vector<8x160xf32> -> vector<8x160xf32>
    %74 = vector.extract_strided_slice %73 {offsets = [0, 0], sizes = [8, 32], strides = [1, 1]} : vector<8x160xf32> to vector<8x32xf32>
    %cst_28 = arith.constant dense<0.000000e+00> : vector<8xf32>
    %75 = vector.multi_reduction <add>, %74, %cst_28 [1] : vector<8x32xf32> to vector<8xf32>
    %76 = vector.shape_cast %75 : vector<8xf32> to vector<8x1xf32>
    %cst_29 = arith.constant 3.200000e+01 : f32
    %77 = vector.broadcast %cst_29 : f32 to vector<8x1xf32>
    %78 = arith.divf %76, %77 : vector<8x1xf32>
    %79 = vector.broadcast %78 : vector<8x1xf32> to vector<8x32xf32>
    %80 = arith.subf %74, %79 : vector<8x32xf32>
    %81 = arith.mulf %80, %80 : vector<8x32xf32>
    %cst_30 = arith.constant dense<0.000000e+00> : vector<8xf32>
    %82 = vector.multi_reduction <add>, %81, %cst_30 [1] : vector<8x32xf32> to vector<8xf32>
    %83 = vector.shape_cast %82 : vector<8xf32> to vector<8x1xf32>
    %cst_31 = arith.constant 3.200000e+01 : f32
    %84 = vector.broadcast %cst_31 : f32 to vector<8x1xf32>
    %85 = arith.divf %83, %84 : vector<8x1xf32>
    %cst_32 = arith.constant 9.99999974E-6 : f32
    %86 = vector.broadcast %cst_32 : f32 to vector<8x1xf32>
    %87 = arith.addf %85, %86 : vector<8x1xf32>
    %88 = math.rsqrt %87 : vector<8x1xf32>
    %89 = vector.broadcast %88 : vector<8x1xf32> to vector<8x32xf32>
    %90 = arith.mulf %80, %89 : vector<8x32xf32>
    %91 = vector.broadcast %16 : vector<1x32xf32> to vector<8x32xf32>
    %92 = arith.mulf %90, %91 : vector<8x32xf32>
    %93 = vector.broadcast %17 : vector<1x32xf32> to vector<8x32xf32>
    %94 = arith.addf %92, %93 : vector<8x32xf32>
    %95 = vector.extract_strided_slice %73 {offsets = [0, 32], sizes = [8, 32], strides = [1, 1]} : vector<8x160xf32> to vector<8x32xf32>
    %cst_33 = arith.constant dense<0.000000e+00> : vector<8xf32>
    %96 = vector.multi_reduction <add>, %95, %cst_33 [1] : vector<8x32xf32> to vector<8xf32>
    %97 = vector.shape_cast %96 : vector<8xf32> to vector<8x1xf32>
    %cst_34 = arith.constant 3.200000e+01 : f32
    %98 = vector.broadcast %cst_34 : f32 to vector<8x1xf32>
    %99 = arith.divf %97, %98 : vector<8x1xf32>
    %100 = vector.broadcast %99 : vector<8x1xf32> to vector<8x32xf32>
    %101 = arith.subf %95, %100 : vector<8x32xf32>
    %102 = arith.mulf %101, %101 : vector<8x32xf32>
    %cst_35 = arith.constant dense<0.000000e+00> : vector<8xf32>
    %103 = vector.multi_reduction <add>, %102, %cst_35 [1] : vector<8x32xf32> to vector<8xf32>
    %104 = vector.shape_cast %103 : vector<8xf32> to vector<8x1xf32>
    %cst_36 = arith.constant 3.200000e+01 : f32
    %105 = vector.broadcast %cst_36 : f32 to vector<8x1xf32>
    %106 = arith.divf %104, %105 : vector<8x1xf32>
    %cst_37 = arith.constant 9.99999974E-6 : f32
    %107 = vector.broadcast %cst_37 : f32 to vector<8x1xf32>
    %108 = arith.addf %106, %107 : vector<8x1xf32>
    %109 = math.rsqrt %108 : vector<8x1xf32>
    %110 = vector.broadcast %109 : vector<8x1xf32> to vector<8x32xf32>
    %111 = arith.mulf %101, %110 : vector<8x32xf32>
    %112 = vector.broadcast %18 : vector<1x32xf32> to vector<8x32xf32>
    %113 = arith.mulf %111, %112 : vector<8x32xf32>
    %114 = vector.broadcast %19 : vector<1x32xf32> to vector<8x32xf32>
    %115 = arith.addf %113, %114 : vector<8x32xf32>
    %116 = vector.extract_strided_slice %73 {offsets = [0, 64], sizes = [8, 32], strides = [1, 1]} : vector<8x160xf32> to vector<8x32xf32>
    %117 = vector.extract_strided_slice %73 {offsets = [0, 96], sizes = [8, 32], strides = [1, 1]} : vector<8x160xf32> to vector<8x32xf32>
    %cst_38 = arith.constant dense<0.000000e+00> : vector<8xf32>
    %118 = vector.multi_reduction <add>, %117, %cst_38 [1] : vector<8x32xf32> to vector<8xf32>
    %119 = vector.shape_cast %118 : vector<8xf32> to vector<8x1xf32>
    %cst_39 = arith.constant 3.200000e+01 : f32
    %120 = vector.broadcast %cst_39 : f32 to vector<8x1xf32>
    %121 = arith.divf %119, %120 : vector<8x1xf32>
    %122 = vector.broadcast %121 : vector<8x1xf32> to vector<8x32xf32>
    %123 = arith.subf %117, %122 : vector<8x32xf32>
    %124 = arith.mulf %123, %123 : vector<8x32xf32>
    %cst_40 = arith.constant dense<0.000000e+00> : vector<8xf32>
    %125 = vector.multi_reduction <add>, %124, %cst_40 [1] : vector<8x32xf32> to vector<8xf32>
    %126 = vector.shape_cast %125 : vector<8xf32> to vector<8x1xf32>
    %cst_41 = arith.constant 3.200000e+01 : f32
    %127 = vector.broadcast %cst_41 : f32 to vector<8x1xf32>
    %128 = arith.divf %126, %127 : vector<8x1xf32>
    %cst_42 = arith.constant 9.99999974E-6 : f32
    %129 = vector.broadcast %cst_42 : f32 to vector<8x1xf32>
    %130 = arith.addf %128, %129 : vector<8x1xf32>
    %131 = math.rsqrt %130 : vector<8x1xf32>
    %132 = vector.broadcast %131 : vector<8x1xf32> to vector<8x32xf32>
    %133 = arith.mulf %123, %132 : vector<8x32xf32>
    %134 = vector.broadcast %20 : vector<1x32xf32> to vector<8x32xf32>
    %135 = arith.mulf %133, %134 : vector<8x32xf32>
    %136 = vector.broadcast %21 : vector<1x32xf32> to vector<8x32xf32>
    %137 = arith.addf %135, %136 : vector<8x32xf32>
    %138 = vector.extract_strided_slice %73 {offsets = [0, 128], sizes = [8, 32], strides = [1, 1]} : vector<8x160xf32> to vector<8x32xf32>
    %cst_43 = arith.constant dense<0.000000e+00> : vector<8xf32>
    %139 = vector.multi_reduction <add>, %138, %cst_43 [1] : vector<8x32xf32> to vector<8xf32>
    %140 = vector.shape_cast %139 : vector<8xf32> to vector<8x1xf32>
    %cst_44 = arith.constant 3.200000e+01 : f32
    %141 = vector.broadcast %cst_44 : f32 to vector<8x1xf32>
    %142 = arith.divf %140, %141 : vector<8x1xf32>
    %143 = vector.broadcast %142 : vector<8x1xf32> to vector<8x32xf32>
    %144 = arith.subf %138, %143 : vector<8x32xf32>
    %145 = arith.mulf %144, %144 : vector<8x32xf32>
    %cst_45 = arith.constant dense<0.000000e+00> : vector<8xf32>
    %146 = vector.multi_reduction <add>, %145, %cst_45 [1] : vector<8x32xf32> to vector<8xf32>
    %147 = vector.shape_cast %146 : vector<8xf32> to vector<8x1xf32>
    %cst_46 = arith.constant 3.200000e+01 : f32
    %148 = vector.broadcast %cst_46 : f32 to vector<8x1xf32>
    %149 = arith.divf %147, %148 : vector<8x1xf32>
    %cst_47 = arith.constant 9.99999974E-6 : f32
    %150 = vector.broadcast %cst_47 : f32 to vector<8x1xf32>
    %151 = arith.addf %149, %150 : vector<8x1xf32>
    %152 = math.rsqrt %151 : vector<8x1xf32>
    %153 = vector.broadcast %152 : vector<8x1xf32> to vector<8x32xf32>
    %154 = arith.mulf %144, %153 : vector<8x32xf32>
    %155 = vector.broadcast %22 : vector<1x32xf32> to vector<8x32xf32>
    %156 = arith.mulf %154, %155 : vector<8x32xf32>
    %157 = vector.broadcast %23 : vector<1x32xf32> to vector<8x32xf32>
    %158 = arith.addf %156, %157 : vector<8x32xf32>
    %159 = arith.mulf %94, %9 : vector<8x32xf32>
    %160 = arith.mulf %137, %10 : vector<8x32xf32>
    %161 = arith.addf %159, %160 : vector<8x32xf32>
    %162 = arith.mulf %115, %9 : vector<8x32xf32>
    %163 = arith.mulf %158, %10 : vector<8x32xf32>
    %164 = arith.addf %162, %163 : vector<8x32xf32>
    %c0_48 = arith.constant 0 : index
    %c0_49 = arith.constant 0 : index
    %165 = vector.load %arg10[%c0_48, %c0_49] : memref<16x64xf32, #tpu.memory_space<vmem>>, vector<16x64xf32>
    %cst_50 = arith.constant dense<0.000000e+00> : vector<4x64xf32>
    %166 = tpu.matmul %71, %165, %cst_50 {dimension_numbers = #tpu.dot_dimension_numbers<[1], [0], [0], [1], [0, 0, 1, 1], [], []>} : vector<4x16xf32>, vector<16x64xf32>, vector<4x64xf32> -> vector<4x64xf32>
    %167 = vector.extract_strided_slice %166 {offsets = [0, 0], sizes = [4, 32], strides = [1, 1]} : vector<4x64xf32> to vector<4x32xf32>
    %cst_51 = arith.constant dense<0.000000e+00> : vector<4xf32>
    %168 = vector.multi_reduction <add>, %167, %cst_51 [1] : vector<4x32xf32> to vector<4xf32>
    %169 = vector.shape_cast %168 : vector<4xf32> to vector<4x1xf32>
    %cst_52 = arith.constant 3.200000e+01 : f32
    %170 = vector.broadcast %cst_52 : f32 to vector<4x1xf32>
    %171 = arith.divf %169, %170 : vector<4x1xf32>
    %172 = vector.broadcast %171 : vector<4x1xf32> to vector<4x32xf32>
    %173 = arith.subf %167, %172 : vector<4x32xf32>
    %174 = arith.mulf %173, %173 : vector<4x32xf32>
    %cst_53 = arith.constant dense<0.000000e+00> : vector<4xf32>
    %175 = vector.multi_reduction <add>, %174, %cst_53 [1] : vector<4x32xf32> to vector<4xf32>
    %176 = vector.shape_cast %175 : vector<4xf32> to vector<4x1xf32>
    %cst_54 = arith.constant 3.200000e+01 : f32
    %177 = vector.broadcast %cst_54 : f32 to vector<4x1xf32>
    %178 = arith.divf %176, %177 : vector<4x1xf32>
    %cst_55 = arith.constant 9.99999974E-6 : f32
    %179 = vector.broadcast %cst_55 : f32 to vector<4x1xf32>
    %180 = arith.addf %178, %179 : vector<4x1xf32>
    %181 = math.rsqrt %180 : vector<4x1xf32>
    %182 = vector.broadcast %181 : vector<4x1xf32> to vector<4x32xf32>
    %183 = arith.mulf %173, %182 : vector<4x32xf32>
    %184 = vector.broadcast %24 : vector<1x32xf32> to vector<4x32xf32>
    %185 = arith.mulf %183, %184 : vector<4x32xf32>
    %186 = vector.broadcast %25 : vector<1x32xf32> to vector<4x32xf32>
    %187 = arith.addf %185, %186 : vector<4x32xf32>
    %188 = vector.extract_strided_slice %166 {offsets = [0, 32], sizes = [4, 32], strides = [1, 1]} : vector<4x64xf32> to vector<4x32xf32>
    %cst_56 = arith.constant 0.353553385 : f32
    %189 = vector.broadcast %cst_56 : f32 to vector<8x32xf32>
    %190 = arith.mulf %161, %189 : vector<8x32xf32>
    %191 = tpu.concatenate %164, %187 in 0 : vector<8x32xf32>, vector<4x32xf32> -> vector<12x32xf32>
    %192 = tpu.concatenate %116, %188 in 0 : vector<8x32xf32>, vector<4x32xf32> -> vector<12x32xf32>
    %193 = vector.extract_strided_slice %190 {offsets = [0, 0], sizes = [8, 8], strides = [1, 1]} : vector<8x32xf32> to vector<8x8xf32>
    %194 = vector.extract_strided_slice %191 {offsets = [0, 0], sizes = [12, 8], strides = [1, 1]} : vector<12x32xf32> to vector<12x8xf32>
    %195 = tpu.transpose %194, [1, 0] : vector<12x8xf32> -> vector<8x12xf32>
    %cst_57 = arith.constant dense<0.000000e+00> : vector<8x12xf32>
    %196 = tpu.matmul %193, %195, %cst_57 {dimension_numbers = #tpu.dot_dimension_numbers<[1], [0], [0], [1], [0, 0, 1, 1], [], []>} : vector<8x8xf32>, vector<8x12xf32>, vector<8x12xf32> -> vector<8x12xf32>
    %197 = vector.broadcast %5 : vector<1x12xf32> to vector<8x12xf32>
    %198 = arith.addf %196, %197 : vector<8x12xf32>
    %199 = vector.extract_strided_slice %198 {offsets = [0, 0], sizes = [8, 8], strides = [1, 1]} : vector<8x12xf32> to vector<8x8xf32>
    %cst_58 = arith.constant dense<0xFF800000> : vector<8xf32>
    %200 = vector.multi_reduction <maximumf>, %199, %cst_58 [1] : vector<8x8xf32> to vector<8xf32>
    %201 = vector.shape_cast %200 : vector<8xf32> to vector<8x1xf32>
    %202 = vector.broadcast %201 : vector<8x1xf32> to vector<8x8xf32>
    %203 = arith.subf %199, %202 : vector<8x8xf32>
    %204 = math.exp %203 : vector<8x8xf32>
    %cst_59 = arith.constant dense<0.000000e+00> : vector<8xf32>
    %205 = vector.multi_reduction <add>, %204, %cst_59 [1] : vector<8x8xf32> to vector<8xf32>
    %206 = vector.shape_cast %205 : vector<8xf32> to vector<8x1xf32>
    %207 = tpu.reciprocal %206 {approx = true} : vector<8x1xf32> -> vector<8x1xf32>
    %208 = vector.broadcast %207 : vector<8x1xf32> to vector<8x8xf32>
    %209 = arith.mulf %204, %208 : vector<8x8xf32>
    %210 = vector.extract_strided_slice %198 {offsets = [0, 8], sizes = [8, 4], strides = [1, 1]} : vector<8x12xf32> to vector<8x4xf32>
    %cst_60 = arith.constant dense<0xFF800000> : vector<8xf32>
    %211 = vector.multi_reduction <maximumf>, %210, %cst_60 [1] : vector<8x4xf32> to vector<8xf32>
    %212 = vector.shape_cast %211 : vector<8xf32> to vector<8x1xf32>
    %213 = vector.broadcast %212 : vector<8x1xf32> to vector<8x4xf32>
    %214 = arith.subf %210, %213 : vector<8x4xf32>
    %215 = math.exp %214 : vector<8x4xf32>
    %cst_61 = arith.constant dense<0.000000e+00> : vector<8xf32>
    %216 = vector.multi_reduction <add>, %215, %cst_61 [1] : vector<8x4xf32> to vector<8xf32>
    %217 = vector.shape_cast %216 : vector<8xf32> to vector<8x1xf32>
    %218 = tpu.reciprocal %217 {approx = true} : vector<8x1xf32> -> vector<8x1xf32>
    %219 = vector.broadcast %218 : vector<8x1xf32> to vector<8x4xf32>
    %220 = arith.mulf %215, %219 : vector<8x4xf32>
    %221 = vector.extract_strided_slice %26 {offsets = [0, 0], sizes = [1, 1], strides = [1, 1]} : vector<1x4xf32> to vector<1x1xf32>
    %222 = vector.broadcast %221 : vector<1x1xf32> to vector<8x4xf32>
    %223 = arith.mulf %220, %222 : vector<8x4xf32>
    %224 = tpu.concatenate %209, %223 in 1 : vector<8x8xf32>, vector<8x4xf32> -> vector<8x12xf32>
    %225 = vector.extract_strided_slice %192 {offsets = [0, 0], sizes = [12, 8], strides = [1, 1]} : vector<12x32xf32> to vector<12x8xf32>
    %cst_62 = arith.constant dense<0.000000e+00> : vector<8x8xf32>
    %226 = tpu.matmul %224, %225, %cst_62 {dimension_numbers = #tpu.dot_dimension_numbers<[1], [0], [0], [1], [0, 0, 1, 1], [], []>} : vector<8x12xf32>, vector<12x8xf32>, vector<8x8xf32> -> vector<8x8xf32>
    %227 = vector.extract_strided_slice %190 {offsets = [0, 8], sizes = [8, 8], strides = [1, 1]} : vector<8x32xf32> to vector<8x8xf32>
    %228 = vector.extract_strided_slice %191 {offsets = [0, 8], sizes = [12, 8], strides = [1, 1]} : vector<12x32xf32> to vector<12x8xf32>
    %229 = tpu.transpose %228, [1, 0] : vector<12x8xf32> -> vector<8x12xf32>
    %cst_63 = arith.constant dense<0.000000e+00> : vector<8x12xf32>
    %230 = tpu.matmul %227, %229, %cst_63 {dimension_numbers = #tpu.dot_dimension_numbers<[1], [0], [0], [1], [0, 0, 1, 1], [], []>} : vector<8x8xf32>, vector<8x12xf32>, vector<8x12xf32> -> vector<8x12xf32>
    %231 = vector.broadcast %5 : vector<1x12xf32> to vector<8x12xf32>
    %232 = arith.addf %230, %231 : vector<8x12xf32>
    %233 = vector.extract_strided_slice %232 {offsets = [0, 0], sizes = [8, 8], strides = [1, 1]} : vector<8x12xf32> to vector<8x8xf32>
    %cst_64 = arith.constant dense<0xFF800000> : vector<8xf32>
    %234 = vector.multi_reduction <maximumf>, %233, %cst_64 [1] : vector<8x8xf32> to vector<8xf32>
    %235 = vector.shape_cast %234 : vector<8xf32> to vector<8x1xf32>
    %236 = vector.broadcast %235 : vector<8x1xf32> to vector<8x8xf32>
    %237 = arith.subf %233, %236 : vector<8x8xf32>
    %238 = math.exp %237 : vector<8x8xf32>
    %cst_65 = arith.constant dense<0.000000e+00> : vector<8xf32>
    %239 = vector.multi_reduction <add>, %238, %cst_65 [1] : vector<8x8xf32> to vector<8xf32>
    %240 = vector.shape_cast %239 : vector<8xf32> to vector<8x1xf32>
    %241 = tpu.reciprocal %240 {approx = true} : vector<8x1xf32> -> vector<8x1xf32>
    %242 = vector.broadcast %241 : vector<8x1xf32> to vector<8x8xf32>
    %243 = arith.mulf %238, %242 : vector<8x8xf32>
    %244 = vector.extract_strided_slice %232 {offsets = [0, 8], sizes = [8, 4], strides = [1, 1]} : vector<8x12xf32> to vector<8x4xf32>
    %cst_66 = arith.constant dense<0xFF800000> : vector<8xf32>
    %245 = vector.multi_reduction <maximumf>, %244, %cst_66 [1] : vector<8x4xf32> to vector<8xf32>
    %246 = vector.shape_cast %245 : vector<8xf32> to vector<8x1xf32>
    %247 = vector.broadcast %246 : vector<8x1xf32> to vector<8x4xf32>
    %248 = arith.subf %244, %247 : vector<8x4xf32>
    %249 = math.exp %248 : vector<8x4xf32>
    %cst_67 = arith.constant dense<0.000000e+00> : vector<8xf32>
    %250 = vector.multi_reduction <add>, %249, %cst_67 [1] : vector<8x4xf32> to vector<8xf32>
    %251 = vector.shape_cast %250 : vector<8xf32> to vector<8x1xf32>
    %252 = tpu.reciprocal %251 {approx = true} : vector<8x1xf32> -> vector<8x1xf32>
    %253 = vector.broadcast %252 : vector<8x1xf32> to vector<8x4xf32>
    %254 = arith.mulf %249, %253 : vector<8x4xf32>
    %255 = vector.extract_strided_slice %26 {offsets = [0, 1], sizes = [1, 1], strides = [1, 1]} : vector<1x4xf32> to vector<1x1xf32>
    %256 = vector.broadcast %255 : vector<1x1xf32> to vector<8x4xf32>
    %257 = arith.mulf %254, %256 : vector<8x4xf32>
    %258 = tpu.concatenate %243, %257 in 1 : vector<8x8xf32>, vector<8x4xf32> -> vector<8x12xf32>
    %259 = vector.extract_strided_slice %192 {offsets = [0, 8], sizes = [12, 8], strides = [1, 1]} : vector<12x32xf32> to vector<12x8xf32>
    %cst_68 = arith.constant dense<0.000000e+00> : vector<8x8xf32>
    %260 = tpu.matmul %258, %259, %cst_68 {dimension_numbers = #tpu.dot_dimension_numbers<[1], [0], [0], [1], [0, 0, 1, 1], [], []>} : vector<8x12xf32>, vector<12x8xf32>, vector<8x8xf32> -> vector<8x8xf32>
    %261 = vector.extract_strided_slice %190 {offsets = [0, 16], sizes = [8, 8], strides = [1, 1]} : vector<8x32xf32> to vector<8x8xf32>
    %262 = vector.extract_strided_slice %191 {offsets = [0, 16], sizes = [12, 8], strides = [1, 1]} : vector<12x32xf32> to vector<12x8xf32>
    %263 = tpu.transpose %262, [1, 0] : vector<12x8xf32> -> vector<8x12xf32>
    %cst_69 = arith.constant dense<0.000000e+00> : vector<8x12xf32>
    %264 = tpu.matmul %261, %263, %cst_69 {dimension_numbers = #tpu.dot_dimension_numbers<[1], [0], [0], [1], [0, 0, 1, 1], [], []>} : vector<8x8xf32>, vector<8x12xf32>, vector<8x12xf32> -> vector<8x12xf32>
    %265 = vector.broadcast %5 : vector<1x12xf32> to vector<8x12xf32>
    %266 = arith.addf %264, %265 : vector<8x12xf32>
    %267 = vector.extract_strided_slice %266 {offsets = [0, 0], sizes = [8, 8], strides = [1, 1]} : vector<8x12xf32> to vector<8x8xf32>
    %cst_70 = arith.constant dense<0xFF800000> : vector<8xf32>
    %268 = vector.multi_reduction <maximumf>, %267, %cst_70 [1] : vector<8x8xf32> to vector<8xf32>
    %269 = vector.shape_cast %268 : vector<8xf32> to vector<8x1xf32>
    %270 = vector.broadcast %269 : vector<8x1xf32> to vector<8x8xf32>
    %271 = arith.subf %267, %270 : vector<8x8xf32>
    %272 = math.exp %271 : vector<8x8xf32>
    %cst_71 = arith.constant dense<0.000000e+00> : vector<8xf32>
    %273 = vector.multi_reduction <add>, %272, %cst_71 [1] : vector<8x8xf32> to vector<8xf32>
    %274 = vector.shape_cast %273 : vector<8xf32> to vector<8x1xf32>
    %275 = tpu.reciprocal %274 {approx = true} : vector<8x1xf32> -> vector<8x1xf32>
    %276 = vector.broadcast %275 : vector<8x1xf32> to vector<8x8xf32>
    %277 = arith.mulf %272, %276 : vector<8x8xf32>
    %278 = vector.extract_strided_slice %266 {offsets = [0, 8], sizes = [8, 4], strides = [1, 1]} : vector<8x12xf32> to vector<8x4xf32>
    %cst_72 = arith.constant dense<0xFF800000> : vector<8xf32>
    %279 = vector.multi_reduction <maximumf>, %278, %cst_72 [1] : vector<8x4xf32> to vector<8xf32>
    %280 = vector.shape_cast %279 : vector<8xf32> to vector<8x1xf32>
    %281 = vector.broadcast %280 : vector<8x1xf32> to vector<8x4xf32>
    %282 = arith.subf %278, %281 : vector<8x4xf32>
    %283 = math.exp %282 : vector<8x4xf32>
    %cst_73 = arith.constant dense<0.000000e+00> : vector<8xf32>
    %284 = vector.multi_reduction <add>, %283, %cst_73 [1] : vector<8x4xf32> to vector<8xf32>
    %285 = vector.shape_cast %284 : vector<8xf32> to vector<8x1xf32>
    %286 = tpu.reciprocal %285 {approx = true} : vector<8x1xf32> -> vector<8x1xf32>
    %287 = vector.broadcast %286 : vector<8x1xf32> to vector<8x4xf32>
    %288 = arith.mulf %283, %287 : vector<8x4xf32>
    %289 = vector.extract_strided_slice %26 {offsets = [0, 2], sizes = [1, 1], strides = [1, 1]} : vector<1x4xf32> to vector<1x1xf32>
    %290 = vector.broadcast %289 : vector<1x1xf32> to vector<8x4xf32>
    %291 = arith.mulf %288, %290 : vector<8x4xf32>
    %292 = tpu.concatenate %277, %291 in 1 : vector<8x8xf32>, vector<8x4xf32> -> vector<8x12xf32>
    %293 = vector.extract_strided_slice %192 {offsets = [0, 16], sizes = [12, 8], strides = [1, 1]} : vector<12x32xf32> to vector<12x8xf32>
    %cst_74 = arith.constant dense<0.000000e+00> : vector<8x8xf32>
    %294 = tpu.matmul %292, %293, %cst_74 {dimension_numbers = #tpu.dot_dimension_numbers<[1], [0], [0], [1], [0, 0, 1, 1], [], []>} : vector<8x12xf32>, vector<12x8xf32>, vector<8x8xf32> -> vector<8x8xf32>
    %295 = vector.extract_strided_slice %190 {offsets = [0, 24], sizes = [8, 8], strides = [1, 1]} : vector<8x32xf32> to vector<8x8xf32>
    %296 = vector.extract_strided_slice %191 {offsets = [0, 24], sizes = [12, 8], strides = [1, 1]} : vector<12x32xf32> to vector<12x8xf32>
    %297 = tpu.transpose %296, [1, 0] : vector<12x8xf32> -> vector<8x12xf32>
    %cst_75 = arith.constant dense<0.000000e+00> : vector<8x12xf32>
    %298 = tpu.matmul %295, %297, %cst_75 {dimension_numbers = #tpu.dot_dimension_numbers<[1], [0], [0], [1], [0, 0, 1, 1], [], []>} : vector<8x8xf32>, vector<8x12xf32>, vector<8x12xf32> -> vector<8x12xf32>
    %299 = vector.broadcast %5 : vector<1x12xf32> to vector<8x12xf32>
    %300 = arith.addf %298, %299 : vector<8x12xf32>
    %301 = vector.extract_strided_slice %300 {offsets = [0, 0], sizes = [8, 8], strides = [1, 1]} : vector<8x12xf32> to vector<8x8xf32>
    %cst_76 = arith.constant dense<0xFF800000> : vector<8xf32>
    %302 = vector.multi_reduction <maximumf>, %301, %cst_76 [1] : vector<8x8xf32> to vector<8xf32>
    %303 = vector.shape_cast %302 : vector<8xf32> to vector<8x1xf32>
    %304 = vector.broadcast %303 : vector<8x1xf32> to vector<8x8xf32>
    %305 = arith.subf %301, %304 : vector<8x8xf32>
    %306 = math.exp %305 : vector<8x8xf32>
    %cst_77 = arith.constant dense<0.000000e+00> : vector<8xf32>
    %307 = vector.multi_reduction <add>, %306, %cst_77 [1] : vector<8x8xf32> to vector<8xf32>
    %308 = vector.shape_cast %307 : vector<8xf32> to vector<8x1xf32>
    %309 = tpu.reciprocal %308 {approx = true} : vector<8x1xf32> -> vector<8x1xf32>
    %310 = vector.broadcast %309 : vector<8x1xf32> to vector<8x8xf32>
    %311 = arith.mulf %306, %310 : vector<8x8xf32>
    %312 = vector.extract_strided_slice %300 {offsets = [0, 8], sizes = [8, 4], strides = [1, 1]} : vector<8x12xf32> to vector<8x4xf32>
    %cst_78 = arith.constant dense<0xFF800000> : vector<8xf32>
    %313 = vector.multi_reduction <maximumf>, %312, %cst_78 [1] : vector<8x4xf32> to vector<8xf32>
    %314 = vector.shape_cast %313 : vector<8xf32> to vector<8x1xf32>
    %315 = vector.broadcast %314 : vector<8x1xf32> to vector<8x4xf32>
    %316 = arith.subf %312, %315 : vector<8x4xf32>
    %317 = math.exp %316 : vector<8x4xf32>
    %cst_79 = arith.constant dense<0.000000e+00> : vector<8xf32>
    %318 = vector.multi_reduction <add>, %317, %cst_79 [1] : vector<8x4xf32> to vector<8xf32>
    %319 = vector.shape_cast %318 : vector<8xf32> to vector<8x1xf32>
    %320 = tpu.reciprocal %319 {approx = true} : vector<8x1xf32> -> vector<8x1xf32>
    %321 = vector.broadcast %320 : vector<8x1xf32> to vector<8x4xf32>
    %322 = arith.mulf %317, %321 : vector<8x4xf32>
    %323 = vector.extract_strided_slice %26 {offsets = [0, 3], sizes = [1, 1], strides = [1, 1]} : vector<1x4xf32> to vector<1x1xf32>
    %324 = vector.broadcast %323 : vector<1x1xf32> to vector<8x4xf32>
    %325 = arith.mulf %322, %324 : vector<8x4xf32>
    %326 = tpu.concatenate %311, %325 in 1 : vector<8x8xf32>, vector<8x4xf32> -> vector<8x12xf32>
    %327 = vector.extract_strided_slice %192 {offsets = [0, 24], sizes = [12, 8], strides = [1, 1]} : vector<12x32xf32> to vector<12x8xf32>
    %cst_80 = arith.constant dense<0.000000e+00> : vector<8x8xf32>
    %328 = tpu.matmul %326, %327, %cst_80 {dimension_numbers = #tpu.dot_dimension_numbers<[1], [0], [0], [1], [0, 0, 1, 1], [], []>} : vector<8x12xf32>, vector<12x8xf32>, vector<8x8xf32> -> vector<8x8xf32>
    %329 = tpu.concatenate %226, %260, %294, %328 in 1 : vector<8x8xf32>, vector<8x8xf32>, vector<8x8xf32>, vector<8x8xf32> -> vector<8x32xf32>
    %c0_81 = arith.constant 0 : index
    %c0_82 = arith.constant 0 : index
    %330 = vector.load %arg11[%c0_81, %c0_82] : memref<32x32xf32, #tpu.memory_space<vmem>>, vector<32x32xf32>
    %cst_83 = arith.constant dense<0.000000e+00> : vector<8x32xf32>
    %331 = tpu.matmul %329, %330, %cst_83 {dimension_numbers = #tpu.dot_dimension_numbers<[1], [0], [0], [1], [0, 0, 1, 1], [], []>} : vector<8x32xf32>, vector<32x32xf32>, vector<8x32xf32> -> vector<8x32xf32>
    %332 = vector.broadcast %38 : vector<1x32xf32> to vector<8x32xf32>
    %333 = arith.mulf %332, %331 : vector<8x32xf32>
    %334 = arith.addf %1, %333 : vector<8x32xf32>
    %335 = arith.mulf %334, %334 : vector<8x32xf32>
    %cst_84 = arith.constant dense<0.000000e+00> : vector<8xf32>
    %336 = vector.multi_reduction <add>, %335, %cst_84 [1] : vector<8x32xf32> to vector<8xf32>
    %337 = vector.shape_cast %336 : vector<8xf32> to vector<8x1xf32>
    %cst_85 = arith.constant 3.200000e+01 : f32
    %338 = vector.broadcast %cst_85 : f32 to vector<8x1xf32>
    %339 = arith.divf %337, %338 : vector<8x1xf32>
    %cst_86 = arith.constant 9.99999974E-6 : f32
    %340 = vector.broadcast %cst_86 : f32 to vector<8x1xf32>
    %341 = arith.addf %339, %340 : vector<8x1xf32>
    %342 = math.rsqrt %341 : vector<8x1xf32>
    %343 = vector.broadcast %342 : vector<8x1xf32> to vector<8x32xf32>
    %344 = arith.mulf %334, %343 : vector<8x32xf32>
    %345 = vector.broadcast %14 : vector<1x32xf32> to vector<8x32xf32>
    %346 = arith.mulf %344, %345 : vector<8x32xf32>
    %cst_87 = arith.constant 1.000000e+00 : f32
    %347 = vector.broadcast %cst_87 : f32 to vector<1x32xf32>
    %348 = arith.addf %347, %40 : vector<1x32xf32>
    %349 = vector.broadcast %348 : vector<1x32xf32> to vector<8x32xf32>
    %350 = arith.mulf %346, %349 : vector<8x32xf32>
    %351 = vector.broadcast %39 : vector<1x32xf32> to vector<8x32xf32>
    %352 = arith.addf %350, %351 : vector<8x32xf32>
    %c0_88 = arith.constant 0 : index
    %c0_89 = arith.constant 0 : index
    %c0_90 = arith.constant 0 : index
    %353 = vector.load %arg12[%c0_88, %c0_89, %c0_90] : memref<1x32x256xf32, #tpu.memory_space<vmem>>, vector<1x32x256xf32>
    %354 = vector.shape_cast %353 : vector<1x32x256xf32> to vector<32x256xf32>
    %cst_91 = arith.constant dense<0.000000e+00> : vector<8x256xf32>
    %355 = tpu.matmul %352, %354, %cst_91 {dimension_numbers = #tpu.dot_dimension_numbers<[1], [0], [0], [1], [0, 0, 1, 1], [], []>} : vector<8x32xf32>, vector<32x256xf32>, vector<8x256xf32> -> vector<8x256xf32>
    %356 = vector.extract_strided_slice %355 {offsets = [0, 0], sizes = [8, 96], strides = [1, 1]} : vector<8x256xf32> to vector<8x96xf32>
    %357 = vector.extract_strided_slice %355 {offsets = [0, 128], sizes = [8, 96], strides = [1, 1]} : vector<8x256xf32> to vector<8x96xf32>
    %358 = arith.negf %356 : vector<8x96xf32>
    %359 = math.exp %358 : vector<8x96xf32>
    %cst_92 = arith.constant 1.000000e+00 : f32
    %360 = vector.broadcast %cst_92 : f32 to vector<8x96xf32>
    %361 = arith.addf %360, %359 : vector<8x96xf32>
    %362 = arith.divf %360, %361 : vector<8x96xf32>
    %363 = arith.mulf %356, %362 : vector<8x96xf32>
    %364 = arith.mulf %363, %357 : vector<8x96xf32>
    %c0_93 = arith.constant 0 : index
    %c0_94 = arith.constant 0 : index
    %c0_95 = arith.constant 0 : index
    %365 = vector.load %arg13[%c0_93, %c0_94, %c0_95] : memref<1x96x32xf32, #tpu.memory_space<vmem>>, vector<1x96x32xf32>
    %366 = vector.shape_cast %365 : vector<1x96x32xf32> to vector<96x32xf32>
    %cst_96 = arith.constant dense<0.000000e+00> : vector<8x32xf32>
    %367 = tpu.matmul %364, %366, %cst_96 {dimension_numbers = #tpu.dot_dimension_numbers<[1], [0], [0], [1], [0, 0, 1, 1], [], []>} : vector<8x96xf32>, vector<96x32xf32>, vector<8x32xf32> -> vector<8x32xf32>
    %c0_97 = arith.constant 0 : index
    %c0_98 = arith.constant 0 : index
    %368 = vector.load %arg14[%c0_97, %c0_98] : memref<32x768xf32, #tpu.memory_space<vmem>>, vector<32x768xf32>
    %cst_99 = arith.constant dense<0.000000e+00> : vector<8x768xf32>
    %369 = tpu.matmul %367, %368, %cst_99 {dimension_numbers = #tpu.dot_dimension_numbers<[1], [0], [0], [1], [0, 0, 1, 1], [], []>} : vector<8x32xf32>, vector<32x768xf32>, vector<8x768xf32> -> vector<8x768xf32>
    %370 = vector.extract_strided_slice %369 {offsets = [0, 0], sizes = [8, 384], strides = [1, 1]} : vector<8x768xf32> to vector<8x384xf32>
    %371 = vector.extract_strided_slice %369 {offsets = [0, 384], sizes = [8, 384], strides = [1, 1]} : vector<8x768xf32> to vector<8x384xf32>
    %372 = arith.negf %370 : vector<8x384xf32>
    %373 = math.exp %372 : vector<8x384xf32>
    %cst_100 = arith.constant 1.000000e+00 : f32
    %374 = vector.broadcast %cst_100 : f32 to vector<8x384xf32>
    %375 = arith.addf %374, %373 : vector<8x384xf32>
    %376 = arith.divf %374, %375 : vector<8x384xf32>
    %377 = arith.mulf %370, %376 : vector<8x384xf32>
    %378 = arith.mulf %377, %371 : vector<8x384xf32>
    %c0_101 = arith.constant 0 : index
    %c0_102 = arith.constant 0 : index
    %379 = vector.load %arg15[%c0_101, %c0_102] : memref<384x32xf32, #tpu.memory_space<vmem>>, vector<384x32xf32>
    %cst_103 = arith.constant dense<0.000000e+00> : vector<8x32xf32>
    %380 = tpu.matmul %378, %379, %cst_103 {dimension_numbers = #tpu.dot_dimension_numbers<[1], [0], [0], [1], [0, 0, 1, 1], [], []>} : vector<8x384xf32>, vector<384x32xf32>, vector<8x32xf32> -> vector<8x32xf32>
    %381 = vector.broadcast %41 : vector<1x32xf32> to vector<8x32xf32>
    %382 = arith.mulf %381, %380 : vector<8x32xf32>
    %383 = arith.addf %334, %382 : vector<8x32xf32>
    %c0_104 = arith.constant 0 : index
    %c0_105 = arith.constant 0 : index
    %c0_106 = arith.constant 0 : index
    %384 = vector.load %arg16[%c0_104, %c0_105, %c0_106] : memref<1x8x32xf32, #tpu.memory_space<vmem>>, vector<1x8x32xf32>
    %385 = vector.shape_cast %384 : vector<1x8x32xf32> to vector<8x32xf32>
    %386 = vector.shape_cast %383 : vector<8x32xf32> to vector<1x8x32xf32>
    tpu.vector_store %arg16[%c0_104, %c0_105, %c0_106], %386 {strides = array<i32>} : memref<1x8x32xf32, #tpu.memory_space<vmem>>, vector<1x8x32xf32>,
    return
  }
  func.func @transform_0(%arg0: i32, %arg1: memref<2xi32, #tpu.memory_space<smem>>) -> (i32, i32, i32) {
    %c0_i32 = arith.constant 0 : i32
    %c0_i32_0 = arith.constant 0 : i32
    %c0_i32_1 = arith.constant 0 : i32
    return %arg0, %c0_i32, %c0_i32_0 : i32, i32, i32
  }
  func.func @transform_1(%arg0: i32, %arg1: memref<2xi32, #tpu.memory_space<smem>>) -> (i32, i32, i32) {
    %c0_i32 = arith.constant 0 : i32
    %c0_i32_0 = arith.constant 0 : i32
    %c0_i32_1 = arith.constant 0 : i32
    return %arg0, %c0_i32, %c0_i32_0 : i32, i32, i32
  }
  func.func @transform_2(%arg0: i32, %arg1: memref<2xi32, #tpu.memory_space<smem>>) -> (i32, i32, i32) {
    %c0_i32 = arith.constant 0 : i32
    %c0_i32_0 = arith.constant 0 : i32
    %c0_i32_1 = arith.constant 0 : i32
    return %arg0, %c0_i32, %c0_i32_0 : i32, i32, i32
  }
  func.func @transform_3(%arg0: i32, %arg1: memref<2xi32, #tpu.memory_space<smem>>) -> (i32, i32, i32) {
    %c0_i32 = arith.constant 0 : i32
    %c0_i32_0 = arith.constant 0 : i32
    %c0_i32_1 = arith.constant 0 : i32
    return %arg0, %c0_i32, %c0_i32_0 : i32, i32, i32
  }
  func.func @transform_4(%arg0: i32, %arg1: memref<2xi32, #tpu.memory_space<smem>>) -> (i32, i32) {
    %c0_i32 = arith.constant 0 : i32
    %c0_i32_0 = arith.constant 0 : i32
    %c0_i32_1 = arith.constant 0 : i32
    return %c0_i32, %c0_i32_0 : i32, i32
  }
  func.func @transform_5(%arg0: i32, %arg1: memref<2xi32, #tpu.memory_space<smem>>) -> (i32, i32) {
    %c0_i32 = arith.constant 0 : i32
    %c0_i32_0 = arith.constant 0 : i32
    %c0_i32_1 = arith.constant 0 : i32
    return %c0_i32, %c0_i32_0 : i32, i32
  }
  func.func @transform_6(%arg0: i32, %arg1: memref<2xi32, #tpu.memory_space<smem>>) -> (i32, i32) {
    %c0_i32 = arith.constant 0 : i32
    %c0_i32_0 = arith.constant 0 : i32
    %c0_i32_1 = arith.constant 0 : i32
    return %c0_i32, %c0_i32_0 : i32, i32
  }
  func.func @transform_7(%arg0: i32, %arg1: memref<2xi32, #tpu.memory_space<smem>>) -> (i32, i32) {
    %c0_i32 = arith.constant 0 : i32
    %c0_i32_0 = arith.constant 0 : i32
    %c0_i32_1 = arith.constant 0 : i32
    return %c0_i32, %c0_i32_0 : i32, i32
  }
  func.func @transform_8(%arg0: i32, %arg1: memref<2xi32, #tpu.memory_space<smem>>) -> (i32, i32) {
    %c0_i32 = arith.constant 0 : i32
    %c0_i32_0 = arith.constant 0 : i32
    %c0_i32_1 = arith.constant 0 : i32
    return %c0_i32, %c0_i32_0 : i32, i32
  }
  func.func @transform_9(%arg0: i32, %arg1: memref<2xi32, #tpu.memory_space<smem>>) -> (i32, i32) {
    %c0_i32 = arith.constant 0 : i32
    %c0_i32_0 = arith.constant 0 : i32
    %c0_i32_1 = arith.constant 0 : i32
    return %c0_i32, %c0_i32_0 : i32, i32
  }
  func.func @transform_10(%arg0: i32, %arg1: memref<2xi32, #tpu.memory_space<smem>>) -> (i32, i32, i32) {
    %0 = arith.index_cast %arg0 : i32 to index
    %1 = memref.load %arg1[%0] : memref<2xi32, #tpu.memory_space<smem>>
    %c0_i32 = arith.constant 0 : i32
    %c0_i32_0 = arith.constant 0 : i32
    %c0_i32_1 = arith.constant 0 : i32
    return %1, %c0_i32, %c0_i32_0 : i32, i32, i32
  }
  func.func @transform_11(%arg0: i32, %arg1: memref<2xi32, #tpu.memory_space<smem>>) -> (i32, i32, i32) {
    %0 = arith.index_cast %arg0 : i32 to index
    %1 = memref.load %arg1[%0] : memref<2xi32, #tpu.memory_space<smem>>
    %c0_i32 = arith.constant 0 : i32
    %c0_i32_0 = arith.constant 0 : i32
    %c0_i32_1 = arith.constant 0 : i32
    return %1, %c0_i32, %c0_i32_0 : i32, i32, i32
  }
  func.func @transform_12(%arg0: i32, %arg1: memref<2xi32, #tpu.memory_space<smem>>) -> (i32, i32) {
    %c0_i32 = arith.constant 0 : i32
    %c0_i32_0 = arith.constant 0 : i32
    %c0_i32_1 = arith.constant 0 : i32
    return %c0_i32, %c0_i32_0 : i32, i32
  }
  func.func @transform_13(%arg0: i32, %arg1: memref<2xi32, #tpu.memory_space<smem>>) -> (i32, i32) {
    %c0_i32 = arith.constant 0 : i32
    %c0_i32_0 = arith.constant 0 : i32
    %c0_i32_1 = arith.constant 0 : i32
    return %c0_i32, %c0_i32_0 : i32, i32
  }
  func.func @transform_14(%arg0: i32, %arg1: memref<2xi32, #tpu.memory_space<smem>>) -> (i32, i32, i32) {
    %c0_i32 = arith.constant 0 : i32
    %c0_i32_0 = arith.constant 0 : i32
    %c0_i32_1 = arith.constant 0 : i32
    return %arg0, %c0_i32, %c0_i32_0 : i32, i32, i32
  }
}

</mosaic_0001>

<llo_original>
// kernel: tile.22
$region0: #{tile.22}
  %s0 = inlined_call_operand.vmem [shape: f32[8,4,8], index: 0, kind: input, shape index: {}]
  %s1 = inlined_call_operand.vmem [shape: f32[8,32], index: 1, kind: output, shape index: {}]
  $region1: #{tile.22} parent=0
    #allocation0 [shape = 'u8[32768]{0}', space=vmem, size = 0x8000, scoped, tag = 'scoped mem for input reshape']
    %s3 = sshllo.u32 0, 4
    %s4 = smul.addr 4, 7
    %s5 = scalar_lea.vmem %s0, %s4
    %v6 = vld [vmem:[%s5] sm:%s3]
    %s7 = scalar_lea.vmem [#allocation0], 56
    %8 = vst [vmem:[%s7] sm:%s3] %v6
    %s9 = smul.addr 4, 6
    %s10 = scalar_lea.vmem %s0, %s9
    %v11 = vld [vmem:[%s10] sm:%s3]
    %s12 = scalar_lea.vmem [#allocation0], 48
    %13 = vst [vmem:[%s12] sm:%s3] %v11
    %s14 = smul.addr 4, 5
    %s15 = scalar_lea.vmem %s0, %s14
    %v16 = vld [vmem:[%s15] sm:%s3]
    %s17 = scalar_lea.vmem [#allocation0], 40
    %18 = vst [vmem:[%s17] sm:%s3] %v16
    %s19 = smul.addr 4, 4
    %s20 = scalar_lea.vmem %s0, %s19
    %v21 = vld [vmem:[%s20] sm:%s3]
    %s22 = scalar_lea.vmem [#allocation0], 32
    %23 = vst [vmem:[%s22] sm:%s3] %v21
    %s24 = smul.addr 4, 3
    %s25 = scalar_lea.vmem %s0, %s24
    %v26 = vld [vmem:[%s25] sm:%s3]
    %s27 = scalar_lea.vmem [#allocation0], 24
    %28 = vst [vmem:[%s27] sm:%s3] %v26
    %s29 = smul.addr 4, 2
    %s30 = scalar_lea.vmem %s0, %s29
    %v31 = vld [vmem:[%s30] sm:%s3]
    %s32 = scalar_lea.vmem [#allocation0], 16
    %33 = vst [vmem:[%s32] sm:%s3] %v31
    %s34 = scalar_lea.vmem %s0, 4
    %v35 = vld [vmem:[%s34] sm:%s3]
    %s36 = scalar_lea.vmem [#allocation0], 8
    %37 = vst [vmem:[%s36] sm:%s3] %v35
    %v38 = vld [vmem:[%s0] sm:%s3]
    %39 = vst [vmem:[#allocation0] sm:%s3] %v38
    %v40 = vld [vmem:[#allocation0] ss:$8 sm:$0xf]
    %v41 = vld [vmem:[#allocation0] ss:$8 sm:$0xf0]
    %vm42 = vcmask 1047556
    %v43 = vsel %vm42, %v41, %v40
    %vm44 = vcmask 64512
    %45 = vst.msk [vmem:[%s1] sm:$0xff] %vm44, %v43
    %s46 = scalar_lea.vmem [#allocation0], 3
    %v47 = vld [vmem:[%s46] ss:$8 sm:$0xf]
    %s48 = scalar_lea.vmem [#allocation0], 3
    %v49 = vld [vmem:[%s48] ss:$8 sm:$0xf0]
    %vm50 = vcmask 1047556
    %v51 = vsel %vm50, %v49, %v47
    %52 = vrot.lane.b32.xlu0 %v51, 24
    %v53 = vpop.permute.xlu0 %52
    %vm54 = vcmask 261312
    %55 = vst.msk [vmem:[%s1] sm:$0xff] %vm54, %v53
    %s56 = scalar_lea.vmem [#allocation0], 2
    %v57 = vld [vmem:[%s56] ss:$8 sm:$0xf]
    %s58 = scalar_lea.vmem [#allocation0], 2
    %v59 = vld [vmem:[%s58] ss:$8 sm:$0xf0]
    %vm60 = vcmask 1047556
    %v61 = vsel %vm60, %v59, %v57
    %62 = vrot.lane.b32.xlu0 %v61, 16
    %v63 = vpop.permute.xlu0 %62
    %vm64 = vcmask 195712
    %65 = vst.msk [vmem:[%s1] sm:$0xff] %vm64, %v63
    %s66 = scalar_lea.vmem [#allocation0], 1
    %v67 = vld [vmem:[%s66] ss:$8 sm:$0xf]
    %s68 = scalar_lea.vmem [#allocation0], 1
    %v69 = vld [vmem:[%s68] ss:$8 sm:$0xf0]
    %vm70 = vcmask 1047556
    %v71 = vsel %vm70, %v69, %v67
    %72 = vrot.lane.b32.xlu0 %v71, 8
    %v73 = vpop.permute.xlu0 %72
    %vm74 = vcmask 130112
    %75 = vst.msk [vmem:[%s1] sm:$0xff] %vm74, %v73

// kernel: tile.18
$region0: #{tile.18}
  #allocation0 [shape = 's32[1]{0}', space=sflag, size = 0x4, scoped, tag = 'scoped memory for tile.18']
  %s0 = inlined_call_operand.vmem [shape: f32[2], index: 0, kind: input, shape index: {}]
  %s1 = inlined_call_operand.vmem [shape: f32[16,2], index: 1, kind: output, shape index: {}]
  // Predicated region
  $region2: #{tile.18} parent=0 // pred_check
    _
  $region3: #{tile.18} parent=0 // pred_check_branch
    %3 = sbr.rel (0) target = $region5
  $region4: #{tile.18} parent=0 // pred_region
    _
  $region5: #{tile.18} parent=0 // pred_fallthru
    _
  %v4 = vld [vmem:[%s0] ss:$0 sm:$0xff]
  %5 = vst [vmem:[%s1] sm:$0xff] %v4
  %s6 = scalar_lea.vmem %s1, 8
  %7 = vst [vmem:[%s6] sm:$0xff] %v4

// kernel: mul.5
$region0: #{mul.5}
  %s0 = inlined_call_operand.vmem [shape: f32[16,2], index: 0, kind: input, shape index: {}]
  %s1 = inlined_call_operand.vmem [shape: f32[32], index: 1, kind: output, shape index: {}]
  $region1: #{mul.5} parent=0
    #allocation0 [shape = 'u8[4096]{0}', space=vmem, size = 0x1000, scoped, tag = 'scoped mem for output reshape']
    %v2 = vld [vmem:[%s0] sm:$0x1]
    %vm3 = vcmask 15360
    %4 = vst.msk [vmem:[#allocation0] sm:$0x1] %vm3, %v2
    %s5 = scalar_lea.vmem %s0, 15
    %v6 = vld [vmem:[%s5] sm:$0x1]
    %7 = vrot.lane.b32.xlu0 %v6, 30
    %v8 = vpop.permute.xlu0 %7
    %vm9 = vcmask 261360
    %10 = vst.msk [vmem:[#allocation0] sm:$0x1] %vm9, %v8
    %s11 = scalar_lea.vmem %s0, 14
    %v12 = vld [vmem:[%s11] sm:$0x1]
    %13 = vrot.lane.b32.xlu0 %v12, 28
    %v14 = vpop.permute.xlu0 %13
    %vm15 = vcmask 244960
    %16 = vst.msk [vmem:[#allocation0] sm:$0x1] %vm15, %v14
    %s17 = scalar_lea.vmem %s0, 13
    %v18 = vld [vmem:[%s17] sm:$0x1]
    %19 = vrot.lane.b32.xlu0 %v18, 26
    %v20 = vpop.permute.xlu0 %19
    %vm21 = vcmask 228560
    %22 = vst.msk [vmem:[#allocation0] sm:$0x1] %vm21, %v20
    %s23 = scalar_lea.vmem %s0, 12
    %v24 = vld [vmem:[%s23] sm:$0x1]
    %25 = vrot.lane.b32.xlu0 %v24, 24
    %v26 = vpop.permute.xlu0 %25
    %vm27 = vcmask 212160
    %28 = vst.msk [vmem:[#allocation0] sm:$0x1] %vm27, %v26
    %s29 = scalar_lea.vmem %s0, 11
    %v30 = vld [vmem:[%s29] sm:$0x1]
    %31 = vrot.lane.b32.xlu0 %v30, 22
    %v32 = vpop.permute.xlu0 %31
    %vm33 = vcmask 195760
    %34 = vst.msk [vmem:[#allocation0] sm:$0x1] %vm33, %v32
    %s35 = scalar_lea.vmem %s0, 10
    %v36 = vld [vmem:[%s35] sm:$0x1]
    %37 = vrot.lane.b32.xlu0 %v36, 20
    %v38 = vpop.permute.xlu0 %37
    %vm39 = vcmask 179360
    %40 = vst.msk [vmem:[#allocation0] sm:$0x1] %vm39, %v38
    %s41 = scalar_lea.vmem %s0, 9
    %v42 = vld [vmem:[%s41] sm:$0x1]
    %43 = vrot.lane.b32.xlu0 %v42, 18
    %v44 = vpop.permute.xlu0 %43
    %vm45 = vcmask 162960
    %46 = vst.msk [vmem:[#allocation0] sm:$0x1] %vm45, %v44
    %s47 = scalar_lea.vmem %s0, 8
    %v48 = vld [vmem:[%s47] sm:$0x1]
    %49 = vrot.lane.b32.xlu0 %v48, 16
    %v50 = vpop.permute.xlu0 %49
    %vm51 = vcmask 146560
    %52 = vst.msk [vmem:[#allocation0] sm:$0x1] %vm51, %v50
    %s53 = scalar_lea.vmem %s0, 7
    %v54 = vld [vmem:[%s53] sm:$0x1]
    %55 = vrot.lane.b32.xlu0 %v54, 14
    %v56 = vpop.permute.xlu0 %55
    %vm57 = vcmask 130160
    %58 = vst.msk [vmem:[#allocation0] sm:$0x1] %vm57, %v56
    %s59 = scalar_lea.vmem %s0, 6
    %v60 = vld [vmem:[%s59] sm:$0x1]
    %61 = vrot.lane.b32.xlu0 %v60, 12
    %v62 = vpop.permute.xlu0 %61
    %vm63 = vcmask 113760
    %64 = vst.msk [vmem:[#allocation0] sm:$0x1] %vm63, %v62
    %s65 = scalar_lea.vmem %s0, 5
    %v66 = vld [vmem:[%s65] sm:$0x1]
    %67 = vrot.lane.b32.xlu0 %v66, 10
    %v68 = vpop.permute.xlu0 %67
    %vm69 = vcmask 97360
    %70 = vst.msk [vmem:[#allocation0] sm:$0x1] %vm69, %v68
    %s71 = scalar_lea.vmem %s0, 4
    %v72 = vld [vmem:[%s71] sm:$0x1]
    %73 = vrot.lane.b32.xlu0 %v72, 8
    %v74 = vpop.permute.xlu0 %73
    %vm75 = vcmask 80960
    %76 = vst.msk [vmem:[#allocation0] sm:$0x1] %vm75, %v74
    %s77 = scalar_lea.vmem %s0, 3
    %v78 = vld [vmem:[%s77] sm:$0x1]
    %79 = vrot.lane.b32.xlu0 %v78, 6
    %v80 = vpop.permute.xlu0 %79
    %vm81 = vcmask 64560
    %82 = vst.msk [vmem:[#allocation0] sm:$0x1] %vm81, %v80
    %s83 = scalar_lea.vmem %s0, 2
    %v84 = vld [vmem:[%s83] sm:$0x1]
    %85 = vrot.lane.b32.xlu0 %v84, 4
    %v86 = vpop.permute.xlu0 %85
    %vm87 = vcmask 48160
    %88 = vst.msk [vmem:[#allocation0] sm:$0x1] %vm87, %v86
    %s89 = scalar_lea.vmem %s0, 1
    %v90 = vld [vmem:[%s89] sm:$0x1]
    %91 = vrot.lane.b32.xlu0 %v90, 2
    %v92 = vpop.permute.xlu0 %91
    %vm93 = vcmask 31760
    %94 = vst.msk [vmem:[#allocation0] sm:$0x1] %vm93, %v92
    %s96 = sshllo.u32 0, 1
    %v98 = vld [vmem:[#allocation0] sm:%s96]
    %s99 = sshllo.u32 0, 1
    %100 = vst [vmem:[%s1] sm:%s99] %v98

// kernel: transformer_block.1
$region0: #{transformer_block.1}
  #allocation0 [shape = 'u32[]', space=smem, size = 0x4, offset = 0x4, fixed_abs, tag = 'smem constant byte address 0x4 - core index']
  #allocation1 [shape = 'u32[144,128]{1,0:T(1,128)}', space=vmem, size = 0x12000, scoped, tag = 'internal scratch']
  #allocation2 [shape = 's32[1]{0}', space=sflag, size = 0x4, scoped, tag = 'scoped memory for transformer_block.1']
  #allocation3 [shape = 'u8[512]{0}', space=smem, size = 0x200, scoped, tag = 'prefetched SMEM operand 0']
  %s0 = inlined_call_operand.vmem [shape: s32[2], index: 0, kind: input, shape index: {}]
  %s1 = inlined_call_operand.vmem [shape: f32[2,8,32], index: 1, kind: input, shape index: {}]
  %s2 = inlined_call_operand.vmem [shape: f32[2,4,16], index: 2, kind: input, shape index: {}]
  %s3 = inlined_call_operand.vmem [shape: f32[2,1,12], index: 3, kind: input, shape index: {}]
  %s4 = inlined_call_operand.vmem [shape: f32[2,1,32], index: 4, kind: input, shape index: {}]
  %s5 = inlined_call_operand.vmem [shape: f32[16,32], index: 5, kind: input, shape index: {}]
  %s6 = inlined_call_operand.vmem [shape: f32[16,192], index: 6, kind: input, shape index: {}]
  %s7 = inlined_call_operand.vmem [shape: f32[32,192], index: 7, kind: input, shape index: {}]
  %s8 = inlined_call_operand.vmem [shape: f32[32,160], index: 8, kind: input, shape index: {}]
  %s9 = inlined_call_operand.vmem [shape: f32[16,64], index: 9, kind: input, shape index: {}]
  %s10 = inlined_call_operand.vmem [shape: f32[32,32], index: 10, kind: input, shape index: {}]
  %s11 = inlined_call_operand.vmem [shape: f32[4,32,256], index: 11, kind: input, shape index: {}]
  %s12 = inlined_call_operand.vmem [shape: f32[4,96,32], index: 12, kind: input, shape index: {}]
  %s13 = inlined_call_operand.vmem [shape: f32[32,768], index: 13, kind: input, shape index: {}]
  %s14 = inlined_call_operand.vmem [shape: f32[384,32], index: 14, kind: input, shape index: {}]
  %s15 = inlined_call_operand.hbm [shape: f32[2,8,32], index: 15, kind: output, shape index: {}]
  %s16 = sld [smem:[#allocation0]]
  $region89: #{transformer_block.1} parent=0
    _
  %s18 = ssub.s32 1, %s16
  %s19 = scalar_select 0, %s18, %s16
  %s20 = sshll.u32 %s0, 4
  %s21 = int_to_ptr.vmem [resolvable:$true] %s20
  %23 = dma.vmem_to_smem %s21, 16, [#allocation3], [#allocation2]
  %24 = dma.done [#allocation2], 16
  %25 = sfence
  $region1: #{transformer_block.1} parent=0
    #allocation4 [shape = 'u8[8192]{0}', space=vmem, size = 0x2000, scoped, tag = 'output window, operand 0']
    #allocation5 [shape = 's32[2]{0}', space=sflag, size = 0x8, scoped, tag = 'scoped memory for transformer_block.1']
    %26 = vsyncpa [#allocation5], 0
    %s27 = scalar_lea.sflag [#allocation5], 1
    %28 = vsyncpa %s27, 0
    loop: start=0, step=1, limit=4
    $region2: #{transformer_block.1} parent=1 // loop_pre_header
      _
    $region3: #{transformer_block.1} parent=1 // loop_header
      %s30 = sphi 0, %s34
      %p31 = scmp.ge.s32.totalorder %s30, 4
      %s40 = sphi 0, %s42
      %s43 = sphi 0, %s40
      %s44 = sphi 0, %s43
      %s60 = sphi 0, %s44
      %s66 = sphi 0, %s68
      %s69 = sphi 0, %s66
      %s70 = sphi 0, %s69
      %s86 = sphi 0, %s70
      %s92 = sphi 0, %s94
      %s95 = sphi 0, %s92
      %s96 = sphi 0, %s95
      %s112 = sphi 0, %s96
      %s118 = sphi 0, %s120
      %s121 = sphi 0, %s118
      %s122 = sphi 0, %s121
      %s138 = sphi 0, %s122
      %s142 = sphi 0, %s142
      %s144 = sphi 0, %s142
      %s145 = sphi 0, %s144
      %s159 = sphi 0, %s145
      %s163 = sphi 0, %s163
      %s165 = sphi 0, %s163
      %s166 = sphi 0, %s165
      %s180 = sphi 0, %s166
      %s184 = sphi 0, %s184
      %s186 = sphi 0, %s184
      %s187 = sphi 0, %s186
      %s201 = sphi 0, %s187
      %s205 = sphi 0, %s205
      %s207 = sphi 0, %s205
      %s208 = sphi 0, %s207
      %s222 = sphi 0, %s208
      %s226 = sphi 0, %s226
      %s228 = sphi 0, %s226
      %s229 = sphi 0, %s228
      %s243 = sphi 0, %s229
      %s247 = sphi 0, %s247
      %s249 = sphi 0, %s247
      %s250 = sphi 0, %s249
      %s264 = sphi 0, %s250
      %s272 = sphi 0, %s274
      %s275 = sphi 0, %s272
      %s276 = sphi 0, %s275
      %s292 = sphi 0, %s276
      %s300 = sphi 0, %s302
      %s303 = sphi 0, %s300
      %s304 = sphi 0, %s303
      %s320 = sphi 0, %s304
      %s324 = sphi 0, %s324
      %s326 = sphi 0, %s324
      %s327 = sphi 0, %s326
      %s341 = sphi 0, %s327
      %s345 = sphi 0, %s345
      %s347 = sphi 0, %s345
      %s348 = sphi 0, %s347
      %s362 = sphi 0, %s348
      %s368 = sphi 0, %s370
      %s371 = sphi 0, %s368
      %s372 = sphi 0, %s371
      %s388 = sphi 0, %s372
    $region4: #{transformer_block.1} parent=1 // loop_header_branch
      %33 = sbr.rel (%p31) target = $region8
    $region5: #{transformer_block.1} parent=1 // loop_body
      %s35 = ssub.s32 %s30, 1
      %s36 = ssub.s32 %s30, 2
      %s37 = sadd.s32 %s30, 1
      %s38 = ssub.s32 %s30, %s37
      %p39 = scmp.eq.s32.totalorder %s38, 0
      %s41 = sadd.s32 %s40, 1
      %s42 = scalar_select %p39, %s40, %s41
      %p45 = pneg %p39
      %p46 = scmp.eq.s32.totalorder %s30, 1
      %p47 = por %p45, %p46
      %p48 = scmp.ne.s32.totalorder %s40, %s43
      %p49 = scmp.eq.s32.totalorder %s30, 0
      %p50 = por %p48, %p49
      %p51 = scmp.ne.s32.totalorder %s40, %s43
      %p52 = scmp.eq.s32.totalorder %s35, 1
      %p53 = por %p51, %p52
      %p54 = scmp.ne.s32.totalorder %s43, %s44
      %p55 = scmp.eq.s32.totalorder %s35, 0
      %p56 = por %p54, %p55
      %p57 = scmp.ne.s32.totalorder %s43, %s44
      %p58 = scmp.eq.s32.totalorder %s36, 1
      %p59 = por %p57, %p58
      %p61 = scmp.ne.s32.totalorder %s44, %s60
      %p62 = scmp.eq.s32.totalorder %s36, 0
      %p63 = por %p61, %p62
      %s64 = ssub.s32 %s30, %s37
      %p65 = scmp.eq.s32.totalorder %s64, 0
      %s67 = sadd.s32 %s66, 1
      %s68 = scalar_select %p65, %s66, %s67
      %p71 = pneg %p65
      %p72 = scmp.eq.s32.totalorder %s30, 1
      %p73 = por %p71, %p72
      %p74 = scmp.ne.s32.totalorder %s66, %s69
      %p75 = scmp.eq.s32.totalorder %s30, 0
      %p76 = por %p74, %p75
      %p77 = scmp.ne.s32.totalorder %s66, %s69
      %p78 = scmp.eq.s32.totalorder %s35, 1
      %p79 = por %p77, %p78
      %p80 = scmp.ne.s32.totalorder %s69, %s70
      %p81 = scmp.eq.s32.totalorder %s35, 0
      %p82 = por %p80, %p81
      %p83 = scmp.ne.s32.totalorder %s69, %s70
      %p84 = scmp.eq.s32.totalorder %s36, 1
      %p85 = por %p83, %p84
      %p87 = scmp.ne.s32.totalorder %s70, %s86
      %p88 = scmp.eq.s32.totalorder %s36, 0
      %p89 = por %p87, %p88
      %s90 = ssub.s32 %s30, %s37
      %p91 = scmp.eq.s32.totalorder %s90, 0
      %s93 = sadd.s32 %s92, 1
      %s94 = scalar_select %p91, %s92, %s93
      %p97 = pneg %p91
      %p98 = scmp.eq.s32.totalorder %s30, 1
      %p99 = por %p97, %p98
      %p100 = scmp.ne.s32.totalorder %s92, %s95
      %p101 = scmp.eq.s32.totalorder %s30, 0
      %p102 = por %p100, %p101
      %p103 = scmp.ne.s32.totalorder %s92, %s95
      %p104 = scmp.eq.s32.totalorder %s35, 1
      %p105 = por %p103, %p104
      %p106 = scmp.ne.s32.totalorder %s95, %s96
      %p107 = scmp.eq.s32.totalorder %s35, 0
      %p108 = por %p106, %p107
      %p109 = scmp.ne.s32.totalorder %s95, %s96
      %p110 = scmp.eq.s32.totalorder %s36, 1
      %p111 = por %p109, %p110
      %p113 = scmp.ne.s32.totalorder %s96, %s112
      %p114 = scmp.eq.s32.totalorder %s36, 0
      %p115 = por %p113, %p114
      %s116 = ssub.s32 %s30, %s37
      %p117 = scmp.eq.s32.totalorder %s116, 0
      %s119 = sadd.s32 %s118, 1
      %s120 = scalar_select %p117, %s118, %s119
      %p123 = pneg %p117
      %p124 = scmp.eq.s32.totalorder %s30, 1
      %p125 = por %p123, %p124
      %p126 = scmp.ne.s32.totalorder %s118, %s121
      %p127 = scmp.eq.s32.totalorder %s30, 0
      %p128 = por %p126, %p127
      %p129 = scmp.ne.s32.totalorder %s118, %s121
      %p130 = scmp.eq.s32.totalorder %s35, 1
      %p131 = por %p129, %p130
      %p132 = scmp.ne.s32.totalorder %s121, %s122
      %p133 = scmp.eq.s32.totalorder %s35, 0
      %p134 = por %p132, %p133
      %p135 = scmp.ne.s32.totalorder %s121, %s122
      %p136 = scmp.eq.s32.totalorder %s36, 1
      %p137 = por %p135, %p136
      %p139 = scmp.ne.s32.totalorder %s122, %s138
      %p140 = scmp.eq.s32.totalorder %s36, 0
      %p141 = por %p139, %p140
      %s143 = sadd.s32 %s142, 1
      %p146 = scmp.eq.s32.totalorder %s30, 1
      %p147 = scmp.ne.s32.totalorder %s142, %s144
      %p148 = scmp.eq.s32.totalorder %s30, 0
      %p149 = por %p147, %p148
      %p150 = scmp.ne.s32.totalorder %s142, %s144
      %p151 = scmp.eq.s32.totalorder %s35, 1
      %p152 = por %p150, %p151
      %p153 = scmp.ne.s32.totalorder %s144, %s145
      %p154 = scmp.eq.s32.totalorder %s35, 0
      %p155 = por %p153, %p154
      %p156 = scmp.ne.s32.totalorder %s144, %s145
      %p157 = scmp.eq.s32.totalorder %s36, 1
      %p158 = por %p156, %p157
      %p160 = scmp.ne.s32.totalorder %s145, %s159
      %p161 = scmp.eq.s32.totalorder %s36, 0
      %p162 = por %p160, %p161
      %s164 = sadd.s32 %s163, 1
      %p167 = scmp.eq.s32.totalorder %s30, 1
      %p168 = scmp.ne.s32.totalorder %s163, %s165
      %p169 = scmp.eq.s32.totalorder %s30, 0
      %p170 = por %p168, %p169
      %p171 = scmp.ne.s32.totalorder %s163, %s165
      %p172 = scmp.eq.s32.totalorder %s35, 1
      %p173 = por %p171, %p172
      %p174 = scmp.ne.s32.totalorder %s165, %s166
      %p175 = scmp.eq.s32.totalorder %s35, 0
      %p176 = por %p174, %p175
      %p177 = scmp.ne.s32.totalorder %s165, %s166
      %p178 = scmp.eq.s32.totalorder %s36, 1
      %p179 = por %p177, %p178
      %p181 = scmp.ne.s32.totalorder %s166, %s180
      %p182 = scmp.eq.s32.totalorder %s36, 0
      %p183 = por %p181, %p182
      %s185 = sadd.s32 %s184, 1
      %p188 = scmp.eq.s32.totalorder %s30, 1
      %p189 = scmp.ne.s32.totalorder %s184, %s186
      %p190 = scmp.eq.s32.totalorder %s30, 0
      %p191 = por %p189, %p190
      %p192 = scmp.ne.s32.totalorder %s184, %s186
      %p193 = scmp.eq.s32.totalorder %s35, 1
      %p194 = por %p192, %p193
      %p195 = scmp.ne.s32.totalorder %s186, %s187
      %p196 = scmp.eq.s32.totalorder %s35, 0
      %p197 = por %p195, %p196
      %p198 = scmp.ne.s32.totalorder %s186, %s187
      %p199 = scmp.eq.s32.totalorder %s36, 1
      %p200 = por %p198, %p199
      %p202 = scmp.ne.s32.totalorder %s187, %s201
      %p203 = scmp.eq.s32.totalorder %s36, 0
      %p204 = por %p202, %p203
      %s206 = sadd.s32 %s205, 1
      %p209 = scmp.eq.s32.totalorder %s30, 1
      %p210 = scmp.ne.s32.totalorder %s205, %s207
      %p211 = scmp.eq.s32.totalorder %s30, 0
      %p212 = por %p210, %p211
      %p213 = scmp.ne.s32.totalorder %s205, %s207
      %p214 = scmp.eq.s32.totalorder %s35, 1
      %p215 = por %p213, %p214
      %p216 = scmp.ne.s32.totalorder %s207, %s208
      %p217 = scmp.eq.s32.totalorder %s35, 0
      %p218 = por %p216, %p217
      %p219 = scmp.ne.s32.totalorder %s207, %s208
      %p220 = scmp.eq.s32.totalorder %s36, 1
      %p221 = por %p219, %p220
      %p223 = scmp.ne.s32.totalorder %s208, %s222
      %p224 = scmp.eq.s32.totalorder %s36, 0
      %p225 = por %p223, %p224
      %s227 = sadd.s32 %s226, 1
      %p230 = scmp.eq.s32.totalorder %s30, 1
      %p231 = scmp.ne.s32.totalorder %s226, %s228
      %p232 = scmp.eq.s32.totalorder %s30, 0
      %p233 = por %p231, %p232
      %p234 = scmp.ne.s32.totalorder %s226, %s228
      %p235 = scmp.eq.s32.totalorder %s35, 1
      %p236 = por %p234, %p235
      %p237 = scmp.ne.s32.totalorder %s228, %s229
      %p238 = scmp.eq.s32.totalorder %s35, 0
      %p239 = por %p237, %p238
      %p240 = scmp.ne.s32.totalorder %s228, %s229
      %p241 = scmp.eq.s32.totalorder %s36, 1
      %p242 = por %p240, %p241
      %p244 = scmp.ne.s32.totalorder %s229, %s243
      %p245 = scmp.eq.s32.totalorder %s36, 0
      %p246 = por %p244, %p245
      %s248 = sadd.s32 %s247, 1
      %p251 = scmp.eq.s32.totalorder %s30, 1
      %p252 = scmp.ne.s32.totalorder %s247, %s249
      %p253 = scmp.eq.s32.totalorder %s30, 0
      %p254 = por %p252, %p253
      %p255 = scmp.ne.s32.totalorder %s247, %s249
      %p256 = scmp.eq.s32.totalorder %s35, 1
      %p257 = por %p255, %p256
      %p258 = scmp.ne.s32.totalorder %s249, %s250
      %p259 = scmp.eq.s32.totalorder %s35, 0
      %p260 = por %p258, %p259
      %p261 = scmp.ne.s32.totalorder %s249, %s250
      %p262 = scmp.eq.s32.totalorder %s36, 1
      %p263 = por %p261, %p262
      %p265 = scmp.ne.s32.totalorder %s250, %s264
      %p266 = scmp.eq.s32.totalorder %s36, 0
      %p267 = por %p265, %p266
      %s268 = sld [smem:[#allocation3 + %s30]]
      %s269 = sld [smem:[#allocation3 + %s37]]
      %s270 = ssub.s32 %s268, %s269
      %p271 = scmp.eq.s32.totalorder %s270, 0
      %s273 = sadd.s32 %s272, 1
      %s274 = scalar_select %p271, %s272, %s273
      %p277 = pneg %p271
      %p278 = scmp.eq.s32.totalorder %s30, 1
      %p279 = por %p277, %p278
      %p280 = scmp.ne.s32.totalorder %s272, %s275
      %p281 = scmp.eq.s32.totalorder %s30, 0
      %p282 = por %p280, %p281
      %p283 = scmp.ne.s32.totalorder %s272, %s275
      %p284 = scmp.eq.s32.totalorder %s35, 1
      %p285 = por %p283, %p284
      %p286 = scmp.ne.s32.totalorder %s275, %s276
      %p287 = scmp.eq.s32.totalorder %s35, 0
      %p288 = por %p286, %p287
      %p289 = scmp.ne.s32.totalorder %s275, %s276
      %p290 = scmp.eq.s32.totalorder %s36, 1
      %p291 = por %p289, %p290
      %p293 = scmp.ne.s32.totalorder %s276, %s292
      %p294 = scmp.eq.s32.totalorder %s36, 0
      %p295 = por %p293, %p294
      %s296 = sld [smem:[#allocation3 + %s30]]
      %s297 = sld [smem:[#allocation3 + %s37]]
      %s298 = ssub.s32 %s296, %s297
      %p299 = scmp.eq.s32.totalorder %s298, 0
      %s301 = sadd.s32 %s300, 1
      %s302 = scalar_select %p299, %s300, %s301
      %p305 = pneg %p299
      %p306 = scmp.eq.s32.totalorder %s30, 1
      %p307 = por %p305, %p306
      %p308 = scmp.ne.s32.totalorder %s300, %s303
      %p309 = scmp.eq.s32.totalorder %s30, 0
      %p310 = por %p308, %p309
      %p311 = scmp.ne.s32.totalorder %s300, %s303
      %p312 = scmp.eq.s32.totalorder %s35, 1
      %p313 = por %p311, %p312
      %p314 = scmp.ne.s32.totalorder %s303, %s304
      %p315 = scmp.eq.s32.totalorder %s35, 0
      %p316 = por %p314, %p315
      %p317 = scmp.ne.s32.totalorder %s303, %s304
      %p318 = scmp.eq.s32.totalorder %s36, 1
      %p319 = por %p317, %p318
      %p321 = scmp.ne.s32.totalorder %s304, %s320
      %p322 = scmp.eq.s32.totalorder %s36, 0
      %p323 = por %p321, %p322
      %s325 = sadd.s32 %s324, 1
      %p328 = scmp.eq.s32.totalorder %s30, 1
      %p329 = scmp.ne.s32.totalorder %s324, %s326
      %p330 = scmp.eq.s32.totalorder %s30, 0
      %p331 = por %p329, %p330
      %p332 = scmp.ne.s32.totalorder %s324, %s326
      %p333 = scmp.eq.s32.totalorder %s35, 1
      %p334 = por %p332, %p333
      %p335 = scmp.ne.s32.totalorder %s326, %s327
      %p336 = scmp.eq.s32.totalorder %s35, 0
      %p337 = por %p335, %p336
      %p338 = scmp.ne.s32.totalorder %s326, %s327
      %p339 = scmp.eq.s32.totalorder %s36, 1
      %p340 = por %p338, %p339
      %p342 = scmp.ne.s32.totalorder %s327, %s341
      %p343 = scmp.eq.s32.totalorder %s36, 0
      %p344 = por %p342, %p343
      %s346 = sadd.s32 %s345, 1
      %p349 = scmp.eq.s32.totalorder %s30, 1
      %p350 = scmp.ne.s32.totalorder %s345, %s347
      %p351 = scmp.eq.s32.totalorder %s30, 0
      %p352 = por %p350, %p351
      %p353 = scmp.ne.s32.totalorder %s345, %s347
      %p354 = scmp.eq.s32.totalorder %s35, 1
      %p355 = por %p353, %p354
      %p356 = scmp.ne.s32.totalorder %s347, %s348
      %p357 = scmp.eq.s32.totalorder %s35, 0
      %p358 = por %p356, %p357
      %p359 = scmp.ne.s32.totalorder %s347, %s348
      %p360 = scmp.eq.s32.totalorder %s36, 1
      %p361 = por %p359, %p360
      %p363 = scmp.ne.s32.totalorder %s348, %s362
      %p364 = scmp.eq.s32.totalorder %s36, 0
      %p365 = por %p363, %p364
      %s366 = ssub.s32 %s30, %s37
      %p367 = scmp.eq.s32.totalorder %s366, 0
      %s369 = sadd.s32 %s368, 1
      %s370 = scalar_select %p367, %s368, %s369
      %p373 = pneg %p367
      %p374 = scmp.eq.s32.totalorder %s30, 1
      %p375 = por %p373, %p374
      %p376 = scmp.ne.s32.totalorder %s368, %s371
      %p377 = scmp.eq.s32.totalorder %s30, 0
      %p378 = por %p376, %p377
      %p379 = scmp.ne.s32.totalorder %s368, %s371
      %p380 = scmp.eq.s32.totalorder %s35, 1
      %p381 = por %p379, %p380
      %p382 = scmp.ne.s32.totalorder %s371, %s372
      %p383 = scmp.eq.s32.totalorder %s35, 0
      %p384 = por %p382, %p383
      %p385 = scmp.ne.s32.totalorder %s371, %s372
      %p386 = scmp.eq.s32.totalorder %s36, 1
      %p387 = por %p385, %p386
      %p389 = scmp.ne.s32.totalorder %s372, %s388
      %p390 = scmp.eq.s32.totalorder %s36, 0
      %p391 = por %p389, %p390
      %p392 = scmp.le.s32.totalorder 1, %s30
      %p393 = scmp.lt.s32.totalorder %s30, 3
      %p394 = pnand %p392, %p393
      %p395 = pneg %p394
      // Predicated region
      $region9: #{transformer_block.1} parent=5 // pred_check
        _
      $region10: #{transformer_block.1} parent=5 // pred_check_branch
        %397 = sbr.rel (%p394) target = $region12
      $region11: #{transformer_block.1} parent=5 // pred_region
        %s398 = ssub.s32 %s30, 1
        // Predicated region
        $region13: #{transformer_block.1} parent=11 // pred_check
          %p399 = pneg %p155
        $region14: #{transformer_block.1} parent=11 // pred_check_branch
          %401 = sbr.rel (%p399) target = $region16
        $region15: #{transformer_block.1} parent=11 // pred_region
          _
        $region16: #{transformer_block.1} parent=11 // pred_fallthru
          _
        // Predicated region
        $region17: #{transformer_block.1} parent=11 // pred_check
          %p402 = pneg %p176
        $region18: #{transformer_block.1} parent=11 // pred_check_branch
          %404 = sbr.rel (%p402) target = $region20
        $region19: #{transformer_block.1} parent=11 // pred_region
          _
        $region20: #{transformer_block.1} parent=11 // pred_fallthru
          _
        // Predicated region
        $region21: #{transformer_block.1} parent=11 // pred_check
          %p405 = pneg %p197
        $region22: #{transformer_block.1} parent=11 // pred_check_branch
          %407 = sbr.rel (%p405) target = $region24
        $region23: #{transformer_block.1} parent=11 // pred_region
          _
        $region24: #{transformer_block.1} parent=11 // pred_fallthru
          _
        // Predicated region
        $region25: #{transformer_block.1} parent=11 // pred_check
          %p408 = pneg %p218
        $region26: #{transformer_block.1} parent=11 // pred_check_branch
          %410 = sbr.rel (%p408) target = $region28
        $region27: #{transformer_block.1} parent=11 // pred_region
          _
        $region28: #{transformer_block.1} parent=11 // pred_fallthru
          _
        // Predicated region
        $region29: #{transformer_block.1} parent=11 // pred_check
          %p411 = pneg %p239
        $region30: #{transformer_block.1} parent=11 // pred_check_branch
          %413 = sbr.rel (%p411) target = $region32
        $region31: #{transformer_block.1} parent=11 // pred_region
          _
        $region32: #{transformer_block.1} parent=11 // pred_fallthru
          _
        // Predicated region
        $region33: #{transformer_block.1} parent=11 // pred_check
          %p414 = pneg %p260
        $region34: #{transformer_block.1} parent=11 // pred_check_branch
          %416 = sbr.rel (%p414) target = $region36
        $region35: #{transformer_block.1} parent=11 // pred_region
          _
        $region36: #{transformer_block.1} parent=11 // pred_fallthru
          _
        // Predicated region
        $region37: #{transformer_block.1} parent=11 // pred_check
          %p417 = pneg %p337
        $region38: #{transformer_block.1} parent=11 // pred_check_branch
          %419 = sbr.rel (%p417) target = $region40
        $region39: #{transformer_block.1} parent=11 // pred_region
          _
        $region40: #{transformer_block.1} parent=11 // pred_fallthru
          _
        // Predicated region
        $region41: #{transformer_block.1} parent=11 // pred_check
          %p420 = pneg %p358
        $region42: #{transformer_block.1} parent=11 // pred_check_branch
          %422 = sbr.rel (%p420) target = $region44
        $region43: #{transformer_block.1} parent=11 // pred_region
          _
        $region44: #{transformer_block.1} parent=11 // pred_fallthru
          _
      $region12: #{transformer_block.1} parent=5 // pred_fallthru
        _
      %p423 = scmp.lt.s32.totalorder %s30, 2
      // Predicated region
      $region45: #{transformer_block.1} parent=5 // pred_check
        %p424 = pneg %p423
      $region46: #{transformer_block.1} parent=5 // pred_check_branch
        %426 = sbr.rel (%p424) target = $region48
      $region47: #{transformer_block.1} parent=5 // pred_region
        // Predicated region
        $region49: #{transformer_block.1} parent=47 // pred_check
          %p427 = pneg %p50
        $region50: #{transformer_block.1} parent=47 // pred_check_branch
          %429 = sbr.rel (%p427) target = $region52
        $region51: #{transformer_block.1} parent=47 // pred_region
          %p430 = scmp.lt.s32.totalorder %s30, 1
          %s431 = scalar_select %p430, %s30, 1
          %s432 = smul.addr %s431, 8
          %s433 = scalar_lea.vmem %s1, %s432
        $region52: #{transformer_block.1} parent=47 // pred_fallthru
          _
        // Predicated region
        $region53: #{transformer_block.1} parent=47 // pred_check
          %p434 = pneg %p76
        $region54: #{transformer_block.1} parent=47 // pred_check_branch
          %436 = sbr.rel (%p434) target = $region56
        $region55: #{transformer_block.1} parent=47 // pred_region
          %p437 = scmp.lt.s32.totalorder %s30, 1
          %s438 = scalar_select %p437, %s30, 1
          %s439 = smul.addr %s438, 4
          %s440 = scalar_lea.vmem %s2, %s439
        $region56: #{transformer_block.1} parent=47 // pred_fallthru
          _
        // Predicated region
        $region57: #{transformer_block.1} parent=47 // pred_check
          %p441 = pneg %p102
        $region58: #{transformer_block.1} parent=47 // pred_check_branch
          %443 = sbr.rel (%p441) target = $region60
        $region59: #{transformer_block.1} parent=47 // pred_region
          %p444 = scmp.lt.s32.totalorder %s30, 1
          %s445 = scalar_select %p444, %s30, 1
          %s446 = scalar_lea.vmem %s3, %s445
        $region60: #{transformer_block.1} parent=47 // pred_fallthru
          _
        // Predicated region
        $region61: #{transformer_block.1} parent=47 // pred_check
          %p447 = pneg %p128
        $region62: #{transformer_block.1} parent=47 // pred_check_branch
          %449 = sbr.rel (%p447) target = $region64
        $region63: #{transformer_block.1} parent=47 // pred_region
          %p450 = scmp.lt.s32.totalorder %s30, 1
          %s451 = scalar_select %p450, %s30, 1
          %s452 = scalar_lea.vmem %s4, %s451
        $region64: #{transformer_block.1} parent=47 // pred_fallthru
          _
        // Predicated region
        $region65: #{transformer_block.1} parent=47 // pred_check
          %p453 = pneg %p282
        $region66: #{transformer_block.1} parent=47 // pred_check_branch
          %455 = sbr.rel (%p453) target = $region68
        $region67: #{transformer_block.1} parent=47 // pred_region
          %s456 = sld [smem:[#allocation3 + %s30]]
          %p457 = scmp.lt.s32.totalorder %s456, 3
          %s458 = scalar_select %p457, %s456, 3
          %s459 = smul.addr %s458, 8
          %s460 = smul.addr %s459, 8
          %s461 = scalar_lea.vmem %s11, %s460
          %s462 = sld [smem:[#allocation3 + %s30]]
        $region68: #{transformer_block.1} parent=47 // pred_fallthru
          _
        // Predicated region
        $region69: #{transformer_block.1} parent=47 // pred_check
          %p463 = pneg %p310
        $region70: #{transformer_block.1} parent=47 // pred_check_branch
          %465 = sbr.rel (%p463) target = $region72
        $region71: #{transformer_block.1} parent=47 // pred_region
          %s466 = sld [smem:[#allocation3 + %s30]]
          %p467 = scmp.lt.s32.totalorder %s466, 3
          %s468 = scalar_select %p467, %s466, 3
          %s469 = smul.addr %s468, 12
          %s470 = smul.addr %s469, 8
          %s471 = scalar_lea.vmem %s12, %s470
          %s472 = sld [smem:[#allocation3 + %s30]]
        $region72: #{transformer_block.1} parent=47 // pred_fallthru
          _
      $region48: #{transformer_block.1} parent=5 // pred_fallthru
        _
      %p473 = scmp.le.s32.totalorder 1, %s30
      %p474 = scmp.lt.s32.totalorder %s30, 3
      %p475 = pnand %p473, %p474
      %p476 = pneg %p475
      // Predicated region
      $region73: #{transformer_block.1} parent=5 // pred_check
        _
      $region74: #{transformer_block.1} parent=5 // pred_check_branch
        %478 = sbr.rel (%p475) target = $region76
      $region75: #{transformer_block.1} parent=5 // pred_region
        %s479 = ssub.s32 %s30, 1
        %p480 = scmp.lt.s32.totalorder %s35, 1
        %s481 = scalar_select %p480, %s35, 1
        %s482 = smul.addr %s481, 8
        %s483 = scalar_lea.vmem %s1, %s482
        %p484 = pneg %p56
        %p485 = pneg %p53
        %p486 = scmp.lt.s32.totalorder %s35, 1
        %s487 = scalar_select %p486, %s35, 1
        %s488 = smul.addr %s487, 4
        %s489 = scalar_lea.vmem %s2, %s488
        %p490 = pneg %p82
        %p491 = pneg %p79
        %p492 = scmp.lt.s32.totalorder %s35, 1
        %s493 = scalar_select %p492, %s35, 1
        %s494 = scalar_lea.vmem %s3, %s493
        %p495 = pneg %p108
        %p496 = pneg %p105
        %p497 = scmp.lt.s32.totalorder %s35, 1
        %s498 = scalar_select %p497, %s35, 1
        %s499 = scalar_lea.vmem %s4, %s498
        %p500 = pneg %p134
        %p501 = pneg %p131
        %p502 = pneg %p155
        %p503 = pneg %p152
        %p504 = pneg %p176
        %p505 = pneg %p173
        %p506 = pneg %p197
        %p507 = pneg %p194
        %p508 = pneg %p218
        %p509 = pneg %p215
        %p510 = pneg %p239
        %p511 = pneg %p236
        %p512 = pneg %p260
        %p513 = pneg %p257
        %s514 = sld [smem:[#allocation3 + %s35]]
        %p515 = scmp.lt.s32.totalorder %s514, 3
        %s516 = scalar_select %p515, %s514, 3
        %s517 = smul.addr %s516, 8
        %s518 = smul.addr %s517, 8
        %s519 = scalar_lea.vmem %s11, %s518
        %p520 = pneg %p288
        %p521 = pneg %p285
        %s522 = sld [smem:[#allocation3 + %s35]]
        %p523 = scmp.lt.s32.totalorder %s522, 3
        %s524 = scalar_select %p523, %s522, 3
        %s525 = smul.addr %s524, 12
        %s526 = smul.addr %s525, 8
        %s527 = scalar_lea.vmem %s12, %s526
        %p528 = pneg %p316
        %p529 = pneg %p313
        %p530 = pneg %p337
        %p531 = pneg %p334
        %p532 = pneg %p358
        %p533 = pneg %p355
        %p534 = pneg %p384
        %p535 = pneg %p381
        %s536 = sand.u32 %s371, 1
        %s537 = scalar_lea.sflag [#allocation5], %s536
        %s538 = sand.u32 %s371, 1
        %s539 = smul.addr %s538, 8
        %s540 = scalar_lea.vmem [#allocation4], %s539
        %p541 = scmp.lt.s32.totalorder %s35, 1
        %s542 = scalar_select %p541, %s35, 1
        %s543 = smul.addr %s542, 8
        %s544 = scalar_lea.vmem %s1, %s543
        %p545 = scmp.lt.s32.totalorder %s35, 1
        %s546 = scalar_select %p545, %s35, 1
        %s547 = smul.addr %s546, 4
        %s548 = scalar_lea.vmem %s2, %s547
        %p549 = scmp.lt.s32.totalorder %s35, 1
        %s550 = scalar_select %p549, %s35, 1
        %s551 = scalar_lea.vmem %s3, %s550
        %p552 = scmp.lt.s32.totalorder %s35, 1
        %s553 = scalar_select %p552, %s35, 1
        %s554 = scalar_lea.vmem %s4, %s553
        %s555 = sld [smem:[#allocation3 + %s35]]
        %p556 = scmp.lt.s32.totalorder %s555, 3
        %s557 = scalar_select %p556, %s555, 3
        %s558 = smul.addr %s557, 8
        %s559 = smul.addr %s558, 8
        %s560 = scalar_lea.vmem %s11, %s559
        %s561 = sld [smem:[#allocation3 + %s35]]
        %s562 = sld [smem:[#allocation3 + %s35]]
        %p563 = scmp.lt.s32.totalorder %s562, 3
        %s564 = scalar_select %p563, %s562, 3
        %s565 = smul.addr %s564, 12
        %s566 = smul.addr %s565, 8
        %s567 = scalar_lea.vmem %s12, %s566
        %s568 = sld [smem:[#allocation3 + %s35]]
        %v569 = vld [vmem:[%s544] sm:$0xff]
        %v570 = vld [vmem:[%s548] sm:$0xf]
        %v571 = vld [vmem:[%s551] sm:$0x1]
        %v572 = vld [vmem:[%s554] sm:$0x1]
        %v573 = vld [vmem:[%s5] sm:$0xff]
        %v574 = vld [vmem:[%s5 + $0x8] sm:$0xff]
        %v575 = vld [vmem:[%s6] sm:$0xff]
        %v576 = vld [vmem:[%s6 + $0x8] sm:$0xff]
        %v577 = vld [vmem:[%s6 + $0x10] sm:$0xff]
        %v578 = vxor.u32 %v572, 2147483648
        %v579 = vmul.f32 %v578, 1.442695
        %v580 = vpow.pop %v579
        %v581 = vadd.f32 %v580, 1.0
        %v582 = vrcp.pop %v581
        %v583 = vmul.f32 1.0, %v582
        %v584 = vmul.f32 %v572, %v583
        %v585 = vld [vmem:[%s7] sm:$0xff]
        %v586 = vld [vmem:[%s7 + $0x8] sm:$0xff]
        %v587 = vld [vmem:[%s7 + $0x10] sm:$0xff]
        %v588 = vld [vmem:[%s7 + $0x18] sm:$0xff]
        %v589 = vld [vmem:[%s7 + $0x20] sm:$0xff]
        %v590 = vld [vmem:[%s7 + $0x28] sm:$0xff]
        %v591 = vld [vmem:[%s7 + $0x30] sm:$0xff]
        %v592 = vld [vmem:[%s7 + $0x38] sm:$0xff]
        %vm593 = vcmask 261120
        %v595 = vsel %vm593, %v584, 0
        %597 = vmatprep.subr.mxu0 %v586
        %598 = vmatpush1.msra.mxu0 %v585
        %599 = vmatprep.subr.mxu0 %v588
        %600 = vmatpush1.msra.mxu0 %v587
        %601 = vmatprep.subr.mxu0 %v590
        %602 = vmatpush1.msra.mxu0 %v589
        %603 = vmatprep.subr.mxu0 %v592
        %604 = vmatpush1.msra.mxu0 %v591
        %605 = vmatprep.subr.mxu0 0.0
        %606 = vmatpush1.msra.mxu0 0.0
        %607 = vmatprep.subr.mxu0 0.0
        %608 = vmatpush1.msra.mxu0 0.0
        %609 = vmatprep.subr.mxu0 0.0
        %610 = vmatpush1.msra.mxu0 0.0
        %611 = vmatprep.subr.mxu0 0.0
        %612 = vmatpush1.msra.mxu0 0.0
        %613 = vmatprep.subr.mxu0 0.0
        %614 = vmatpush1.msra.mxu0 0.0
        %615 = vmatprep.subr.mxu0 0.0
        %616 = vmatpush1.msra.mxu0 0.0
        %617 = vmatprep.subr.mxu0 0.0
        %618 = vmatpush1.msra.mxu0 0.0
        %619 = vmatprep.subr.mxu0 0.0
        %620 = vmatpush1.msra.mxu0 0.0
        %621 = vmatprep.subr.mxu0 0.0
        %622 = vmatpush1.msra.mxu0 0.0
        %623 = vmatprep.subr.mxu0 0.0
        %624 = vmatpush1.msra.mxu0 0.0
        %625 = vmatprep.subr.mxu0 0.0
        %626 = vmatpush1.msra.mxu0 0.0
        %627 = vmatprep.subr.mxu0 0.0
        %628 = vmatpush1.msra.mxu0 0.0
        %629 = vmatprep.subr.mxu0 0.0
        %630 = vmatpush1.msra.mxu0 0.0
        %631 = vmatprep.subr.mxu0 0.0
        %632 = vmatpush1.msra.mxu0 0.0
        %633 = vmatprep.subr.mxu0 0.0
        %634 = vmatpush1.msra.mxu0 0.0
        %635 = vmatprep.subr.mxu0 0.0
        %636 = vmatpush1.msra.mxu0 0.0
        %637 = vmatprep.subr.mxu0 0.0
        %638 = vmatpush1.msra.mxu0 0.0
        %639 = vmatprep.subr.mxu0 0.0
        %640 = vmatpush1.msra.mxu0 0.0
        %641 = vmatprep.subr.mxu0 0.0
        %642 = vmatpush1.msra.mxu0 0.0
        %643 = vmatprep.subr.mxu0 0.0
        %644 = vmatpush1.msra.mxu0 0.0
        %645 = vmatprep.subr.mxu0 0.0
        %646 = vmatpush1.msra.mxu0 0.0
        %647 = vmatprep.subr.mxu0 0.0
        %648 = vmatpush1.msra.mxu0 0.0
        %649 = vmatprep.subr.mxu0 0.0
        %650 = vmatpush1.msra.mxu0 0.0
        %651 = vmatprep.subr.mxu0 0.0
        %652 = vmatpush1.msra.mxu0 0.0
        %653 = vmatprep.subr.mxu0 0.0
        %654 = vmatpush1.msra.mxu0 0.0
        %655 = vmatprep.subr.mxu0 0.0
        %656 = vmatpush1.msra.mxu0 0.0
        %657 = vmatprep.subr.mxu0 0.0
        %658 = vmatpush1.msra.mxu0 0.0
        %659 = vmatprep.subr.mxu0 0.0
        %660 = vmatpush1.msra.mxu0 0.0
        %661 = vmatprep.mubr.f32.mxu0 0.0
        %662 = vmatmul.mubr.f32.gmra.mrb[0].mxu0 %v595
        %v663 = vpop.f32.mrb[0].mxu0
        %v664 = vadd.f32 %v575, %v663
        %v665 = vpop.f32.mrb[0].mxu0
        %v666 = vadd.f32 %v576, %v665
        %667 = vdwg.mxu0
        %v668 = vmul.f32 %v569, %v569
        %v669 = vsel %vm593, %v668, 0.0
        %670 = vadd.xlane.f32.xlu0 %v669
        %v671 = vpop.xlane.xlu0 %670
        %v672 = vrcp.pop 32.0
        %v673 = vmul.f32 %v671, %v672
        %v674 = vadd.f32 %v673, 1e-05
        %v675 = vrsqrt.pop %v674
        %v676 = vmul.f32 %v569, %v675
        %v677 = vlaneseq
        %v678 = vshrl.u32 %v677, 7
        %v679 = vsub.s32 1, %v678
        %v680 = vrot.slane %v575, %v679
        %v681 = vmul.f32 %v676, %v680
        %v682 = vadd.f32 %v664, 1.0
        %v683 = vlaneseq
        %v684 = vshrl.u32 %v683, 7
        %v685 = vsub.s32 0, %v684
        %v686 = vrot.slane %v682, %v685
        %688 = vrot.lane.b32.xlu0 %v686, 96
        %v689 = vpop.permute.xlu0 %688
        %v691 = vmul.f32 %v681, %v689
        %v692 = vlaneseq
        %v693 = vshrl.u32 %v692, 7
        %v694 = vsub.s32 0, %v693
        %v695 = vrot.slane %v664, %v694
        %v696 = vadd.f32 %v691, %v695
        %v697 = vmul.f32 %v570, %v570
        %vm698 = vcmask 125952
        %v699 = vsel %vm698, %v697, 0.0
        %700 = vadd.xlane.f32.xlu0 %v699
        %v701 = vpop.xlane.xlu0 %700
        %v702 = vrcp.pop 16.0
        %v703 = vmul.f32 %v701, %v702
        %v704 = vadd.f32 %v703, 1e-05
        %v705 = vrsqrt.pop %v704
        %v706 = vmul.f32 %v570, %v705
        %v707 = vlaneseq
        %v708 = vshrl.u32 %v707, 7
        %v709 = vsub.s32 3, %v708
        %v710 = vrot.slane %v575, %v709
        %v711 = vmul.f32 %v706, %v710
        %v712 = vld [vmem:[%s8] sm:$0xff]
        %v713 = vld [vmem:[%s8 + $0x8] sm:$0xff]
        %v714 = vld [vmem:[%s8 + $0x10] sm:$0xff]
        %v715 = vld [vmem:[%s8 + $0x18] sm:$0xff]
        %v716 = vld [vmem:[%s8 + $0x20] sm:$0xff]
        %v717 = vld [vmem:[%s8 + $0x28] sm:$0xff]
        %v718 = vld [vmem:[%s8 + $0x30] sm:$0xff]
        %v719 = vld [vmem:[%s8 + $0x38] sm:$0xff]
        %v721 = vsel %vm593, %v696, 0
        %723 = vmatprep.subr.mxu0 %v713
        %724 = vmatpush1.msra.mxu0 %v712
        %725 = vmatprep.subr.mxu0 %v715
        %726 = vmatpush1.msra.mxu0 %v714
        %727 = vmatprep.subr.mxu0 %v717
        %728 = vmatpush1.msra.mxu0 %v716
        %729 = vmatprep.subr.mxu0 %v719
        %730 = vmatpush1.msra.mxu0 %v718
        %731 = vmatprep.subr.mxu0 0.0
        %732 = vmatpush1.msra.mxu0 0.0
        %733 = vmatprep.subr.mxu0 0.0
        %734 = vmatpush1.msra.mxu0 0.0
        %735 = vmatprep.subr.mxu0 0.0
        %736 = vmatpush1.msra.mxu0 0.0
        %737 = vmatprep.subr.mxu0 0.0
        %738 = vmatpush1.msra.mxu0 0.0
        %739 = vmatprep.subr.mxu0 0.0
        %740 = vmatpush1.msra.mxu0 0.0
        %741 = vmatprep.subr.mxu0 0.0
        %742 = vmatpush1.msra.mxu0 0.0
        %743 = vmatprep.subr.mxu0 0.0
        %744 = vmatpush1.msra.mxu0 0.0
        %745 = vmatprep.subr.mxu0 0.0
        %746 = vmatpush1.msra.mxu0 0.0
        %747 = vmatprep.subr.mxu0 0.0
        %748 = vmatpush1.msra.mxu0 0.0
        %749 = vmatprep.subr.mxu0 0.0
        %750 = vmatpush1.msra.mxu0 0.0
        %751 = vmatprep.subr.mxu0 0.0
        %752 = vmatpush1.msra.mxu0 0.0
        %753 = vmatprep.subr.mxu0 0.0
        %754 = vmatpush1.msra.mxu0 0.0
        %755 = vmatprep.subr.mxu0 0.0
        %756 = vmatpush1.msra.mxu0 0.0
        %757 = vmatprep.subr.mxu0 0.0
        %758 = vmatpush1.msra.mxu0 0.0
        %759 = vmatprep.subr.mxu0 0.0
        %760 = vmatpush1.msra.mxu0 0.0
        %761 = vmatprep.subr.mxu0 0.0
        %762 = vmatpush1.msra.mxu0 0.0
        %763 = vmatprep.subr.mxu0 0.0
        %764 = vmatpush1.msra.mxu0 0.0
        %765 = vmatprep.subr.mxu0 0.0
        %766 = vmatpush1.msra.mxu0 0.0
        %767 = vmatprep.subr.mxu0 0.0
        %768 = vmatpush1.msra.mxu0 0.0
        %769 = vmatprep.subr.mxu0 0.0
        %770 = vmatpush1.msra.mxu0 0.0
        %771 = vmatprep.subr.mxu0 0.0
        %772 = vmatpush1.msra.mxu0 0.0
        %773 = vmatprep.subr.mxu0 0.0
        %774 = vmatpush1.msra.mxu0 0.0
        %775 = vmatprep.subr.mxu0 0.0
        %776 = vmatpush1.msra.mxu0 0.0
        %777 = vmatprep.subr.mxu0 0.0
        %778 = vmatpush1.msra.mxu0 0.0
        %779 = vmatprep.subr.mxu0 0.0
        %780 = vmatpush1.msra.mxu0 0.0
        %781 = vmatprep.subr.mxu0 0.0
        %782 = vmatpush1.msra.mxu0 0.0
        %783 = vmatprep.subr.mxu0 0.0
        %784 = vmatpush1.msra.mxu0 0.0
        %785 = vmatprep.subr.mxu0 0.0
        %786 = vmatpush1.msra.mxu0 0.0
        %787 = vmatprep.mubr.f32.mxu0 0.0
        %788 = vmatmul.mubr.f32.gmra.mrb[0].mxu0 %v721
        %v789 = vpop.f32.mrb[0].mxu0
        %v790 = vadd.f32 0.0, %v789
        %v791 = vpop.f32.mrb[0].mxu0
        %v792 = vadd.f32 0.0, %v791
        %793 = vdwg.mxu0
        %v794 = vsel %vm593, %v790, 0.0
        %795 = vadd.xlane.f32.xlu0 %v794
        %v796 = vpop.xlane.xlu0 %795
        %v797 = vmul.f32 %v796, %v672
        %v798 = vsub.f32 %v790, %v797
        %v799 = vmul.f32 %v798, %v798
        %v800 = vsel %vm593, %v799, 0.0
        %801 = vadd.xlane.f32.xlu0 %v800
        %v802 = vpop.xlane.xlu0 %801
        %v803 = vmul.f32 %v802, %v672
        %v804 = vadd.f32 %v803, 1e-05
        %v805 = vrsqrt.pop %v804
        %v806 = vmul.f32 %v798, %v805
        %v807 = vlaneseq
        %v808 = vshrl.u32 %v807, 7
        %v809 = vsub.s32 4, %v808
        %v810 = vrot.slane %v575, %v809
        %v811 = vmul.f32 %v806, %v810
        %v812 = vlaneseq
        %v813 = vshrl.u32 %v812, 7
        %v814 = vsub.s32 5, %v813
        %v815 = vrot.slane %v575, %v814
        %v816 = vadd.f32 %v811, %v815
        %818 = vrot.lane.b32.xlu0 %v790, 96
        %v819 = vpop.permute.xlu0 %818
        %v821 = vsel %vm593, %v819, 0.0
        %822 = vadd.xlane.f32.xlu0 %v821
        %v823 = vpop.xlane.xlu0 %822
        %v824 = vmul.f32 %v823, %v672
        %v825 = vsub.f32 %v790, %v824
        %v826 = vmul.f32 %v825, %v825
        %828 = vrot.lane.b32.xlu0 %v826, 96
        %v829 = vpop.permute.xlu0 %828
        %v831 = vsel %vm593, %v829, 0.0
        %832 = vadd.xlane.f32.xlu0 %v831
        %v833 = vpop.xlane.xlu0 %832
        %v834 = vmul.f32 %v833, %v672
        %v835 = vadd.f32 %v834, 1e-05
        %v836 = vrsqrt.pop %v835
        %v837 = vmul.f32 %v825, %v836
        %v838 = vlaneseq
        %v839 = vshrl.u32 %v838, 7
        %v840 = vsub.s32 6, %v839
        %v841 = vrot.slane %v575, %v840
        %843 = vrot.lane.b32.xlu0 %v841, 32
        %v844 = vpop.permute.xlu0 %843
        %v846 = vmul.f32 %v837, %v844
        %v847 = vlaneseq
        %v848 = vshrl.u32 %v847, 7
        %v849 = vsub.s32 7, %v848
        %v850 = vrot.slane %v575, %v849
        %852 = vrot.lane.b32.xlu0 %v850, 32
        %v853 = vpop.permute.xlu0 %852
        %v855 = vadd.f32 %v846, %v853
        %856 = vrot.lane.b32.xlu0 %v790, 32
        %v857 = vpop.permute.xlu0 %856
        %v859 = vsel %vm593, %v857, 0.0
        %860 = vadd.xlane.f32.xlu0 %v859
        %v861 = vpop.xlane.xlu0 %860
        %v862 = vmul.f32 %v861, %v672
        %v863 = vsub.f32 %v790, %v862
        %v864 = vmul.f32 %v863, %v863
        %866 = vrot.lane.b32.xlu0 %v864, 32
        %v867 = vpop.permute.xlu0 %866
        %v869 = vsel %vm593, %v867, 0.0
        %870 = vadd.xlane.f32.xlu0 %v869
        %v871 = vpop.xlane.xlu0 %870
        %v872 = vmul.f32 %v871, %v672
        %v873 = vadd.f32 %v872, 1e-05
        %v874 = vrsqrt.pop %v873
        %v875 = vmul.f32 %v863, %v874
        %v876 = vlaneseq
        %v877 = vshrl.u32 %v876, 7
        %v878 = vsub.s32 0, %v877
        %v879 = vrot.slane %v577, %v878
        %881 = vrot.lane.b32.xlu0 %v879, 96
        %v882 = vpop.permute.xlu0 %881
        %v884 = vmul.f32 %v875, %v882
        %v885 = vlaneseq
        %v886 = vshrl.u32 %v885, 7
        %v887 = vsub.s32 1, %v886
        %v888 = vrot.slane %v577, %v887
        %890 = vrot.lane.b32.xlu0 %v888, 96
        %v891 = vpop.permute.xlu0 %890
        %v893 = vadd.f32 %v884, %v891
        %v894 = vsel %vm593, %v792, 0.0
        %895 = vadd.xlane.f32.xlu0 %v894
        %v896 = vpop.xlane.xlu0 %895
        %v897 = vmul.f32 %v896, %v672
        %v898 = vsub.f32 %v792, %v897
        %v899 = vmul.f32 %v898, %v898
        %v900 = vsel %vm593, %v899, 0.0
        %901 = vadd.xlane.f32.xlu0 %v900
        %v902 = vpop.xlane.xlu0 %901
        %v903 = vmul.f32 %v902, %v672
        %v904 = vadd.f32 %v903, 1e-05
        %v905 = vrsqrt.pop %v904
        %v906 = vmul.f32 %v898, %v905
        %v907 = vlaneseq
        %v908 = vshrl.u32 %v907, 7
        %v909 = vsub.s32 2, %v908
        %v910 = vrot.slane %v577, %v909
        %v911 = vmul.f32 %v906, %v910
        %v912 = vlaneseq
        %v913 = vshrl.u32 %v912, 7
        %v914 = vsub.s32 3, %v913
        %v915 = vrot.slane %v577, %v914
        %v916 = vadd.f32 %v911, %v915
        %v917 = vmul.f32 %v816, %v573
        %919 = vrot.lane.b32.xlu0 %v574, 96
        %v920 = vpop.permute.xlu0 %919
        %v922 = vmul.f32 %v893, %v920
        %924 = vrot.lane.b32.xlu0 %v922, 32
        %v925 = vpop.permute.xlu0 %924
        %v927 = vadd.f32 %v917, %v925
        %929 = vrot.lane.b32.xlu0 %v573, 32
        %v930 = vpop.permute.xlu0 %929
        %v932 = vmul.f32 %v855, %v930
        %v933 = vmul.f32 %v916, %v574
        %935 = vrot.lane.b32.xlu0 %v933, 32
        %v936 = vpop.permute.xlu0 %935
        %v938 = vadd.f32 %v932, %v936
        %v939 = vld [vmem:[%s9] sm:$0xff]
        %v940 = vld [vmem:[%s9 + $0x8] sm:$0xff]
        %vm941 = vcmask 130048
        %v943 = vsel %vm941, %v711, 0
        %945 = vmatprep.subr.mxu0 0.0
        %946 = vmatpush1.msra.mxu0 %v939
        %947 = vmatprep.subr.mxu0 0.0
        %948 = vmatpush1.msra.mxu0 %v940
        %949 = vmatprep.subr.mxu0 0.0
        %950 = vmatpush1.msra.mxu0 0.0
        %951 = vmatprep.subr.mxu0 0.0
        %952 = vmatpush1.msra.mxu0 0.0
        %953 = vmatprep.subr.mxu0 0.0
        %954 = vmatpush1.msra.mxu0 0.0
        %955 = vmatprep.subr.mxu0 0.0
        %956 = vmatpush1.msra.mxu0 0.0
        %957 = vmatprep.subr.mxu0 0.0
        %958 = vmatpush1.msra.mxu0 0.0
        %959 = vmatprep.subr.mxu0 0.0
        %960 = vmatpush1.msra.mxu0 0.0
        %961 = vmatprep.subr.mxu0 0.0
        %962 = vmatpush1.msra.mxu0 0.0
        %963 = vmatprep.subr.mxu0 0.0
        %964 = vmatpush1.msra.mxu0 0.0
        %965 = vmatprep.subr.mxu0 0.0
        %966 = vmatpush1.msra.mxu0 0.0
        %967 = vmatprep.subr.mxu0 0.0
        %968 = vmatpush1.msra.mxu0 0.0
        %969 = vmatprep.subr.mxu0 0.0
        %970 = vmatpush1.msra.mxu0 0.0
        %971 = vmatprep.subr.mxu0 0.0
        %972 = vmatpush1.msra.mxu0 0.0
        %973 = vmatprep.subr.mxu0 0.0
        %974 = vmatpush1.msra.mxu0 0.0
        %975 = vmatprep.subr.mxu0 0.0
        %976 = vmatpush1.msra.mxu0 0.0
        %977 = vmatprep.subr.mxu0 0.0
        %978 = vmatpush1.msra.mxu0 0.0
        %979 = vmatprep.subr.mxu0 0.0
        %980 = vmatpush1.msra.mxu0 0.0
        %981 = vmatprep.subr.mxu0 0.0
        %982 = vmatpush1.msra.mxu0 0.0
        %983 = vmatprep.subr.mxu0 0.0
        %984 = vmatpush1.msra.mxu0 0.0
        %985 = vmatprep.subr.mxu0 0.0
        %986 = vmatpush1.msra.mxu0 0.0
        %987 = vmatprep.subr.mxu0 0.0
        %988 = vmatpush1.msra.mxu0 0.0
        %989 = vmatprep.subr.mxu0 0.0
        %990 = vmatpush1.msra.mxu0 0.0
        %991 = vmatprep.subr.mxu0 0.0
        %992 = vmatpush1.msra.mxu0 0.0
        %993 = vmatprep.subr.mxu0 0.0
        %994 = vmatpush1.msra.mxu0 0.0
        %995 = vmatprep.subr.mxu0 0.0
        %996 = vmatpush1.msra.mxu0 0.0
        %997 = vmatprep.subr.mxu0 0.0
        %998 = vmatpush1.msra.mxu0 0.0
        %999 = vmatprep.subr.mxu0 0.0
        %1000 = vmatpush1.msra.mxu0 0.0
        %1001 = vmatprep.subr.mxu0 0.0
        %1002 = vmatpush1.msra.mxu0 0.0
        %1003 = vmatprep.subr.mxu0 0.0
        %1004 = vmatpush1.msra.mxu0 0.0
        %1005 = vmatprep.subr.mxu0 0.0
        %1006 = vmatpush1.msra.mxu0 0.0
        %1007 = vmatprep.subr.mxu0 0.0
        %1008 = vmatpush1.msra.mxu0 0.0
        %1009 = vmatprep.mubr.f32.mxu0 0.0
        %1010 = vmatmul.mubr.f32.gmra.mrb[0].mxu0 %v943
        %v1011 = vpop.f32.mrb[0].mxu0
        %v1012 = vadd.f32 0.0, %v1011
        %v1013 = vpop.f32.mrb[0].mxu0
        %1014 = vdwg.mxu0
        %vm1015 = vcmask 257024
        %v1016 = vsel %vm1015, %v1012, 0.0
        %1017 = vadd.xlane.f32.xlu0 %v1016
        %v1018 = vpop.xlane.xlu0 %1017
        %v1019 = vmul.f32 %v1018, %v672
        %v1020 = vsub.f32 %v1012, %v1019
        %v1021 = vmul.f32 %v1020, %v1020
        %v1022 = vsel %vm1015, %v1021, 0.0
        %1023 = vadd.xlane.f32.xlu0 %v1022
        %v1024 = vpop.xlane.xlu0 %1023
        %v1025 = vmul.f32 %v1024, %v672
        %v1026 = vadd.f32 %v1025, 1e-05
        %v1027 = vrsqrt.pop %v1026
        %v1028 = vmul.f32 %v1020, %v1027
        %v1029 = vlaneseq
        %v1030 = vshrl.u32 %v1029, 7
        %v1031 = vsub.s32 4, %v1030
        %v1032 = vrot.slane %v577, %v1031
        %v1033 = vmul.f32 %v1028, %v1032
        %v1034 = vlaneseq
        %v1035 = vshrl.u32 %v1034, 7
        %v1036 = vsub.s32 5, %v1035
        %v1037 = vrot.slane %v577, %v1036
        %v1038 = vadd.f32 %v1033, %v1037
        %v1039 = vmul.f32 %v927, 0.35355338
        %1041 = vrot.lane.b32.xlu0 %v1038, 32
        %v1042 = vpop.permute.xlu0 %1041
        %1044 = vrot.lane.b32.xlu0 %v1012, 32
        %v1045 = vpop.permute.xlu0 %1044
        %v1047 = vlaneseq
        %v1048 = vshrl.u32 %v1047, 7
        %v1049 = vsub.s32 0, %v1048
        %v1050 = vrot.slane %v571, %v1049
        %1053 = vrot.lane.b32.xlu0 %v938, 96
        %v1054 = vpop.permute.xlu0 %1053
        %1055 = vrot.lane.b32.xlu0 %v1042, 96
        %v1056 = vpop.permute.xlu0 %1055
        %vm1057 = vcmask 64512
        %v1059 = vsel %vm1057, %v1039, 0
        %v1061 = vsel %vm1057, %v1054, 0
        %v1063 = vsel %vm1057, %v1056, 0
        %1065 = vmatprep.subr.mxu0 0.0
        %1066 = vmatpush1.xpose.msra.mxu0 %v1061
        %1067 = vmatprep.subr.mxu0 0.0
        %1068 = vmatpush1.xpose.msra.mxu0 %v1063
        %1069 = vmatprep.subr.mxu0 0.0
        %1070 = vmatpush1.xpose.msra.mxu0 0.0
        %1071 = vmatprep.subr.mxu0 0.0
        %1072 = vmatpush1.xpose.msra.mxu0 0.0
        %1073 = vmatprep.subr.mxu0 0.0
        %1074 = vmatpush1.xpose.msra.mxu0 0.0
        %1075 = vmatprep.subr.mxu0 0.0
        %1076 = vmatpush1.xpose.msra.mxu0 0.0
        %1077 = vmatprep.subr.mxu0 0.0
        %1078 = vmatpush1.xpose.msra.mxu0 0.0
        %1079 = vmatprep.subr.mxu0 0.0
        %1080 = vmatpush1.xpose.msra.mxu0 0.0
        %1081 = vmatprep.subr.mxu0 0.0
        %1082 = vmatpush1.xpose.msra.mxu0 0.0
        %1083 = vmatprep.subr.mxu0 0.0
        %1084 = vmatpush1.xpose.msra.mxu0 0.0
        %1085 = vmatprep.subr.mxu0 0.0
        %1086 = vmatpush1.xpose.msra.mxu0 0.0
        %1087 = vmatprep.subr.mxu0 0.0
        %1088 = vmatpush1.xpose.msra.mxu0 0.0
        %1089 = vmatprep.subr.mxu0 0.0
        %1090 = vmatpush1.xpose.msra.mxu0 0.0
        %1091 = vmatprep.subr.mxu0 0.0
        %1092 = vmatpush1.xpose.msra.mxu0 0.0
        %1093 = vmatprep.subr.mxu0 0.0
        %1094 = vmatpush1.xpose.msra.mxu0 0.0
        %1095 = vmatprep.subr.mxu0 0.0
        %1096 = vmatpush1.xpose.msra.mxu0 0.0
        %1097 = vmatprep.subr.mxu0 0.0
        %1098 = vmatpush1.xpose.msra.mxu0 0.0
        %1099 = vmatprep.subr.mxu0 0.0
        %1100 = vmatpush1.xpose.msra.mxu0 0.0
        %1101 = vmatprep.subr.mxu0 0.0
        %1102 = vmatpush1.xpose.msra.mxu0 0.0
        %1103 = vmatprep.subr.mxu0 0.0
        %1104 = vmatpush1.xpose.msra.mxu0 0.0
        %1105 = vmatprep.subr.mxu0 0.0
        %1106 = vmatpush1.xpose.msra.mxu0 0.0
        %1107 = vmatprep.subr.mxu0 0.0
        %1108 = vmatpush1.xpose.msra.mxu0 0.0
        %1109 = vmatprep.subr.mxu0 0.0
        %1110 = vmatpush1.xpose.msra.mxu0 0.0
        %1111 = vmatprep.subr.mxu0 0.0
        %1112 = vmatpush1.xpose.msra.mxu0 0.0
        %1113 = vmatprep.subr.mxu0 0.0
        %1114 = vmatpush1.xpose.msra.mxu0 0.0
        %1115 = vmatprep.subr.mxu0 0.0
        %1116 = vmatpush1.xpose.msra.mxu0 0.0
        %1117 = vmatprep.subr.mxu0 0.0
        %1118 = vmatpush1.xpose.msra.mxu0 0.0
        %1119 = vmatprep.subr.mxu0 0.0
        %1120 = vmatpush1.xpose.msra.mxu0 0.0
        %1121 = vmatprep.subr.mxu0 0.0
        %1122 = vmatpush1.xpose.msra.mxu0 0.0
        %1123 = vmatprep.subr.mxu0 0.0
        %1124 = vmatpush1.xpose.msra.mxu0 0.0
        %1125 = vmatprep.subr.mxu0 0.0
        %1126 = vmatpush1.xpose.msra.mxu0 0.0
        %1127 = vmatprep.subr.mxu0 0.0
        %1128 = vmatpush1.xpose.msra.mxu0 0.0
        %1129 = vmatprep.mubr.f32.mxu0 0.0
        %1130 = vmatmul.mubr.f32.gmra.mrb[0].mxu0 %v1059
        %v1131 = vpop.f32.mrb[0].mxu0
        %v1132 = vadd.f32 %v1050, %v1131
        %v1133 = vpop.f32.mrb[0].mxu0
        %1134 = vdwg.mxu0
        %v1135 = vsel %vm1057, %v1132, -inf
        %1136 = vmax.xlane.f32.xlu0 %v1135
        %v1137 = vpop.xlane.xlu0 %1136
        %v1138 = vsub.f32 %v1132, %v1137
        %v1139 = vmul.f32 %v1138, 1.442695
        %v1140 = vpow.pop %v1139
        %v1141 = vsel %vm1057, %v1140, 0.0
        %1142 = vadd.xlane.f32.xlu0 %v1141
        %v1143 = vpop.xlane.xlu0 %1142
        %v1144 = vrcp.pop %v1143
        %v1145 = vmul.f32 %v1140, %v1144
        %vm1146 = vcmask 97344
        %v1147 = vsel %vm1146, %v1132, -inf
        %1148 = vmax.xlane.f32.xlu0 %v1147
        %v1149 = vpop.xlane.xlu0 %1148
        %v1150 = vsub.f32 %v1132, %v1149
        %v1151 = vmul.f32 %v1150, 1.442695
        %v1152 = vpow.pop %v1151
        %1154 = vrot.lane.b32.xlu0 %v1152, 120
        %v1155 = vpop.permute.xlu0 %1154
        %vm1157 = vcmask 31744
        %v1158 = vsel %vm1157, %v1155, 0.0
        %1159 = vadd.xlane.f32.xlu0 %v1158
        %v1160 = vpop.xlane.xlu0 %1159
        %v1161 = vrcp.pop %v1160
        %v1162 = vmul.f32 %v1152, %v1161
        %v1164 = vrot.slane %v577, 6
        %s1165 = vtos %v1164
        %v1166 = vstv %s1165
        %v1168 = vmul.f32 %v1162, %v1166
        %v1169 = vsel %vm1057, %v1145, %v1168
        %1170 = vrot.lane.b32.xlu0 %v790, 64
        %v1171 = vpop.permute.xlu0 %1170
        %1172 = vrot.lane.b32.xlu0 %v1045, 64
        %v1173 = vpop.permute.xlu0 %1172
        %vm1175 = vcmask 97280
        %v1177 = vsel %vm1175, %v1169, 0
        %vm1179 = vcmask 1043456
        %v1180 = vsel %vm1179, %v1173, 0
        %1182 = vmatprep.subr.mxu0 0.0
        %1183 = vmatpush1.msra.mxu0 %v1171
        %1184 = vmatprep.subr.mxu0 0.0
        %1185 = vmatpush1.msra.mxu0 %v1180
        %1186 = vmatprep.subr.mxu0 0.0
        %1187 = vmatpush1.msra.mxu0 0.0
        %1188 = vmatprep.subr.mxu0 0.0
        %1189 = vmatpush1.msra.mxu0 0.0
        %1190 = vmatprep.subr.mxu0 0.0
        %1191 = vmatpush1.msra.mxu0 0.0
        %1192 = vmatprep.subr.mxu0 0.0
        %1193 = vmatpush1.msra.mxu0 0.0
        %1194 = vmatprep.subr.mxu0 0.0
        %1195 = vmatpush1.msra.mxu0 0.0
        %1196 = vmatprep.subr.mxu0 0.0
        %1197 = vmatpush1.msra.mxu0 0.0
        %1198 = vmatprep.subr.mxu0 0.0
        %1199 = vmatpush1.msra.mxu0 0.0
        %1200 = vmatprep.subr.mxu0 0.0
        %1201 = vmatpush1.msra.mxu0 0.0
        %1202 = vmatprep.subr.mxu0 0.0
        %1203 = vmatpush1.msra.mxu0 0.0
        %1204 = vmatprep.subr.mxu0 0.0
        %1205 = vmatpush1.msra.mxu0 0.0
        %1206 = vmatprep.subr.mxu0 0.0
        %1207 = vmatpush1.msra.mxu0 0.0
        %1208 = vmatprep.subr.mxu0 0.0
        %1209 = vmatpush1.msra.mxu0 0.0
        %1210 = vmatprep.subr.mxu0 0.0
        %1211 = vmatpush1.msra.mxu0 0.0
        %1212 = vmatprep.subr.mxu0 0.0
        %1213 = vmatpush1.msra.mxu0 0.0
        %1214 = vmatprep.subr.mxu0 0.0
        %1215 = vmatpush1.msra.mxu0 0.0
        %1216 = vmatprep.subr.mxu0 0.0
        %1217 = vmatpush1.msra.mxu0 0.0
        %1218 = vmatprep.subr.mxu0 0.0
        %1219 = vmatpush1.msra.mxu0 0.0
        %1220 = vmatprep.subr.mxu0 0.0
        %1221 = vmatpush1.msra.mxu0 0.0
        %1222 = vmatprep.subr.mxu0 0.0
        %1223 = vmatpush1.msra.mxu0 0.0
        %1224 = vmatprep.subr.mxu0 0.0
        %1225 = vmatpush1.msra.mxu0 0.0
        %1226 = vmatprep.subr.mxu0 0.0
        %1227 = vmatpush1.msra.mxu0 0.0
        %1228 = vmatprep.subr.mxu0 0.0
        %1229 = vmatpush1.msra.mxu0 0.0
        %1230 = vmatprep.subr.mxu0 0.0
        %1231 = vmatpush1.msra.mxu0 0.0
        %1232 = vmatprep.subr.mxu0 0.0
        %1233 = vmatpush1.msra.mxu0 0.0
        %1234 = vmatprep.subr.mxu0 0.0
        %1235 = vmatpush1.msra.mxu0 0.0
        %1236 = vmatprep.subr.mxu0 0.0
        %1237 = vmatpush1.msra.mxu0 0.0
        %1238 = vmatprep.subr.mxu0 0.0
        %1239 = vmatpush1.msra.mxu0 0.0
        %1240 = vmatprep.subr.mxu0 0.0
        %1241 = vmatpush1.msra.mxu0 0.0
        %1242 = vmatprep.subr.mxu0 0.0
        %1243 = vmatpush1.msra.mxu0 0.0
        %1244 = vmatprep.subr.mxu0 0.0
        %1245 = vmatpush1.msra.mxu0 0.0
        %1246 = vmatprep.mubr.f32.mxu0 0.0
        %1247 = vmatmul.mubr.f32.gmra.mrb[0].mxu0 %v1177
        %v1248 = vpop.f32.mrb[0].mxu0
        %v1249 = vadd.f32 0.0, %v1248
        %v1250 = vpop.f32.mrb[0].mxu0
        %1251 = vdwg.mxu0
        %1252 = vrot.lane.b32.xlu0 %v1039, 120
        %v1253 = vpop.permute.xlu0 %1252
        %1254 = vrot.lane.b32.xlu0 %v938, 88
        %v1255 = vpop.permute.xlu0 %1254
        %1256 = vrot.lane.b32.xlu0 %v1042, 88
        %v1257 = vpop.permute.xlu0 %1256
        %v1258 = vsel %vm1057, %v1253, 0
        %v1260 = vsel %vm1057, %v1255, 0
        %v1262 = vsel %vm1057, %v1257, 0
        %1264 = vmatprep.subr.mxu0 0.0
        %1265 = vmatpush1.xpose.msra.mxu0 %v1260
        %1266 = vmatprep.subr.mxu0 0.0
        %1267 = vmatpush1.xpose.msra.mxu0 %v1262
        %1268 = vmatprep.subr.mxu0 0.0
        %1269 = vmatpush1.xpose.msra.mxu0 0.0
        %1270 = vmatprep.subr.mxu0 0.0
        %1271 = vmatpush1.xpose.msra.mxu0 0.0
        %1272 = vmatprep.subr.mxu0 0.0
        %1273 = vmatpush1.xpose.msra.mxu0 0.0
        %1274 = vmatprep.subr.mxu0 0.0
        %1275 = vmatpush1.xpose.msra.mxu0 0.0
        %1276 = vmatprep.subr.mxu0 0.0
        %1277 = vmatpush1.xpose.msra.mxu0 0.0
        %1278 = vmatprep.subr.mxu0 0.0
        %1279 = vmatpush1.xpose.msra.mxu0 0.0
        %1280 = vmatprep.subr.mxu0 0.0
        %1281 = vmatpush1.xpose.msra.mxu0 0.0
        %1282 = vmatprep.subr.mxu0 0.0
        %1283 = vmatpush1.xpose.msra.mxu0 0.0
        %1284 = vmatprep.subr.mxu0 0.0
        %1285 = vmatpush1.xpose.msra.mxu0 0.0
        %1286 = vmatprep.subr.mxu0 0.0
        %1287 = vmatpush1.xpose.msra.mxu0 0.0
        %1288 = vmatprep.subr.mxu0 0.0
        %1289 = vmatpush1.xpose.msra.mxu0 0.0
        %1290 = vmatprep.subr.mxu0 0.0
        %1291 = vmatpush1.xpose.msra.mxu0 0.0
        %1292 = vmatprep.subr.mxu0 0.0
        %1293 = vmatpush1.xpose.msra.mxu0 0.0
        %1294 = vmatprep.subr.mxu0 0.0
        %1295 = vmatpush1.xpose.msra.mxu0 0.0
        %1296 = vmatprep.subr.mxu0 0.0
        %1297 = vmatpush1.xpose.msra.mxu0 0.0
        %1298 = vmatprep.subr.mxu0 0.0
        %1299 = vmatpush1.xpose.msra.mxu0 0.0
        %1300 = vmatprep.subr.mxu0 0.0
        %1301 = vmatpush1.xpose.msra.mxu0 0.0
        %1302 = vmatprep.subr.mxu0 0.0
        %1303 = vmatpush1.xpose.msra.mxu0 0.0
        %1304 = vmatprep.subr.mxu0 0.0
        %1305 = vmatpush1.xpose.msra.mxu0 0.0
        %1306 = vmatprep.subr.mxu0 0.0
        %1307 = vmatpush1.xpose.msra.mxu0 0.0
        %1308 = vmatprep.subr.mxu0 0.0
        %1309 = vmatpush1.xpose.msra.mxu0 0.0
        %1310 = vmatprep.subr.mxu0 0.0
        %1311 = vmatpush1.xpose.msra.mxu0 0.0
        %1312 = vmatprep.subr.mxu0 0.0
        %1313 = vmatpush1.xpose.msra.mxu0 0.0
        %1314 = vmatprep.subr.mxu0 0.0
        %1315 = vmatpush1.xpose.msra.mxu0 0.0
        %1316 = vmatprep.subr.mxu0 0.0
        %1317 = vmatpush1.xpose.msra.mxu0 0.0
        %1318 = vmatprep.subr.mxu0 0.0
        %1319 = vmatpush1.xpose.msra.mxu0 0.0
        %1320 = vmatprep.subr.mxu0 0.0
        %1321 = vmatpush1.xpose.msra.mxu0 0.0
        %1322 = vmatprep.subr.mxu0 0.0
        %1323 = vmatpush1.xpose.msra.mxu0 0.0
        %1324 = vmatprep.subr.mxu0 0.0
        %1325 = vmatpush1.xpose.msra.mxu0 0.0
        %1326 = vmatprep.subr.mxu0 0.0
        %1327 = vmatpush1.xpose.msra.mxu0 0.0
        %1328 = vmatprep.mubr.f32.mxu0 0.0
        %1329 = vmatmul.mubr.f32.gmra.mrb[0].mxu0 %v1258
        %v1330 = vpop.f32.mrb[0].mxu0
        %v1331 = vadd.f32 %v1050, %v1330
        %v1332 = vpop.f32.mrb[0].mxu0
        %1333 = vdwg.mxu0
        %v1334 = vsel %vm1057, %v1331, -inf
        %1335 = vmax.xlane.f32.xlu0 %v1334
        %v1336 = vpop.xlane.xlu0 %1335
        %v1337 = vsub.f32 %v1331, %v1336
        %v1338 = vmul.f32 %v1337, 1.442695
        %v1339 = vpow.pop %v1338
        %v1340 = vsel %vm1057, %v1339, 0.0
        %1341 = vadd.xlane.f32.xlu0 %v1340
        %v1342 = vpop.xlane.xlu0 %1341
        %v1343 = vrcp.pop %v1342
        %v1344 = vmul.f32 %v1339, %v1343
        %v1345 = vsel %vm1146, %v1331, -inf
        %1346 = vmax.xlane.f32.xlu0 %v1345
        %v1347 = vpop.xlane.xlu0 %1346
        %v1348 = vsub.f32 %v1331, %v1347
        %v1349 = vmul.f32 %v1348, 1.442695
        %v1350 = vpow.pop %v1349
        %1352 = vrot.lane.b32.xlu0 %v1350, 120
        %v1353 = vpop.permute.xlu0 %1352
        %v1355 = vsel %vm1157, %v1353, 0.0
        %1356 = vadd.xlane.f32.xlu0 %v1355
        %v1357 = vpop.xlane.xlu0 %1356
        %v1358 = vrcp.pop %v1357
        %v1359 = vmul.f32 %v1350, %v1358
        %1360 = vrot.lane.b32.xlu0 %v1164, 127
        %v1361 = vpop.permute.xlu0 %1360
        %s1362 = vtos %v1361
        %v1363 = vstv %s1362
        %v1365 = vmul.f32 %v1359, %v1363
        %v1366 = vsel %vm1057, %v1344, %v1365
        %1367 = vrot.lane.b32.xlu0 %v790, 56
        %v1368 = vpop.permute.xlu0 %1367
        %1369 = vrot.lane.b32.xlu0 %v1045, 56
        %v1370 = vpop.permute.xlu0 %1369
        %v1373 = vsel %vm1175, %v1366, 0
        %v1375 = vsel %vm1179, %v1370, 0
        %1377 = vmatprep.subr.mxu0 0.0
        %1378 = vmatpush1.msra.mxu0 %v1368
        %1379 = vmatprep.subr.mxu0 0.0
        %1380 = vmatpush1.msra.mxu0 %v1375
        %1381 = vmatprep.subr.mxu0 0.0
        %1382 = vmatpush1.msra.mxu0 0.0
        %1383 = vmatprep.subr.mxu0 0.0
        %1384 = vmatpush1.msra.mxu0 0.0
        %1385 = vmatprep.subr.mxu0 0.0
        %1386 = vmatpush1.msra.mxu0 0.0
        %1387 = vmatprep.subr.mxu0 0.0
        %1388 = vmatpush1.msra.mxu0 0.0
        %1389 = vmatprep.subr.mxu0 0.0
        %1390 = vmatpush1.msra.mxu0 0.0
        %1391 = vmatprep.subr.mxu0 0.0
        %1392 = vmatpush1.msra.mxu0 0.0
        %1393 = vmatprep.subr.mxu0 0.0
        %1394 = vmatpush1.msra.mxu0 0.0
        %1395 = vmatprep.subr.mxu0 0.0
        %1396 = vmatpush1.msra.mxu0 0.0
        %1397 = vmatprep.subr.mxu0 0.0
        %1398 = vmatpush1.msra.mxu0 0.0
        %1399 = vmatprep.subr.mxu0 0.0
        %1400 = vmatpush1.msra.mxu0 0.0
        %1401 = vmatprep.subr.mxu0 0.0
        %1402 = vmatpush1.msra.mxu0 0.0
        %1403 = vmatprep.subr.mxu0 0.0
        %1404 = vmatpush1.msra.mxu0 0.0
        %1405 = vmatprep.subr.mxu0 0.0
        %1406 = vmatpush1.msra.mxu0 0.0
        %1407 = vmatprep.subr.mxu0 0.0
        %1408 = vmatpush1.msra.mxu0 0.0
        %1409 = vmatprep.subr.mxu0 0.0
        %1410 = vmatpush1.msra.mxu0 0.0
        %1411 = vmatprep.subr.mxu0 0.0
        %1412 = vmatpush1.msra.mxu0 0.0
        %1413 = vmatprep.subr.mxu0 0.0
        %1414 = vmatpush1.msra.mxu0 0.0
        %1415 = vmatprep.subr.mxu0 0.0
        %1416 = vmatpush1.msra.mxu0 0.0
        %1417 = vmatprep.subr.mxu0 0.0
        %1418 = vmatpush1.msra.mxu0 0.0
        %1419 = vmatprep.subr.mxu0 0.0
        %1420 = vmatpush1.msra.mxu0 0.0
        %1421 = vmatprep.subr.mxu0 0.0
        %1422 = vmatpush1.msra.mxu0 0.0
        %1423 = vmatprep.subr.mxu0 0.0
        %1424 = vmatpush1.msra.mxu0 0.0
        %1425 = vmatprep.subr.mxu0 0.0
        %1426 = vmatpush1.msra.mxu0 0.0
        %1427 = vmatprep.subr.mxu0 0.0
        %1428 = vmatpush1.msra.mxu0 0.0
        %1429 = vmatprep.subr.mxu0 0.0
        %1430 = vmatpush1.msra.mxu0 0.0
        %1431 = vmatprep.subr.mxu0 0.0
        %1432 = vmatpush1.msra.mxu0 0.0
        %1433 = vmatprep.subr.mxu0 0.0
        %1434 = vmatpush1.msra.mxu0 0.0
        %1435 = vmatprep.subr.mxu0 0.0
        %1436 = vmatpush1.msra.mxu0 0.0
        %1437 = vmatprep.subr.mxu0 0.0
        %1438 = vmatpush1.msra.mxu0 0.0
        %1439 = vmatprep.subr.mxu0 0.0
        %1440 = vmatpush1.msra.mxu0 0.0
        %1441 = vmatprep.mubr.f32.mxu0 0.0
        %1442 = vmatmul.mubr.f32.gmra.mrb[0].mxu0 %v1373
        %v1443 = vpop.f32.mrb[0].mxu0
        %v1444 = vadd.f32 0.0, %v1443
        %v1445 = vpop.f32.mrb[0].mxu0
        %1446 = vdwg.mxu0
        %1447 = vrot.lane.b32.xlu0 %v1039, 112
        %v1448 = vpop.permute.xlu0 %1447
        %1449 = vrot.lane.b32.xlu0 %v938, 80
        %v1450 = vpop.permute.xlu0 %1449
        %1451 = vrot.lane.b32.xlu0 %v1042, 80
        %v1452 = vpop.permute.xlu0 %1451
        %v1453 = vsel %vm1057, %v1448, 0
        %v1455 = vsel %vm1057, %v1450, 0
        %v1457 = vsel %vm1057, %v1452, 0
        %1459 = vmatprep.subr.mxu0 0.0
        %1460 = vmatpush1.xpose.msra.mxu0 %v1455
        %1461 = vmatprep.subr.mxu0 0.0
        %1462 = vmatpush1.xpose.msra.mxu0 %v1457
        %1463 = vmatprep.subr.mxu0 0.0
        %1464 = vmatpush1.xpose.msra.mxu0 0.0
        %1465 = vmatprep.subr.mxu0 0.0
        %1466 = vmatpush1.xpose.msra.mxu0 0.0
        %1467 = vmatprep.subr.mxu0 0.0
        %1468 = vmatpush1.xpose.msra.mxu0 0.0
        %1469 = vmatprep.subr.mxu0 0.0
        %1470 = vmatpush1.xpose.msra.mxu0 0.0
        %1471 = vmatprep.subr.mxu0 0.0
        %1472 = vmatpush1.xpose.msra.mxu0 0.0
        %1473 = vmatprep.subr.mxu0 0.0
        %1474 = vmatpush1.xpose.msra.mxu0 0.0
        %1475 = vmatprep.subr.mxu0 0.0
        %1476 = vmatpush1.xpose.msra.mxu0 0.0
        %1477 = vmatprep.subr.mxu0 0.0
        %1478 = vmatpush1.xpose.msra.mxu0 0.0
        %1479 = vmatprep.subr.mxu0 0.0
        %1480 = vmatpush1.xpose.msra.mxu0 0.0
        %1481 = vmatprep.subr.mxu0 0.0
        %1482 = vmatpush1.xpose.msra.mxu0 0.0
        %1483 = vmatprep.subr.mxu0 0.0
        %1484 = vmatpush1.xpose.msra.mxu0 0.0
        %1485 = vmatprep.subr.mxu0 0.0
        %1486 = vmatpush1.xpose.msra.mxu0 0.0
        %1487 = vmatprep.subr.mxu0 0.0
        %1488 = vmatpush1.xpose.msra.mxu0 0.0
        %1489 = vmatprep.subr.mxu0 0.0
        %1490 = vmatpush1.xpose.msra.mxu0 0.0
        %1491 = vmatprep.subr.mxu0 0.0
        %1492 = vmatpush1.xpose.msra.mxu0 0.0
        %1493 = vmatprep.subr.mxu0 0.0
        %1494 = vmatpush1.xpose.msra.mxu0 0.0
        %1495 = vmatprep.subr.mxu0 0.0
        %1496 = vmatpush1.xpose.msra.mxu0 0.0
        %1497 = vmatprep.subr.mxu0 0.0
        %1498 = vmatpush1.xpose.msra.mxu0 0.0
        %1499 = vmatprep.subr.mxu0 0.0
        %1500 = vmatpush1.xpose.msra.mxu0 0.0
        %1501 = vmatprep.subr.mxu0 0.0
        %1502 = vmatpush1.xpose.msra.mxu0 0.0
        %1503 = vmatprep.subr.mxu0 0.0
        %1504 = vmatpush1.xpose.msra.mxu0 0.0
        %1505 = vmatprep.subr.mxu0 0.0
        %1506 = vmatpush1.xpose.msra.mxu0 0.0
        %1507 = vmatprep.subr.mxu0 0.0
        %1508 = vmatpush1.xpose.msra.mxu0 0.0
        %1509 = vmatprep.subr.mxu0 0.0
        %1510 = vmatpush1.xpose.msra.mxu0 0.0
        %1511 = vmatprep.subr.mxu0 0.0
        %1512 = vmatpush1.xpose.msra.mxu0 0.0
        %1513 = vmatprep.subr.mxu0 0.0
        %1514 = vmatpush1.xpose.msra.mxu0 0.0
        %1515 = vmatprep.subr.mxu0 0.0
        %1516 = vmatpush1.xpose.msra.mxu0 0.0
        %1517 = vmatprep.subr.mxu0 0.0
        %1518 = vmatpush1.xpose.msra.mxu0 0.0
        %1519 = vmatprep.subr.mxu0 0.0
        %1520 = vmatpush1.xpose.msra.mxu0 0.0
        %1521 = vmatprep.subr.mxu0 0.0
        %1522 = vmatpush1.xpose.msra.mxu0 0.0
        %1523 = vmatprep.mubr.f32.mxu0 0.0
        %1524 = vmatmul.mubr.f32.gmra.mrb[0].mxu0 %v1453
        %v1525 = vpop.f32.mrb[0].mxu0
        %v1526 = vadd.f32 %v1050, %v1525
        %v1527 = vpop.f32.mrb[0].mxu0
        %1528 = vdwg.mxu0
        %v1529 = vsel %vm1057, %v1526, -inf
        %1530 = vmax.xlane.f32.xlu0 %v1529
        %v1531 = vpop.xlane.xlu0 %1530
        %v1532 = vsub.f32 %v1526, %v1531
        %v1533 = vmul.f32 %v1532, 1.442695
        %v1534 = vpow.pop %v1533
        %v1535 = vsel %vm1057, %v1534, 0.0
        %1536 = vadd.xlane.f32.xlu0 %v1535
        %v1537 = vpop.xlane.xlu0 %1536
        %v1538 = vrcp.pop %v1537
        %v1539 = vmul.f32 %v1534, %v1538
        %v1540 = vsel %vm1146, %v1526, -inf
        %1541 = vmax.xlane.f32.xlu0 %v1540
        %v1542 = vpop.xlane.xlu0 %1541
        %v1543 = vsub.f32 %v1526, %v1542
        %v1544 = vmul.f32 %v1543, 1.442695
        %v1545 = vpow.pop %v1544
        %1547 = vrot.lane.b32.xlu0 %v1545, 120
        %v1548 = vpop.permute.xlu0 %1547
        %v1550 = vsel %vm1157, %v1548, 0.0
        %1551 = vadd.xlane.f32.xlu0 %v1550
        %v1552 = vpop.xlane.xlu0 %1551
        %v1553 = vrcp.pop %v1552
        %v1554 = vmul.f32 %v1545, %v1553
        %1555 = vrot.lane.b32.xlu0 %v1164, 126
        %v1556 = vpop.permute.xlu0 %1555
        %s1557 = vtos %v1556
        %v1558 = vstv %s1557
        %v1560 = vmul.f32 %v1554, %v1558
        %v1561 = vsel %vm1057, %v1539, %v1560
        %1562 = vrot.lane.b32.xlu0 %v790, 48
        %v1563 = vpop.permute.xlu0 %1562
        %1564 = vrot.lane.b32.xlu0 %v1045, 48
        %v1565 = vpop.permute.xlu0 %1564
        %v1568 = vsel %vm1175, %v1561, 0
        %v1570 = vsel %vm1179, %v1565, 0
        %1572 = vmatprep.subr.mxu0 0.0
        %1573 = vmatpush1.msra.mxu0 %v1563
        %1574 = vmatprep.subr.mxu0 0.0
        %1575 = vmatpush1.msra.mxu0 %v1570
        %1576 = vmatprep.subr.mxu0 0.0
        %1577 = vmatpush1.msra.mxu0 0.0
        %1578 = vmatprep.subr.mxu0 0.0
        %1579 = vmatpush1.msra.mxu0 0.0
        %1580 = vmatprep.subr.mxu0 0.0
        %1581 = vmatpush1.msra.mxu0 0.0
        %1582 = vmatprep.subr.mxu0 0.0
        %1583 = vmatpush1.msra.mxu0 0.0
        %1584 = vmatprep.subr.mxu0 0.0
        %1585 = vmatpush1.msra.mxu0 0.0
        %1586 = vmatprep.subr.mxu0 0.0
        %1587 = vmatpush1.msra.mxu0 0.0
        %1588 = vmatprep.subr.mxu0 0.0
        %1589 = vmatpush1.msra.mxu0 0.0
        %1590 = vmatprep.subr.mxu0 0.0
        %1591 = vmatpush1.msra.mxu0 0.0
        %1592 = vmatprep.subr.mxu0 0.0
        %1593 = vmatpush1.msra.mxu0 0.0
        %1594 = vmatprep.subr.mxu0 0.0
        %1595 = vmatpush1.msra.mxu0 0.0
        %1596 = vmatprep.subr.mxu0 0.0
        %1597 = vmatpush1.msra.mxu0 0.0
        %1598 = vmatprep.subr.mxu0 0.0
        %1599 = vmatpush1.msra.mxu0 0.0
        %1600 = vmatprep.subr.mxu0 0.0
        %1601 = vmatpush1.msra.mxu0 0.0
        %1602 = vmatprep.subr.mxu0 0.0
        %1603 = vmatpush1.msra.mxu0 0.0
        %1604 = vmatprep.subr.mxu0 0.0
        %1605 = vmatpush1.msra.mxu0 0.0
        %1606 = vmatprep.subr.mxu0 0.0
        %1607 = vmatpush1.msra.mxu0 0.0
        %1608 = vmatprep.subr.mxu0 0.0
        %1609 = vmatpush1.msra.mxu0 0.0
        %1610 = vmatprep.subr.mxu0 0.0
        %1611 = vmatpush1.msra.mxu0 0.0
        %1612 = vmatprep.subr.mxu0 0.0
        %1613 = vmatpush1.msra.mxu0 0.0
        %1614 = vmatprep.subr.mxu0 0.0
        %1615 = vmatpush1.msra.mxu0 0.0
        %1616 = vmatprep.subr.mxu0 0.0
        %1617 = vmatpush1.msra.mxu0 0.0
        %1618 = vmatprep.subr.mxu0 0.0
        %1619 = vmatpush1.msra.mxu0 0.0
        %1620 = vmatprep.subr.mxu0 0.0
        %1621 = vmatpush1.msra.mxu0 0.0
        %1622 = vmatprep.subr.mxu0 0.0
        %1623 = vmatpush1.msra.mxu0 0.0
        %1624 = vmatprep.subr.mxu0 0.0
        %1625 = vmatpush1.msra.mxu0 0.0
        %1626 = vmatprep.subr.mxu0 0.0
        %1627 = vmatpush1.msra.mxu0 0.0
        %1628 = vmatprep.subr.mxu0 0.0
        %1629 = vmatpush1.msra.mxu0 0.0
        %1630 = vmatprep.subr.mxu0 0.0
        %1631 = vmatpush1.msra.mxu0 0.0
        %1632 = vmatprep.subr.mxu0 0.0
        %1633 = vmatpush1.msra.mxu0 0.0
        %1634 = vmatprep.subr.mxu0 0.0
        %1635 = vmatpush1.msra.mxu0 0.0
        %1636 = vmatprep.mubr.f32.mxu0 0.0
        %1637 = vmatmul.mubr.f32.gmra.mrb[0].mxu0 %v1568
        %v1638 = vpop.f32.mrb[0].mxu0
        %v1639 = vadd.f32 0.0, %v1638
        %v1640 = vpop.f32.mrb[0].mxu0
        %1641 = vdwg.mxu0
        %1642 = vrot.lane.b32.xlu0 %v1039, 104
        %v1643 = vpop.permute.xlu0 %1642
        %1644 = vrot.lane.b32.xlu0 %v938, 72
        %v1645 = vpop.permute.xlu0 %1644
        %1646 = vrot.lane.b32.xlu0 %v1042, 72
        %v1647 = vpop.permute.xlu0 %1646
        %v1648 = vsel %vm1057, %v1643, 0
        %v1650 = vsel %vm1057, %v1645, 0
        %v1652 = vsel %vm1057, %v1647, 0
        %1654 = vmatprep.subr.mxu0 0.0
        %1655 = vmatpush1.xpose.msra.mxu0 %v1650
        %1656 = vmatprep.subr.mxu0 0.0
        %1657 = vmatpush1.xpose.msra.mxu0 %v1652
        %1658 = vmatprep.subr.mxu0 0.0
        %1659 = vmatpush1.xpose.msra.mxu0 0.0
        %1660 = vmatprep.subr.mxu0 0.0
        %1661 = vmatpush1.xpose.msra.mxu0 0.0
        %1662 = vmatprep.subr.mxu0 0.0
        %1663 = vmatpush1.xpose.msra.mxu0 0.0
        %1664 = vmatprep.subr.mxu0 0.0
        %1665 = vmatpush1.xpose.msra.mxu0 0.0
        %1666 = vmatprep.subr.mxu0 0.0
        %1667 = vmatpush1.xpose.msra.mxu0 0.0
        %1668 = vmatprep.subr.mxu0 0.0
        %1669 = vmatpush1.xpose.msra.mxu0 0.0
        %1670 = vmatprep.subr.mxu0 0.0
        %1671 = vmatpush1.xpose.msra.mxu0 0.0
        %1672 = vmatprep.subr.mxu0 0.0
        %1673 = vmatpush1.xpose.msra.mxu0 0.0
        %1674 = vmatprep.subr.mxu0 0.0
        %1675 = vmatpush1.xpose.msra.mxu0 0.0
        %1676 = vmatprep.subr.mxu0 0.0
        %1677 = vmatpush1.xpose.msra.mxu0 0.0
        %1678 = vmatprep.subr.mxu0 0.0
        %1679 = vmatpush1.xpose.msra.mxu0 0.0
        %1680 = vmatprep.subr.mxu0 0.0
        %1681 = vmatpush1.xpose.msra.mxu0 0.0
        %1682 = vmatprep.subr.mxu0 0.0
        %1683 = vmatpush1.xpose.msra.mxu0 0.0
        %1684 = vmatprep.subr.mxu0 0.0
        %1685 = vmatpush1.xpose.msra.mxu0 0.0
        %1686 = vmatprep.subr.mxu0 0.0
        %1687 = vmatpush1.xpose.msra.mxu0 0.0
        %1688 = vmatprep.subr.mxu0 0.0
        %1689 = vmatpush1.xpose.msra.mxu0 0.0
        %1690 = vmatprep.subr.mxu0 0.0
        %1691 = vmatpush1.xpose.msra.mxu0 0.0
        %1692 = vmatprep.subr.mxu0 0.0
        %1693 = vmatpush1.xpose.msra.mxu0 0.0
        %1694 = vmatprep.subr.mxu0 0.0
        %1695 = vmatpush1.xpose.msra.mxu0 0.0
        %1696 = vmatprep.subr.mxu0 0.0
        %1697 = vmatpush1.xpose.msra.mxu0 0.0
        %1698 = vmatprep.subr.mxu0 0.0
        %1699 = vmatpush1.xpose.msra.mxu0 0.0
        %1700 = vmatprep.subr.mxu0 0.0
        %1701 = vmatpush1.xpose.msra.mxu0 0.0
        %1702 = vmatprep.subr.mxu0 0.0
        %1703 = vmatpush1.xpose.msra.mxu0 0.0
        %1704 = vmatprep.subr.mxu0 0.0
        %1705 = vmatpush1.xpose.msra.mxu0 0.0
        %1706 = vmatprep.subr.mxu0 0.0
        %1707 = vmatpush1.xpose.msra.mxu0 0.0
        %1708 = vmatprep.subr.mxu0 0.0
        %1709 = vmatpush1.xpose.msra.mxu0 0.0
        %1710 = vmatprep.subr.mxu0 0.0
        %1711 = vmatpush1.xpose.msra.mxu0 0.0
        %1712 = vmatprep.subr.mxu0 0.0
        %1713 = vmatpush1.xpose.msra.mxu0 0.0
        %1714 = vmatprep.subr.mxu0 0.0
        %1715 = vmatpush1.xpose.msra.mxu0 0.0
        %1716 = vmatprep.subr.mxu0 0.0
        %1717 = vmatpush1.xpose.msra.mxu0 0.0
        %1718 = vmatprep.mubr.f32.mxu0 0.0
        %1719 = vmatmul.mubr.f32.gmra.mrb[0].mxu0 %v1648
        %v1720 = vpop.f32.mrb[0].mxu0
        %v1721 = vadd.f32 %v1050, %v1720
        %v1722 = vpop.f32.mrb[0].mxu0
        %1723 = vdwg.mxu0
        %v1724 = vsel %vm1057, %v1721, -inf
        %1725 = vmax.xlane.f32.xlu0 %v1724
        %v1726 = vpop.xlane.xlu0 %1725
        %v1727 = vsub.f32 %v1721, %v1726
        %v1728 = vmul.f32 %v1727, 1.442695
        %v1729 = vpow.pop %v1728
        %v1730 = vsel %vm1057, %v1729, 0.0
        %1731 = vadd.xlane.f32.xlu0 %v1730
        %v1732 = vpop.xlane.xlu0 %1731
        %v1733 = vrcp.pop %v1732
        %v1734 = vmul.f32 %v1729, %v1733
        %v1735 = vsel %vm1146, %v1721, -inf
        %1736 = vmax.xlane.f32.xlu0 %v1735
        %v1737 = vpop.xlane.xlu0 %1736
        %v1738 = vsub.f32 %v1721, %v1737
        %v1739 = vmul.f32 %v1738, 1.442695
        %v1740 = vpow.pop %v1739
        %1742 = vrot.lane.b32.xlu0 %v1740, 120
        %v1743 = vpop.permute.xlu0 %1742
        %v1745 = vsel %vm1157, %v1743, 0.0
        %1746 = vadd.xlane.f32.xlu0 %v1745
        %v1747 = vpop.xlane.xlu0 %1746
        %v1748 = vrcp.pop %v1747
        %v1749 = vmul.f32 %v1740, %v1748
        %1750 = vrot.lane.b32.xlu0 %v1164, 125
        %v1751 = vpop.permute.xlu0 %1750
        %s1752 = vtos %v1751
        %v1753 = vstv %s1752
        %v1755 = vmul.f32 %v1749, %v1753
        %v1756 = vsel %vm1057, %v1734, %v1755
        %1757 = vrot.lane.b32.xlu0 %v790, 40
        %v1758 = vpop.permute.xlu0 %1757
        %1759 = vrot.lane.b32.xlu0 %v1045, 40
        %v1760 = vpop.permute.xlu0 %1759
        %v1763 = vsel %vm1175, %v1756, 0
        %v1765 = vsel %vm1179, %v1760, 0
        %1767 = vmatprep.subr.mxu0 0.0
        %1768 = vmatpush1.msra.mxu0 %v1758
        %1769 = vmatprep.subr.mxu0 0.0
        %1770 = vmatpush1.msra.mxu0 %v1765
        %1771 = vmatprep.subr.mxu0 0.0
        %1772 = vmatpush1.msra.mxu0 0.0
        %1773 = vmatprep.subr.mxu0 0.0
        %1774 = vmatpush1.msra.mxu0 0.0
        %1775 = vmatprep.subr.mxu0 0.0
        %1776 = vmatpush1.msra.mxu0 0.0
        %1777 = vmatprep.subr.mxu0 0.0
        %1778 = vmatpush1.msra.mxu0 0.0
        %1779 = vmatprep.subr.mxu0 0.0
        %1780 = vmatpush1.msra.mxu0 0.0
        %1781 = vmatprep.subr.mxu0 0.0
        %1782 = vmatpush1.msra.mxu0 0.0
        %1783 = vmatprep.subr.mxu0 0.0
        %1784 = vmatpush1.msra.mxu0 0.0
        %1785 = vmatprep.subr.mxu0 0.0
        %1786 = vmatpush1.msra.mxu0 0.0
        %1787 = vmatprep.subr.mxu0 0.0
        %1788 = vmatpush1.msra.mxu0 0.0
        %1789 = vmatprep.subr.mxu0 0.0
        %1790 = vmatpush1.msra.mxu0 0.0
        %1791 = vmatprep.subr.mxu0 0.0
        %1792 = vmatpush1.msra.mxu0 0.0
        %1793 = vmatprep.subr.mxu0 0.0
        %1794 = vmatpush1.msra.mxu0 0.0
        %1795 = vmatprep.subr.mxu0 0.0
        %1796 = vmatpush1.msra.mxu0 0.0
        %1797 = vmatprep.subr.mxu0 0.0
        %1798 = vmatpush1.msra.mxu0 0.0
        %1799 = vmatprep.subr.mxu0 0.0
        %1800 = vmatpush1.msra.mxu0 0.0
        %1801 = vmatprep.subr.mxu0 0.0
        %1802 = vmatpush1.msra.mxu0 0.0
        %1803 = vmatprep.subr.mxu0 0.0
        %1804 = vmatpush1.msra.mxu0 0.0
        %1805 = vmatprep.subr.mxu0 0.0
        %1806 = vmatpush1.msra.mxu0 0.0
        %1807 = vmatprep.subr.mxu0 0.0
        %1808 = vmatpush1.msra.mxu0 0.0
        %1809 = vmatprep.subr.mxu0 0.0
        %1810 = vmatpush1.msra.mxu0 0.0
        %1811 = vmatprep.subr.mxu0 0.0
        %1812 = vmatpush1.msra.mxu0 0.0
        %1813 = vmatprep.subr.mxu0 0.0
        %1814 = vmatpush1.msra.mxu0 0.0
        %1815 = vmatprep.subr.mxu0 0.0
        %1816 = vmatpush1.msra.mxu0 0.0
        %1817 = vmatprep.subr.mxu0 0.0
        %1818 = vmatpush1.msra.mxu0 0.0
        %1819 = vmatprep.subr.mxu0 0.0
        %1820 = vmatpush1.msra.mxu0 0.0
        %1821 = vmatprep.subr.mxu0 0.0
        %1822 = vmatpush1.msra.mxu0 0.0
        %1823 = vmatprep.subr.mxu0 0.0
        %1824 = vmatpush1.msra.mxu0 0.0
        %1825 = vmatprep.subr.mxu0 0.0
        %1826 = vmatpush1.msra.mxu0 0.0
        %1827 = vmatprep.subr.mxu0 0.0
        %1828 = vmatpush1.msra.mxu0 0.0
        %1829 = vmatprep.subr.mxu0 0.0
        %1830 = vmatpush1.msra.mxu0 0.0
        %1831 = vmatprep.mubr.f32.mxu0 0.0
        %1832 = vmatmul.mubr.f32.gmra.mrb[0].mxu0 %v1763
        %v1833 = vpop.f32.mrb[0].mxu0
        %v1834 = vadd.f32 0.0, %v1833
        %v1835 = vpop.f32.mrb[0].mxu0
        %1836 = vdwg.mxu0
        %1838 = vrot.lane.b32.xlu0 %v1444, 8
        %v1839 = vpop.permute.xlu0 %1838
        %1842 = vrot.lane.b32.xlu0 %v1639, 16
        %v1843 = vpop.permute.xlu0 %1842
        %1846 = vrot.lane.b32.xlu0 %v1834, 24
        %v1847 = vpop.permute.xlu0 %1846
        %v1849 = vsel %vm1057, %v1249, %v1839
        %v1850 = vsel %vm941, %v1849, %v1843
        %vm1851 = vcmask 195584
        %v1852 = vsel %vm1851, %v1850, %v1847
        %v1853 = vld [vmem:[%s10] sm:$0xff]
        %v1854 = vld [vmem:[%s10 + $0x8] sm:$0xff]
        %v1855 = vld [vmem:[%s10 + $0x10] sm:$0xff]
        %v1856 = vld [vmem:[%s10 + $0x18] sm:$0xff]
        %v1858 = vsel %vm593, %v1852, 0
        %1860 = vmatprep.subr.mxu0 0.0
        %1861 = vmatpush1.msra.mxu0 %v1853
        %1862 = vmatprep.subr.mxu0 0.0
        %1863 = vmatpush1.msra.mxu0 %v1854
        %1864 = vmatprep.subr.mxu0 0.0
        %1865 = vmatpush1.msra.mxu0 %v1855
        %1866 = vmatprep.subr.mxu0 0.0
        %1867 = vmatpush1.msra.mxu0 %v1856
        %1868 = vmatprep.subr.mxu0 0.0
        %1869 = vmatpush1.msra.mxu0 0.0
        %1870 = vmatprep.subr.mxu0 0.0
        %1871 = vmatpush1.msra.mxu0 0.0
        %1872 = vmatprep.subr.mxu0 0.0
        %1873 = vmatpush1.msra.mxu0 0.0
        %1874 = vmatprep.subr.mxu0 0.0
        %1875 = vmatpush1.msra.mxu0 0.0
        %1876 = vmatprep.subr.mxu0 0.0
        %1877 = vmatpush1.msra.mxu0 0.0
        %1878 = vmatprep.subr.mxu0 0.0
        %1879 = vmatpush1.msra.mxu0 0.0
        %1880 = vmatprep.subr.mxu0 0.0
        %1881 = vmatpush1.msra.mxu0 0.0
        %1882 = vmatprep.subr.mxu0 0.0
        %1883 = vmatpush1.msra.mxu0 0.0
        %1884 = vmatprep.subr.mxu0 0.0
        %1885 = vmatpush1.msra.mxu0 0.0
        %1886 = vmatprep.subr.mxu0 0.0
        %1887 = vmatpush1.msra.mxu0 0.0
        %1888 = vmatprep.subr.mxu0 0.0
        %1889 = vmatpush1.msra.mxu0 0.0
        %1890 = vmatprep.subr.mxu0 0.0
        %1891 = vmatpush1.msra.mxu0 0.0
        %1892 = vmatprep.subr.mxu0 0.0
        %1893 = vmatpush1.msra.mxu0 0.0
        %1894 = vmatprep.subr.mxu0 0.0
        %1895 = vmatpush1.msra.mxu0 0.0
        %1896 = vmatprep.subr.mxu0 0.0
        %1897 = vmatpush1.msra.mxu0 0.0
        %1898 = vmatprep.subr.mxu0 0.0
        %1899 = vmatpush1.msra.mxu0 0.0
        %1900 = vmatprep.subr.mxu0 0.0
        %1901 = vmatpush1.msra.mxu0 0.0
        %1902 = vmatprep.subr.mxu0 0.0
        %1903 = vmatpush1.msra.mxu0 0.0
        %1904 = vmatprep.subr.mxu0 0.0
        %1905 = vmatpush1.msra.mxu0 0.0
        %1906 = vmatprep.subr.mxu0 0.0
        %1907 = vmatpush1.msra.mxu0 0.0
        %1908 = vmatprep.subr.mxu0 0.0
        %1909 = vmatpush1.msra.mxu0 0.0
        %1910 = vmatprep.subr.mxu0 0.0
        %1911 = vmatpush1.msra.mxu0 0.0
        %1912 = vmatprep.subr.mxu0 0.0
        %1913 = vmatpush1.msra.mxu0 0.0
        %1914 = vmatprep.subr.mxu0 0.0
        %1915 = vmatpush1.msra.mxu0 0.0
        %1916 = vmatprep.subr.mxu0 0.0
        %1917 = vmatpush1.msra.mxu0 0.0
        %1918 = vmatprep.subr.mxu0 0.0
        %1919 = vmatpush1.msra.mxu0 0.0
        %1920 = vmatprep.subr.mxu0 0.0
        %1921 = vmatpush1.msra.mxu0 0.0
        %1922 = vmatprep.subr.mxu0 0.0
        %1923 = vmatpush1.msra.mxu0 0.0
        %1924 = vmatprep.mubr.f32.mxu0 0.0
        %1925 = vmatmul.mubr.f32.gmra.mrb[0].mxu0 %v1858
        %v1926 = vpop.f32.mrb[0].mxu0
        %v1927 = vadd.f32 0.0, %v1926
        %v1928 = vpop.f32.mrb[0].mxu0
        %1929 = vdwg.mxu0
        %1931 = vrot.lane.b32.xlu0 %v1927, 64
        %v1932 = vpop.permute.xlu0 %1931
        %v1934 = vmul.f32 %v695, %v1932
        %1936 = vrot.lane.b32.xlu0 %v1934, 64
        %v1937 = vpop.permute.xlu0 %1936
        %v1939 = vadd.f32 %v569, %v1937
        %v1940 = vmul.f32 %v1939, %v1939
        %v1941 = vsel %vm593, %v1940, 0.0
        %1942 = vadd.xlane.f32.xlu0 %v1941
        %v1943 = vpop.xlane.xlu0 %1942
        %v1944 = vmul.f32 %v1943, %v672
        %v1945 = vadd.f32 %v1944, 1e-05
        %v1946 = vrsqrt.pop %v1945
        %v1947 = vmul.f32 %v1939, %v1946
        %v1948 = vlaneseq
        %v1949 = vshrl.u32 %v1948, 7
        %v1950 = vsub.s32 2, %v1949
        %v1951 = vrot.slane %v575, %v1950
        %v1952 = vmul.f32 %v1947, %v1951
        %v1953 = vadd.f32 %v666, 1.0
        %v1954 = vlaneseq
        %v1955 = vshrl.u32 %v1954, 7
        %v1956 = vsub.s32 0, %v1955
        %v1957 = vrot.slane %v1953, %v1956
        %v1958 = vmul.f32 %v1952, %v1957
        %1960 = vrot.lane.b32.xlu0 %v695, 32
        %v1961 = vpop.permute.xlu0 %1960
        %v1963 = vadd.f32 %v1958, %v1961
        %v1964 = vld [vmem:[%s560] sm:$0xff]
        %v1965 = vld [vmem:[%s560 + $0x8] sm:$0xff]
        %v1966 = vld [vmem:[%s560 + $0x10] sm:$0xff]
        %v1967 = vld [vmem:[%s560 + $0x18] sm:$0xff]
        %v1968 = vld [vmem:[%s560 + $0x20] sm:$0xff]
        %v1969 = vld [vmem:[%s560 + $0x28] sm:$0xff]
        %v1970 = vld [vmem:[%s560 + $0x30] sm:$0xff]
        %v1971 = vld [vmem:[%s560 + $0x38] sm:$0xff]
        %v1973 = vsel %vm593, %v1963, 0
        %1975 = vmatprep.subr.mxu0 %v1965
        %1976 = vmatpush1.msra.mxu0 %v1964
        %1977 = vmatprep.subr.mxu0 %v1967
        %1978 = vmatpush1.msra.mxu0 %v1966
        %1979 = vmatprep.subr.mxu0 %v1969
        %1980 = vmatpush1.msra.mxu0 %v1968
        %1981 = vmatprep.subr.mxu0 %v1971
        %1982 = vmatpush1.msra.mxu0 %v1970
        %1983 = vmatprep.subr.mxu0 0.0
        %1984 = vmatpush1.msra.mxu0 0.0
        %1985 = vmatprep.subr.mxu0 0.0
        %1986 = vmatpush1.msra.mxu0 0.0
        %1987 = vmatprep.subr.mxu0 0.0
        %1988 = vmatpush1.msra.mxu0 0.0
        %1989 = vmatprep.subr.mxu0 0.0
        %1990 = vmatpush1.msra.mxu0 0.0
        %1991 = vmatprep.subr.mxu0 0.0
        %1992 = vmatpush1.msra.mxu0 0.0
        %1993 = vmatprep.subr.mxu0 0.0
        %1994 = vmatpush1.msra.mxu0 0.0
        %1995 = vmatprep.subr.mxu0 0.0
        %1996 = vmatpush1.msra.mxu0 0.0
        %1997 = vmatprep.subr.mxu0 0.0
        %1998 = vmatpush1.msra.mxu0 0.0
        %1999 = vmatprep.subr.mxu0 0.0
        %2000 = vmatpush1.msra.mxu0 0.0
        %2001 = vmatprep.subr.mxu0 0.0
        %2002 = vmatpush1.msra.mxu0 0.0
        %2003 = vmatprep.subr.mxu0 0.0
        %2004 = vmatpush1.msra.mxu0 0.0
        %2005 = vmatprep.subr.mxu0 0.0
        %2006 = vmatpush1.msra.mxu0 0.0
        %2007 = vmatprep.subr.mxu0 0.0
        %2008 = vmatpush1.msra.mxu0 0.0
        %2009 = vmatprep.subr.mxu0 0.0
        %2010 = vmatpush1.msra.mxu0 0.0
        %2011 = vmatprep.subr.mxu0 0.0
        %2012 = vmatpush1.msra.mxu0 0.0
        %2013 = vmatprep.subr.mxu0 0.0
        %2014 = vmatpush1.msra.mxu0 0.0
        %2015 = vmatprep.subr.mxu0 0.0
        %2016 = vmatpush1.msra.mxu0 0.0
        %2017 = vmatprep.subr.mxu0 0.0
        %2018 = vmatpush1.msra.mxu0 0.0
        %2019 = vmatprep.subr.mxu0 0.0
        %2020 = vmatpush1.msra.mxu0 0.0
        %2021 = vmatprep.subr.mxu0 0.0
        %2022 = vmatpush1.msra.mxu0 0.0
        %2023 = vmatprep.subr.mxu0 0.0
        %2024 = vmatpush1.msra.mxu0 0.0
        %2025 = vmatprep.subr.mxu0 0.0
        %2026 = vmatpush1.msra.mxu0 0.0
        %2027 = vmatprep.subr.mxu0 0.0
        %2028 = vmatpush1.msra.mxu0 0.0
        %2029 = vmatprep.subr.mxu0 0.0
        %2030 = vmatpush1.msra.mxu0 0.0
        %2031 = vmatprep.subr.mxu0 0.0
        %2032 = vmatpush1.msra.mxu0 0.0
        %2033 = vmatprep.subr.mxu0 0.0
        %2034 = vmatpush1.msra.mxu0 0.0
        %2035 = vmatprep.subr.mxu0 0.0
        %2036 = vmatpush1.msra.mxu0 0.0
        %2037 = vmatprep.subr.mxu0 0.0
        %2038 = vmatpush1.msra.mxu0 0.0
        %2039 = vmatprep.mubr.f32.mxu0 0.0
        %2040 = vmatmul.mubr.f32.gmra.mrb[0].mxu0 %v1973
        %v2041 = vpop.f32.mrb[0].mxu0
        %v2042 = vadd.f32 0.0, %v2041
        %v2043 = vpop.f32.mrb[0].mxu0
        %v2044 = vadd.f32 0.0, %v2043
        %2045 = vdwg.mxu0
        %v2046 = vxor.u32 %v2042, 2147483648
        %v2047 = vmul.f32 %v2046, 1.442695
        %v2048 = vpow.pop %v2047
        %v2049 = vadd.f32 %v2048, 1.0
        %v2050 = vrcp.pop %v2049
        %v2051 = vmul.f32 1.0, %v2050
        %v2052 = vmul.f32 %v2042, %v2051
        %v2053 = vmul.f32 %v2052, %v2044
        %v2054 = vld [vmem:[%s567] sm:$0xff]
        %v2055 = vld [vmem:[%s567 + $0x8] sm:$0xff]
        %v2056 = vld [vmem:[%s567 + $0x10] sm:$0xff]
        %v2057 = vld [vmem:[%s567 + $0x18] sm:$0xff]
        %v2058 = vld [vmem:[%s567 + $0x20] sm:$0xff]
        %v2059 = vld [vmem:[%s567 + $0x28] sm:$0xff]
        %v2060 = vld [vmem:[%s567 + $0x30] sm:$0xff]
        %v2061 = vld [vmem:[%s567 + $0x38] sm:$0xff]
        %v2062 = vld [vmem:[%s567 + $0x40] sm:$0xff]
        %v2063 = vld [vmem:[%s567 + $0x48] sm:$0xff]
        %v2064 = vld [vmem:[%s567 + $0x50] sm:$0xff]
        %v2065 = vld [vmem:[%s567 + $0x58] sm:$0xff]
        %vm2066 = vcmask 785408
        %v2068 = vsel %vm2066, %v2053, 0
        %2070 = vmatprep.subr.mxu0 0.0
        %2071 = vmatpush1.msra.mxu0 %v2054
        %2072 = vmatprep.subr.mxu0 0.0
        %2073 = vmatpush1.msra.mxu0 %v2055
        %2074 = vmatprep.subr.mxu0 0.0
        %2075 = vmatpush1.msra.mxu0 %v2056
        %2076 = vmatprep.subr.mxu0 0.0
        %2077 = vmatpush1.msra.mxu0 %v2057
        %2078 = vmatprep.subr.mxu0 0.0
        %2079 = vmatpush1.msra.mxu0 %v2058
        %2080 = vmatprep.subr.mxu0 0.0
        %2081 = vmatpush1.msra.mxu0 %v2059
        %2082 = vmatprep.subr.mxu0 0.0
        %2083 = vmatpush1.msra.mxu0 %v2060
        %2084 = vmatprep.subr.mxu0 0.0
        %2085 = vmatpush1.msra.mxu0 %v2061
        %2086 = vmatprep.subr.mxu0 0.0
        %2087 = vmatpush1.msra.mxu0 %v2062
        %2088 = vmatprep.subr.mxu0 0.0
        %2089 = vmatpush1.msra.mxu0 %v2063
        %2090 = vmatprep.subr.mxu0 0.0
        %2091 = vmatpush1.msra.mxu0 %v2064
        %2092 = vmatprep.subr.mxu0 0.0
        %2093 = vmatpush1.msra.mxu0 %v2065
        %2094 = vmatprep.subr.mxu0 0.0
        %2095 = vmatpush1.msra.mxu0 0.0
        %2096 = vmatprep.subr.mxu0 0.0
        %2097 = vmatpush1.msra.mxu0 0.0
        %2098 = vmatprep.subr.mxu0 0.0
        %2099 = vmatpush1.msra.mxu0 0.0
        %2100 = vmatprep.subr.mxu0 0.0
        %2101 = vmatpush1.msra.mxu0 0.0
        %2102 = vmatprep.subr.mxu0 0.0
        %2103 = vmatpush1.msra.mxu0 0.0
        %2104 = vmatprep.subr.mxu0 0.0
        %2105 = vmatpush1.msra.mxu0 0.0
        %2106 = vmatprep.subr.mxu0 0.0
        %2107 = vmatpush1.msra.mxu0 0.0
        %2108 = vmatprep.subr.mxu0 0.0
        %2109 = vmatpush1.msra.mxu0 0.0
        %2110 = vmatprep.subr.mxu0 0.0
        %2111 = vmatpush1.msra.mxu0 0.0
        %2112 = vmatprep.subr.mxu0 0.0
        %2113 = vmatpush1.msra.mxu0 0.0
        %2114 = vmatprep.subr.mxu0 0.0
        %2115 = vmatpush1.msra.mxu0 0.0
        %2116 = vmatprep.subr.mxu0 0.0
        %2117 = vmatpush1.msra.mxu0 0.0
        %2118 = vmatprep.subr.mxu0 0.0
        %2119 = vmatpush1.msra.mxu0 0.0
        %2120 = vmatprep.subr.mxu0 0.0
        %2121 = vmatpush1.msra.mxu0 0.0
        %2122 = vmatprep.subr.mxu0 0.0
        %2123 = vmatpush1.msra.mxu0 0.0
        %2124 = vmatprep.subr.mxu0 0.0
        %2125 = vmatpush1.msra.mxu0 0.0
        %2126 = vmatprep.subr.mxu0 0.0
        %2127 = vmatpush1.msra.mxu0 0.0
        %2128 = vmatprep.subr.mxu0 0.0
        %2129 = vmatpush1.msra.mxu0 0.0
        %2130 = vmatprep.subr.mxu0 0.0
        %2131 = vmatpush1.msra.mxu0 0.0
        %2132 = vmatprep.subr.mxu0 0.0
        %2133 = vmatpush1.msra.mxu0 0.0
        %2134 = vmatprep.mubr.f32.mxu0 0.0
        %2135 = vmatmul.mubr.f32.gmra.mrb[0].mxu0 %v2068
        %v2136 = vpop.f32.mrb[0].mxu0
        %v2137 = vadd.f32 0.0, %v2136
        %v2138 = vpop.f32.mrb[0].mxu0
        %2139 = vdwg.mxu0
        %v2140 = vld [vmem:[%s13] sm:$0xff]
        %v2141 = vld [vmem:[%s13 + $0x8] sm:$0xff]
        %v2142 = vld [vmem:[%s13 + $0x10] sm:$0xff]
        %v2143 = vld [vmem:[%s13 + $0x18] sm:$0xff]
        %v2144 = vld [vmem:[%s13 + $0x20] sm:$0xff]
        %v2145 = vld [vmem:[%s13 + $0x28] sm:$0xff]
        %v2146 = vld [vmem:[%s13 + $0x30] sm:$0xff]
        %v2147 = vld [vmem:[%s13 + $0x38] sm:$0xff]
        %v2148 = vld [vmem:[%s13 + $0x40] sm:$0xff]
        %v2149 = vld [vmem:[%s13 + $0x48] sm:$0xff]
        %v2150 = vld [vmem:[%s13 + $0x50] sm:$0xff]
        %v2151 = vld [vmem:[%s13 + $0x58] sm:$0xff]
        %v2152 = vld [vmem:[%s13 + $0x60] sm:$0xff]
        %v2153 = vld [vmem:[%s13 + $0x68] sm:$0xff]
        %v2154 = vld [vmem:[%s13 + $0x70] sm:$0xff]
        %v2155 = vld [vmem:[%s13 + $0x78] sm:$0xff]
        %v2156 = vld [vmem:[%s13 + $0x80] sm:$0xff]
        %v2157 = vld [vmem:[%s13 + $0x88] sm:$0xff]
        %v2158 = vld [vmem:[%s13 + $0x90] sm:$0xff]
        %v2159 = vld [vmem:[%s13 + $0x98] sm:$0xff]
        %v2160 = vld [vmem:[%s13 + $0xa0] sm:$0xff]
        %v2161 = vld [vmem:[%s13 + $0xa8] sm:$0xff]
        %v2162 = vld [vmem:[%s13 + $0xb0] sm:$0xff]
        %v2163 = vld [vmem:[%s13 + $0xb8] sm:$0xff]
        %v2165 = vsel %vm593, %v2137, 0
        %2167 = vmatprep.subr.mxu0 %v2141
        %2168 = vmatpush1.msra.mxu0 %v2140
        %2169 = vmatprep.subr.mxu0 %v2147
        %2170 = vmatpush1.msra.mxu0 %v2146
        %2171 = vmatprep.subr.mxu0 %v2153
        %2172 = vmatpush1.msra.mxu0 %v2152
        %2173 = vmatprep.subr.mxu0 %v2159
        %2174 = vmatpush1.msra.mxu0 %v2158
        %2175 = vmatprep.subr.mxu0 0.0
        %2176 = vmatpush1.msra.mxu0 0.0
        %2177 = vmatprep.subr.mxu0 0.0
        %2178 = vmatpush1.msra.mxu0 0.0
        %2179 = vmatprep.subr.mxu0 0.0
        %2180 = vmatpush1.msra.mxu0 0.0
        %2181 = vmatprep.subr.mxu0 0.0
        %2182 = vmatpush1.msra.mxu0 0.0
        %2183 = vmatprep.subr.mxu0 0.0
        %2184 = vmatpush1.msra.mxu0 0.0
        %2185 = vmatprep.subr.mxu0 0.0
        %2186 = vmatpush1.msra.mxu0 0.0
        %2187 = vmatprep.subr.mxu0 0.0
        %2188 = vmatpush1.msra.mxu0 0.0
        %2189 = vmatprep.subr.mxu0 0.0
        %2190 = vmatpush1.msra.mxu0 0.0
        %2191 = vmatprep.subr.mxu0 0.0
        %2192 = vmatpush1.msra.mxu0 0.0
        %2193 = vmatprep.subr.mxu0 0.0
        %2194 = vmatpush1.msra.mxu0 0.0
        %2195 = vmatprep.subr.mxu0 0.0
        %2196 = vmatpush1.msra.mxu0 0.0
        %2197 = vmatprep.subr.mxu0 0.0
        %2198 = vmatpush1.msra.mxu0 0.0
        %2199 = vmatprep.subr.mxu0 0.0
        %2200 = vmatpush1.msra.mxu0 0.0
        %2201 = vmatprep.subr.mxu0 0.0
        %2202 = vmatpush1.msra.mxu0 0.0
        %2203 = vmatprep.subr.mxu0 0.0
        %2204 = vmatpush1.msra.mxu0 0.0
        %2205 = vmatprep.subr.mxu0 0.0
        %2206 = vmatpush1.msra.mxu0 0.0
        %2207 = vmatprep.subr.mxu0 0.0
        %2208 = vmatpush1.msra.mxu0 0.0
        %2209 = vmatprep.subr.mxu0 0.0
        %2210 = vmatpush1.msra.mxu0 0.0
        %2211 = vmatprep.subr.mxu0 0.0
        %2212 = vmatpush1.msra.mxu0 0.0
        %2213 = vmatprep.subr.mxu0 0.0
        %2214 = vmatpush1.msra.mxu0 0.0
        %2215 = vmatprep.subr.mxu0 0.0
        %2216 = vmatpush1.msra.mxu0 0.0
        %2217 = vmatprep.subr.mxu0 0.0
        %2218 = vmatpush1.msra.mxu0 0.0
        %2219 = vmatprep.subr.mxu0 0.0
        %2220 = vmatpush1.msra.mxu0 0.0
        %2221 = vmatprep.subr.mxu0 0.0
        %2222 = vmatpush1.msra.mxu0 0.0
        %2223 = vmatprep.subr.mxu0 0.0
        %2224 = vmatpush1.msra.mxu0 0.0
        %2225 = vmatprep.subr.mxu0 0.0
        %2226 = vmatpush1.msra.mxu0 0.0
        %2227 = vmatprep.subr.mxu0 0.0
        %2228 = vmatpush1.msra.mxu0 0.0
        %2229 = vmatprep.subr.mxu0 0.0
        %2230 = vmatpush1.msra.mxu0 0.0
        %2231 = vmatprep.mubr.f32.mxu0 0.0
        %2232 = vmatmul.mubr.f32.gmra.mrb[0].mxu0 %v2165
        %v2233 = vpop.f32.mrb[0].mxu0
        %v2234 = vadd.f32 0.0, %v2233
        %v2235 = vpop.f32.mrb[0].mxu0
        %v2236 = vadd.f32 0.0, %v2235
        %2237 = vdwg.mxu0
        %2238 = vmatprep.subr.mxu0 %v2143
        %2239 = vmatpush1.msra.mxu0 %v2142
        %2240 = vmatprep.subr.mxu0 %v2149
        %2241 = vmatpush1.msra.mxu0 %v2148
        %2242 = vmatprep.subr.mxu0 %v2155
        %2243 = vmatpush1.msra.mxu0 %v2154
        %2244 = vmatprep.subr.mxu0 %v2161
        %2245 = vmatpush1.msra.mxu0 %v2160
        %2246 = vmatprep.subr.mxu0 0.0
        %2247 = vmatpush1.msra.mxu0 0.0
        %2248 = vmatprep.subr.mxu0 0.0
        %2249 = vmatpush1.msra.mxu0 0.0
        %2250 = vmatprep.subr.mxu0 0.0
        %2251 = vmatpush1.msra.mxu0 0.0
        %2252 = vmatprep.subr.mxu0 0.0
        %2253 = vmatpush1.msra.mxu0 0.0
        %2254 = vmatprep.subr.mxu0 0.0
        %2255 = vmatpush1.msra.mxu0 0.0
        %2256 = vmatprep.subr.mxu0 0.0
        %2257 = vmatpush1.msra.mxu0 0.0
        %2258 = vmatprep.subr.mxu0 0.0
        %2259 = vmatpush1.msra.mxu0 0.0
        %2260 = vmatprep.subr.mxu0 0.0
        %2261 = vmatpush1.msra.mxu0 0.0
        %2262 = vmatprep.subr.mxu0 0.0
        %2263 = vmatpush1.msra.mxu0 0.0
        %2264 = vmatprep.subr.mxu0 0.0
        %2265 = vmatpush1.msra.mxu0 0.0
        %2266 = vmatprep.subr.mxu0 0.0
        %2267 = vmatpush1.msra.mxu0 0.0
        %2268 = vmatprep.subr.mxu0 0.0
        %2269 = vmatpush1.msra.mxu0 0.0
        %2270 = vmatprep.subr.mxu0 0.0
        %2271 = vmatpush1.msra.mxu0 0.0
        %2272 = vmatprep.subr.mxu0 0.0
        %2273 = vmatpush1.msra.mxu0 0.0
        %2274 = vmatprep.subr.mxu0 0.0
        %2275 = vmatpush1.msra.mxu0 0.0
        %2276 = vmatprep.subr.mxu0 0.0
        %2277 = vmatpush1.msra.mxu0 0.0
        %2278 = vmatprep.subr.mxu0 0.0
        %2279 = vmatpush1.msra.mxu0 0.0
        %2280 = vmatprep.subr.mxu0 0.0
        %2281 = vmatpush1.msra.mxu0 0.0
        %2282 = vmatprep.subr.mxu0 0.0
        %2283 = vmatpush1.msra.mxu0 0.0
        %2284 = vmatprep.subr.mxu0 0.0
        %2285 = vmatpush1.msra.mxu0 0.0
        %2286 = vmatprep.subr.mxu0 0.0
        %2287 = vmatpush1.msra.mxu0 0.0
        %2288 = vmatprep.subr.mxu0 0.0
        %2289 = vmatpush1.msra.mxu0 0.0
        %2290 = vmatprep.subr.mxu0 0.0
        %2291 = vmatpush1.msra.mxu0 0.0
        %2292 = vmatprep.subr.mxu0 0.0
        %2293 = vmatpush1.msra.mxu0 0.0
        %2294 = vmatprep.subr.mxu0 0.0
        %2295 = vmatpush1.msra.mxu0 0.0
        %2296 = vmatprep.subr.mxu0 0.0
        %2297 = vmatpush1.msra.mxu0 0.0
        %2298 = vmatprep.subr.mxu0 0.0
        %2299 = vmatpush1.msra.mxu0 0.0
        %2300 = vmatprep.subr.mxu0 0.0
        %2301 = vmatpush1.msra.mxu0 0.0
        %2302 = vmatprep.mubr.f32.mxu0 0.0
        %2303 = vmatmul.mubr.f32.gmra.mrb[0].mxu0 %v2165
        %v2304 = vpop.f32.mrb[0].mxu0
        %v2305 = vadd.f32 0.0, %v2304
        %v2306 = vpop.f32.mrb[0].mxu0
        %v2307 = vadd.f32 0.0, %v2306
        %2308 = vdwg.mxu0
        %2309 = vmatprep.subr.mxu0 %v2145
        %2310 = vmatpush1.msra.mxu0 %v2144
        %2311 = vmatprep.subr.mxu0 %v2151
        %2312 = vmatpush1.msra.mxu0 %v2150
        %2313 = vmatprep.subr.mxu0 %v2157
        %2314 = vmatpush1.msra.mxu0 %v2156
        %2315 = vmatprep.subr.mxu0 %v2163
        %2316 = vmatpush1.msra.mxu0 %v2162
        %2317 = vmatprep.subr.mxu0 0.0
        %2318 = vmatpush1.msra.mxu0 0.0
        %2319 = vmatprep.subr.mxu0 0.0
        %2320 = vmatpush1.msra.mxu0 0.0
        %2321 = vmatprep.subr.mxu0 0.0
        %2322 = vmatpush1.msra.mxu0 0.0
        %2323 = vmatprep.subr.mxu0 0.0
        %2324 = vmatpush1.msra.mxu0 0.0
        %2325 = vmatprep.subr.mxu0 0.0
        %2326 = vmatpush1.msra.mxu0 0.0
        %2327 = vmatprep.subr.mxu0 0.0
        %2328 = vmatpush1.msra.mxu0 0.0
        %2329 = vmatprep.subr.mxu0 0.0
        %2330 = vmatpush1.msra.mxu0 0.0
        %2331 = vmatprep.subr.mxu0 0.0
        %2332 = vmatpush1.msra.mxu0 0.0
        %2333 = vmatprep.subr.mxu0 0.0
        %2334 = vmatpush1.msra.mxu0 0.0
        %2335 = vmatprep.subr.mxu0 0.0
        %2336 = vmatpush1.msra.mxu0 0.0
        %2337 = vmatprep.subr.mxu0 0.0
        %2338 = vmatpush1.msra.mxu0 0.0
        %2339 = vmatprep.subr.mxu0 0.0
        %2340 = vmatpush1.msra.mxu0 0.0
        %2341 = vmatprep.subr.mxu0 0.0
        %2342 = vmatpush1.msra.mxu0 0.0
        %2343 = vmatprep.subr.mxu0 0.0
        %2344 = vmatpush1.msra.mxu0 0.0
        %2345 = vmatprep.subr.mxu0 0.0
        %2346 = vmatpush1.msra.mxu0 0.0
        %2347 = vmatprep.subr.mxu0 0.0
        %2348 = vmatpush1.msra.mxu0 0.0
        %2349 = vmatprep.subr.mxu0 0.0
        %2350 = vmatpush1.msra.mxu0 0.0
        %2351 = vmatprep.subr.mxu0 0.0
        %2352 = vmatpush1.msra.mxu0 0.0
        %2353 = vmatprep.subr.mxu0 0.0
        %2354 = vmatpush1.msra.mxu0 0.0
        %2355 = vmatprep.subr.mxu0 0.0
        %2356 = vmatpush1.msra.mxu0 0.0
        %2357 = vmatprep.subr.mxu0 0.0
        %2358 = vmatpush1.msra.mxu0 0.0
        %2359 = vmatprep.subr.mxu0 0.0
        %2360 = vmatpush1.msra.mxu0 0.0
        %2361 = vmatprep.subr.mxu0 0.0
        %2362 = vmatpush1.msra.mxu0 0.0
        %2363 = vmatprep.subr.mxu0 0.0
        %2364 = vmatpush1.msra.mxu0 0.0
        %2365 = vmatprep.subr.mxu0 0.0
        %2366 = vmatpush1.msra.mxu0 0.0
        %2367 = vmatprep.subr.mxu0 0.0
        %2368 = vmatpush1.msra.mxu0 0.0
        %2369 = vmatprep.subr.mxu0 0.0
        %2370 = vmatpush1.msra.mxu0 0.0
        %2371 = vmatprep.subr.mxu0 0.0
        %2372 = vmatpush1.msra.mxu0 0.0
        %2373 = vmatprep.mubr.f32.mxu0 0.0
        %2374 = vmatmul.mubr.f32.gmra.mrb[0].mxu0 %v2165
        %v2375 = vpop.f32.mrb[0].mxu0
        %v2376 = vadd.f32 0.0, %v2375
        %v2377 = vpop.f32.mrb[0].mxu0
        %v2378 = vadd.f32 0.0, %v2377
        %2379 = vdwg.mxu0
        %v2380 = vxor.u32 %v2234, 2147483648
        %v2381 = vxor.u32 %v2236, 2147483648
        %v2382 = vxor.u32 %v2305, 2147483648
        %v2383 = vmul.f32 %v2380, 1.442695
        %v2384 = vpow.pop %v2383
        %v2385 = vmul.f32 %v2381, 1.442695
        %v2386 = vpow.pop %v2385
        %v2387 = vmul.f32 %v2382, 1.442695
        %v2388 = vpow.pop %v2387
        %v2389 = vadd.f32 %v2384, 1.0
        %v2390 = vadd.f32 %v2386, 1.0
        %v2391 = vadd.f32 %v2388, 1.0
        %v2392 = vrcp.pop %v2389
        %v2393 = vmul.f32 1.0, %v2392
        %v2394 = vrcp.pop %v2390
        %v2395 = vmul.f32 1.0, %v2394
        %v2396 = vrcp.pop %v2391
        %v2397 = vmul.f32 1.0, %v2396
        %v2398 = vmul.f32 %v2234, %v2393
        %v2399 = vmul.f32 %v2236, %v2395
        %v2400 = vmul.f32 %v2305, %v2397
        %v2401 = vmul.f32 %v2398, %v2307
        %v2402 = vmul.f32 %v2399, %v2376
        %v2403 = vmul.f32 %v2400, %v2378
        %v2404 = vld [vmem:[%s14] sm:$0xff]
        %v2405 = vld [vmem:[%s14 + $0x8] sm:$0xff]
        %v2406 = vld [vmem:[%s14 + $0x10] sm:$0xff]
        %v2407 = vld [vmem:[%s14 + $0x18] sm:$0xff]
        %v2408 = vld [vmem:[%s14 + $0x20] sm:$0xff]
        %v2409 = vld [vmem:[%s14 + $0x28] sm:$0xff]
        %v2410 = vld [vmem:[%s14 + $0x30] sm:$0xff]
        %v2411 = vld [vmem:[%s14 + $0x38] sm:$0xff]
        %v2412 = vld [vmem:[%s14 + $0x40] sm:$0xff]
        %v2413 = vld [vmem:[%s14 + $0x48] sm:$0xff]
        %v2414 = vld [vmem:[%s14 + $0x50] sm:$0xff]
        %v2415 = vld [vmem:[%s14 + $0x58] sm:$0xff]
        %v2416 = vld [vmem:[%s14 + $0x60] sm:$0xff]
        %v2417 = vld [vmem:[%s14 + $0x68] sm:$0xff]
        %v2418 = vld [vmem:[%s14 + $0x70] sm:$0xff]
        %v2419 = vld [vmem:[%s14 + $0x78] sm:$0xff]
        %v2420 = vld [vmem:[%s14 + $0x80] sm:$0xff]
        %v2421 = vld [vmem:[%s14 + $0x88] sm:$0xff]
        %v2422 = vld [vmem:[%s14 + $0x90] sm:$0xff]
        %v2423 = vld [vmem:[%s14 + $0x98] sm:$0xff]
        %v2424 = vld [vmem:[%s14 + $0xa0] sm:$0xff]
        %v2425 = vld [vmem:[%s14 + $0xa8] sm:$0xff]
        %v2426 = vld [vmem:[%s14 + $0xb0] sm:$0xff]
        %v2427 = vld [vmem:[%s14 + $0xb8] sm:$0xff]
        %v2428 = vld [vmem:[%s14 + $0xc0] sm:$0xff]
        %v2429 = vld [vmem:[%s14 + $0xc8] sm:$0xff]
        %v2430 = vld [vmem:[%s14 + $0xd0] sm:$0xff]
        %v2431 = vld [vmem:[%s14 + $0xd8] sm:$0xff]
        %v2432 = vld [vmem:[%s14 + $0xe0] sm:$0xff]
        %v2433 = vld [vmem:[%s14 + $0xe8] sm:$0xff]
        %v2434 = vld [vmem:[%s14 + $0xf0] sm:$0xff]
        %v2435 = vld [vmem:[%s14 + $0xf8] sm:$0xff]
        %v2436 = vld [vmem:[%s14 + $0x100] sm:$0xff]
        %v2437 = vld [vmem:[%s14 + $0x108] sm:$0xff]
        %v2438 = vld [vmem:[%s14 + $0x110] sm:$0xff]
        %v2439 = vld [vmem:[%s14 + $0x118] sm:$0xff]
        %v2440 = vld [vmem:[%s14 + $0x120] sm:$0xff]
        %v2441 = vld [vmem:[%s14 + $0x128] sm:$0xff]
        %v2442 = vld [vmem:[%s14 + $0x130] sm:$0xff]
        %v2443 = vld [vmem:[%s14 + $0x138] sm:$0xff]
        %v2444 = vld [vmem:[%s14 + $0x140] sm:$0xff]
        %v2445 = vld [vmem:[%s14 + $0x148] sm:$0xff]
        %v2446 = vld [vmem:[%s14 + $0x150] sm:$0xff]
        %v2447 = vld [vmem:[%s14 + $0x158] sm:$0xff]
        %v2448 = vld [vmem:[%s14 + $0x160] sm:$0xff]
        %v2449 = vld [vmem:[%s14 + $0x168] sm:$0xff]
        %v2450 = vld [vmem:[%s14 + $0x170] sm:$0xff]
        %v2451 = vld [vmem:[%s14 + $0x178] sm:$0xff]
        %2452 = vmatprep.subr.mxu0 0.0
        %2453 = vmatpush1.msra.mxu0 %v2404
        %2454 = vmatprep.subr.mxu0 0.0
        %2455 = vmatpush1.msra.mxu0 %v2405
        %2456 = vmatprep.subr.mxu0 0.0
        %2457 = vmatpush1.msra.mxu0 %v2406
        %2458 = vmatprep.subr.mxu0 0.0
        %2459 = vmatpush1.msra.mxu0 %v2407
        %2460 = vmatprep.subr.mxu0 0.0
        %2461 = vmatpush1.msra.mxu0 %v2408
        %2462 = vmatprep.subr.mxu0 0.0
        %2463 = vmatpush1.msra.mxu0 %v2409
        %2464 = vmatprep.subr.mxu0 0.0
        %2465 = vmatpush1.msra.mxu0 %v2410
        %2466 = vmatprep.subr.mxu0 0.0
        %2467 = vmatpush1.msra.mxu0 %v2411
        %2468 = vmatprep.subr.mxu0 0.0
        %2469 = vmatpush1.msra.mxu0 %v2412
        %2470 = vmatprep.subr.mxu0 0.0
        %2471 = vmatpush1.msra.mxu0 %v2413
        %2472 = vmatprep.subr.mxu0 0.0
        %2473 = vmatpush1.msra.mxu0 %v2414
        %2474 = vmatprep.subr.mxu0 0.0
        %2475 = vmatpush1.msra.mxu0 %v2415
        %2476 = vmatprep.subr.mxu0 0.0
        %2477 = vmatpush1.msra.mxu0 %v2416
        %2478 = vmatprep.subr.mxu0 0.0
        %2479 = vmatpush1.msra.mxu0 %v2417
        %2480 = vmatprep.subr.mxu0 0.0
        %2481 = vmatpush1.msra.mxu0 %v2418
        %2482 = vmatprep.subr.mxu0 0.0
        %2483 = vmatpush1.msra.mxu0 %v2419
        %2484 = vmatprep.subr.mxu0 0.0
        %2485 = vmatpush1.msra.mxu0 %v2420
        %2486 = vmatprep.subr.mxu0 0.0
        %2487 = vmatpush1.msra.mxu0 %v2421
        %2488 = vmatprep.subr.mxu0 0.0
        %2489 = vmatpush1.msra.mxu0 %v2422
        %2490 = vmatprep.subr.mxu0 0.0
        %2491 = vmatpush1.msra.mxu0 %v2423
        %2492 = vmatprep.subr.mxu0 0.0
        %2493 = vmatpush1.msra.mxu0 %v2424
        %2494 = vmatprep.subr.mxu0 0.0
        %2495 = vmatpush1.msra.mxu0 %v2425
        %2496 = vmatprep.subr.mxu0 0.0
        %2497 = vmatpush1.msra.mxu0 %v2426
        %2498 = vmatprep.subr.mxu0 0.0
        %2499 = vmatpush1.msra.mxu0 %v2427
        %2500 = vmatprep.subr.mxu0 0.0
        %2501 = vmatpush1.msra.mxu0 %v2428
        %2502 = vmatprep.subr.mxu0 0.0
        %2503 = vmatpush1.msra.mxu0 %v2429
        %2504 = vmatprep.subr.mxu0 0.0
        %2505 = vmatpush1.msra.mxu0 %v2430
        %2506 = vmatprep.subr.mxu0 0.0
        %2507 = vmatpush1.msra.mxu0 %v2431
        %2508 = vmatprep.subr.mxu0 0.0
        %2509 = vmatpush1.msra.mxu0 %v2432
        %2510 = vmatprep.subr.mxu0 0.0
        %2511 = vmatpush1.msra.mxu0 %v2433
        %2512 = vmatprep.subr.mxu0 0.0
        %2513 = vmatpush1.msra.mxu0 %v2434
        %2514 = vmatprep.subr.mxu0 0.0
        %2515 = vmatpush1.msra.mxu0 %v2435
        %2516 = vmatprep.mubr.f32.mxu0 %v2402
        %2517 = vmatmul.mubr.f32.gmra.mrb[0].mxu0 %v2401
        %v2518 = vpop.f32.mrb[0].mxu0
        %v2519 = vadd.f32 0.0, %v2518
        %v2520 = vpop.f32.mrb[0].mxu0
        %2521 = vdwg.mxu0
        %2522 = vmatprep.subr.mxu0 0.0
        %2523 = vmatpush1.msra.mxu0 %v2436
        %2524 = vmatprep.subr.mxu0 0.0
        %2525 = vmatpush1.msra.mxu0 %v2437
        %2526 = vmatprep.subr.mxu0 0.0
        %2527 = vmatpush1.msra.mxu0 %v2438
        %2528 = vmatprep.subr.mxu0 0.0
        %2529 = vmatpush1.msra.mxu0 %v2439
        %2530 = vmatprep.subr.mxu0 0.0
        %2531 = vmatpush1.msra.mxu0 %v2440
        %2532 = vmatprep.subr.mxu0 0.0
        %2533 = vmatpush1.msra.mxu0 %v2441
        %2534 = vmatprep.subr.mxu0 0.0
        %2535 = vmatpush1.msra.mxu0 %v2442
        %2536 = vmatprep.subr.mxu0 0.0
        %2537 = vmatpush1.msra.mxu0 %v2443
        %2538 = vmatprep.subr.mxu0 0.0
        %2539 = vmatpush1.msra.mxu0 %v2444
        %2540 = vmatprep.subr.mxu0 0.0
        %2541 = vmatpush1.msra.mxu0 %v2445
        %2542 = vmatprep.subr.mxu0 0.0
        %2543 = vmatpush1.msra.mxu0 %v2446
        %2544 = vmatprep.subr.mxu0 0.0
        %2545 = vmatpush1.msra.mxu0 %v2447
        %2546 = vmatprep.subr.mxu0 0.0
        %2547 = vmatpush1.msra.mxu0 %v2448
        %2548 = vmatprep.subr.mxu0 0.0
        %2549 = vmatpush1.msra.mxu0 %v2449
        %2550 = vmatprep.subr.mxu0 0.0
        %2551 = vmatpush1.msra.mxu0 %v2450
        %2552 = vmatprep.subr.mxu0 0.0
        %2553 = vmatpush1.msra.mxu0 %v2451
        %2554 = vmatprep.subr.mxu0 0.0
        %2555 = vmatpush1.msra.mxu0 0.0
        %2556 = vmatprep.subr.mxu0 0.0
        %2557 = vmatpush1.msra.mxu0 0.0
        %2558 = vmatprep.subr.mxu0 0.0
        %2559 = vmatpush1.msra.mxu0 0.0
        %2560 = vmatprep.subr.mxu0 0.0
        %2561 = vmatpush1.msra.mxu0 0.0
        %2562 = vmatprep.subr.mxu0 0.0
        %2563 = vmatpush1.msra.mxu0 0.0
        %2564 = vmatprep.subr.mxu0 0.0
        %2565 = vmatpush1.msra.mxu0 0.0
        %2566 = vmatprep.subr.mxu0 0.0
        %2567 = vmatpush1.msra.mxu0 0.0
        %2568 = vmatprep.subr.mxu0 0.0
        %2569 = vmatpush1.msra.mxu0 0.0
        %2570 = vmatprep.subr.mxu0 0.0
        %2571 = vmatpush1.msra.mxu0 0.0
        %2572 = vmatprep.subr.mxu0 0.0
        %2573 = vmatpush1.msra.mxu0 0.0
        %2574 = vmatprep.subr.mxu0 0.0
        %2575 = vmatpush1.msra.mxu0 0.0
        %2576 = vmatprep.subr.mxu0 0.0
        %2577 = vmatpush1.msra.mxu0 0.0
        %2578 = vmatprep.subr.mxu0 0.0
        %2579 = vmatpush1.msra.mxu0 0.0
        %2580 = vmatprep.subr.mxu0 0.0
        %2581 = vmatpush1.msra.mxu0 0.0
        %2582 = vmatprep.subr.mxu0 0.0
        %2583 = vmatpush1.msra.mxu0 0.0
        %2584 = vmatprep.subr.mxu0 0.0
        %2585 = vmatpush1.msra.mxu0 0.0
        %2586 = vmatprep.mubr.f32.mxu0 0.0
        %2587 = vmatmul.mubr.f32.gmra.mrb[0].mxu0 %v2403
        %v2588 = vpop.f32.mrb[0].mxu0
        %v2589 = vadd.f32 %v2519, %v2588
        %v2590 = vpop.f32.mrb[0].mxu0
        %2591 = vdwg.mxu0
        %v2592 = vlaneseq
        %v2593 = vshrl.u32 %v2592, 7
        %v2594 = vsub.s32 0, %v2593
        %v2595 = vrot.slane %v666, %v2594
        %2597 = vrot.lane.b32.xlu0 %v2589, 32
        %v2598 = vpop.permute.xlu0 %2597
        %v2600 = vmul.f32 %v2595, %v2598
        %2602 = vrot.lane.b32.xlu0 %v2600, 96
        %v2603 = vpop.permute.xlu0 %2602
        %v2605 = vadd.f32 %v1939, %v2603
        %2606 = vst.msk [vmem:[%s540] sm:$0xff] %vm593, %v2605
        %s2607 = sand.u32 %s371, 1
        %s2608 = scalar_lea.sflag [#allocation5], %s2607
        %s2609 = sand.u32 %s371, 1
        %s2610 = smul.addr %s2609, 8
        %s2611 = scalar_lea.vmem [#allocation4], %s2610
        // Predicated region
        $region77: #{transformer_block.1} parent=75 // pred_check
          %p2612 = pneg %p381
        $region78: #{transformer_block.1} parent=75 // pred_check_branch
          %2614 = sbr.rel (%p2612) target = $region80
        $region79: #{transformer_block.1} parent=75 // pred_region
          %s2616 = ssub.s32 128, 128
          %2617 = vsyncadd %s2608, %s2616
          %s2618 = smul.addr %s35, 128
          %s2619 = scalar_lea.hbm %s15, %s2618
          %s2621 = sshll.u32 %s2611, 4
          %s2622 = int_to_ptr.vmem [resolvable:$true] %s2621
          %2624 = dma.vmem_to_hbm [thread:$0]  %s2622, 128, %s2619, %s2608
        $region80: #{transformer_block.1} parent=75 // pred_fallthru
          _
      $region76: #{transformer_block.1} parent=5 // pred_fallthru
        _
      %p2625 = scmp.le.s32.totalorder 2, %s30
      // Predicated region
      $region81: #{transformer_block.1} parent=5 // pred_check
        %p2626 = pneg %p2625
      $region82: #{transformer_block.1} parent=5 // pred_check_branch
        %2628 = sbr.rel (%p2626) target = $region84
      $region83: #{transformer_block.1} parent=5 // pred_region
        %s2629 = ssub.s32 %s30, 2
        // Predicated region
        $region85: #{transformer_block.1} parent=83 // pred_check
          %p2630 = pneg %p387
        $region86: #{transformer_block.1} parent=83 // pred_check_branch
          %2632 = sbr.rel (%p2630) target = $region88
        $region87: #{transformer_block.1} parent=83 // pred_region
          %s2633 = sand.u32 %s372, 1
          %s2634 = scalar_lea.sflag [#allocation5], %s2633
          %s2635 = sand.u32 %s372, 1
          %s2636 = smul.addr %s2635, 8
          %s2637 = scalar_lea.vmem [#allocation4], %s2636
          %2638 = dma.done %s2634, 128
        $region88: #{transformer_block.1} parent=83 // pred_fallthru
          _
      $region84: #{transformer_block.1} parent=5 // pred_fallthru
        _
    $region6: #{transformer_block.1} parent=1 // loop_footer
      %s34 = sadd.s32 1, %s30
    $region7: #{transformer_block.1} parent=1 // loop_footer_branch
      %29 = sbr.rel target = $region3
    $region8: #{transformer_block.1} parent=1 // loop_exit
      _
    %2639 = vsyncpa [#allocation5], 1
    %s2640 = scalar_lea.sflag [#allocation5], 1
    %2641 = vsyncpa %s2640, 1

</llo_original>
